<compile_context>
chip_gen: v7x
topology: tpu7x:2x2x1
jax: 0.10.0
libtpu: 0.0.40
codegen_flags: <defaults>
</compile_context>

<pallas_src>
import functools

import jax
import jax.numpy as jnp
from jax.experimental import pallas as pl
from jax.experimental.pallas import tpu as pltpu


# ----------------------------------------------------------------------------
# In-kernel helpers
# ----------------------------------------------------------------------------
def _apply_activation(v, activation):
    if activation == 'relu':
        return jnp.maximum(v, 0.0)
    if activation == 'leaky_relu':
        return jnp.where(v >= 0, v, 0.2 * v)   # ConvBlock._LEAKY_RELU_ALPHA = 0.2
    if activation == 'softplus':
        return jax.nn.softplus(v)
    return v                                   # activation=None


def _write_reflect_pad1(pad_ref, a):
    """Write value a (H, W, C) into pad_ref (H+2, W+2, C) with 1-px reflect padding.

    Matches nn.Conv2d(padding=1, padding_mode='reflect') / jnp.pad(mode='reflect'):
    index -1 -> 1 and index H -> H-2 (edge excluded).
    """
    H, W, _ = a.shape
    a = a.astype(pad_ref.dtype)
    pad_ref[1:H + 1, 1:W + 1, :] = a
    pad_ref[0:1, 1:W + 1, :] = a[1:2, :, :]                   # top pad row    <- row 1
    pad_ref[H + 1:H + 2, 1:W + 1, :] = a[H - 2:H - 1, :, :]   # bottom pad row <- row H-2
    # Columns last so the four corners pick up the already-reflected rows.
    pad_ref[:, 0:1, :] = pad_ref[:, 2:3, :]                   # left  pad col <- orig col 1
    pad_ref[:, W + 1:W + 2, :] = pad_ref[:, W - 1:W, :]       # right pad col <- orig col W-2


def _conv3x3_from_pad(pad_ref, patch_ref, w_flat, bias):
    """3x3 / stride-1 / VALID conv over the padded scratch as ONE im2col matmul.

    pad_ref:   (H+2, W+2, Cin) VMEM scratch, already holds the reflect-padded input
    patch_ref: (H, W, 9*Cin)   VMEM scratch receiving the im2col patches
    w_flat:    (9*Cin, Cout)   HWIO weights flattened over (kh, kw, ci)
    bias:      (Cout,)         float32
    returns    (H, W, Cout)    float32 (MXU accumulation in f32)
    """
    Hp, Wp, C = pad_ref.shape
    H, W = Hp - 2, Wp - 2
    xp = pad_ref[...]
    for kh in range(3):
        for kw in range(3):
            t = kh * 3 + kw
            patch_ref[:, :, t * C:(t + 1) * C] = xp[kh:kh + H, kw:kw + W, :]
    acc = jax.lax.dot_general(
        patch_ref[...], w_flat,
        dimension_numbers=(((2,), (0,)), ((), ())),
        preferred_element_type=jnp.float32)          # single K = 9*Cin contraction
    return acc + bias.astype(jnp.float32)


# ----------------------------------------------------------------------------
# Fused ResidualBlockV2 kernel (one grid step = one image)
# ----------------------------------------------------------------------------
def _residual_block_kernel(x_ref, w1_ref, b1_ref, w2_ref, b2_ref, out_ref,
                           pad_ref, patch_ref, *, activation):
    x = x_ref[0]                                     # (H, W, C); also the shortcut

    # convblock1 (stays entirely in VMEM)
    _write_reflect_pad1(pad_ref, x)
    h = _apply_activation(
        _conv3x3_from_pad(pad_ref, patch_ref, w1_ref[...], b1_ref[0]), activation)

    # convblock2 + identity shortcut; single HBM store
    _write_reflect_pad1(pad_ref, h)
    y = _apply_activation(
        _conv3x3_from_pad(pad_ref, patch_ref, w2_ref[...], b2_ref[0]), activation)
    y = y + x.astype(jnp.float32)
    out_ref[0] = y.astype(out_ref.dtype)


def _fused_residual_block_nhwc(x_nhwc, w1f, b1, w2f, b2, *, activation):
    N, H, W, C = x_nhwc.shape
    kernel = functools.partial(_residual_block_kernel, activation=activation)
    img_spec = pl.BlockSpec((1, H, W, C), lambda n: (n, 0, 0, 0))
    return pl.pallas_call(
        kernel,
        out_shape=jax.ShapeDtypeStruct((N, H, W, C), x_nhwc.dtype),
        grid=(N,),
        in_specs=[
            img_spec,                                        # x (input + residual)
            pl.BlockSpec((9 * C, C), lambda n: (0, 0)),      # W1 flattened (9*Cin, Cout)
            pl.BlockSpec((1, C), lambda n: (0, 0)),          # b1
            pl.BlockSpec((9 * C, C), lambda n: (0, 0)),      # W2 flattened
            pl.BlockSpec((1, C), lambda n: (0, 0)),          # b2
        ],
        out_specs=img_spec,
        scratch_shapes=[
            pltpu.VMEM((H + 2, W + 2, C), x_nhwc.dtype),     # reflect-padded image
            pltpu.VMEM((H, W, 9 * C), x_nhwc.dtype),         # im2col patches
        ],
        compiler_params=pltpu.CompilerParams(
            dimension_semantics=("parallel",),               # >=2 work units for v7x
            vmem_limit_bytes=32 * 1024 * 1024),
    )(x_nhwc, w1f, b1, w2f, b2)


# ----------------------------------------------------------------------------
# Public entry: ResidualBlockV2 forward (PyTorch NCHW in/out)
# ----------------------------------------------------------------------------
def residual_block_v2(x_nchw, params, *, activation='relu'):
    """x_nchw: (N, C, H, W); params['w1'|'w2']: (3,3,C,C) HWIO
    (PyTorch OIHW -> jnp.transpose(w, (2, 3, 1, 0))); params['b1'|'b2']: (C,)."""
    N, C, H, W = x_nchw.shape
    dtype = x_nchw.dtype
    # One transpose at the PyTorch-layout boundary; channel-minor NHWC is lane-dense
    # at the module's default width (C=256).
    x = jnp.transpose(x_nchw, (0, 2, 3, 1))
    w1f = params['w1'].reshape(9 * C, C).astype(dtype)   # (kh, kw, ci) -> rows
    w2f = params['w2'].reshape(9 * C, C).astype(dtype)
    b1 = params['b1'].reshape(1, C).astype(jnp.float32)
    b2 = params['b2'].reshape(1, C).astype(jnp.float32)
    y = _fused_residual_block_nhwc(x, w1f, b1, w2f, b2, activation=activation)
    return jnp.transpose(y, (0, 3, 1, 2))


# ----------------------------------------------------------------------------
# Pure-JAX reference for sanity checking
# ----------------------------------------------------------------------------
def _ref_conv_block(x_nhwc, w, b, activation):
    xp = jnp.pad(x_nhwc, ((0, 0), (1, 1), (1, 1), (0, 0)), mode='reflect')
    y = jax.lax.conv_general_dilated(
        xp, w, window_strides=(1, 1), padding='VALID',
        dimension_numbers=('NHWC', 'HWIO', 'NHWC'))
    y = y + b.reshape(1, 1, 1, -1)
    if activation == 'relu':
        y = jnp.maximum(y, 0.0)
    elif activation == 'leaky_relu':
        y = jnp.where(y >= 0, y, 0.2 * y)
    elif activation == 'softplus':
        y = jax.nn.softplus(y)
    return y


def _ref_residual_block(x_nchw, params, activation='relu'):
    x = jnp.transpose(x_nchw, (0, 2, 3, 1))
    h = _ref_conv_block(x, params['w1'], params['b1'], activation)
    y = _ref_conv_block(h, params['w2'], params['b2'], activation) + x
    return jnp.transpose(y, (0, 3, 1, 2))


if __name__ == "__main__":
    # small shapes consistent with the module: batch=2, channels=8, spatial=16
    N, C, H, W = 2, 8, 16, 16
    key = jax.random.PRNGKey(0)
    kx, kw1, kb1, kw2, kb2 = jax.random.split(key, 5)

    x = jax.random.normal(kx, (N, C, H, W), jnp.float32)

    # deterministic synthetic parameters (HWIO layout = PyTorch OIHW transposed)
    params = {
        'w1': 0.1 * jax.random.normal(kw1, (3, 3, C, C), jnp.float32),
        'b1': 0.1 * jax.random.normal(kb1, (C,), jnp.float32),
        'w2': 0.1 * jax.random.normal(kw2, (3, 3, C, C), jnp.float32),
        'b2': 0.1 * jax.random.normal(kb2, (C,), jnp.float32),
    }

    out = jax.block_until_ready(residual_block_v2(x, params, activation='relu'))
    ref = _ref_residual_block(x, params, activation='relu')

    assert out.shape == (N, C, H, W)
    assert jnp.allclose(out, ref, atol=1e-4, rtol=1e-4), "mismatch vs JAX reference"

    print("KERNEL_OK")
</pallas_src>

<mosaic_0001>
module attributes {stable_mosaic.version = 11 : i64} {
  func.func @_residual_block_kernel(%arg0: i32, %arg1: memref<1x16x16x8xf32, #tpu.memory_space<vmem>>, %arg2: memref<72x8xf32, #tpu.memory_space<vmem>>, %arg3: memref<1x8xf32, #tpu.memory_space<vmem>>, %arg4: memref<72x8xf32, #tpu.memory_space<vmem>>, %arg5: memref<1x8xf32, #tpu.memory_space<vmem>>, %arg6: memref<1x16x16x8xf32, #tpu.memory_space<vmem>>, %arg7: memref<18x18x8xf32, #tpu.memory_space<vmem>>, %arg8: memref<16x16x72xf32, #tpu.memory_space<vmem>>) attributes {dimension_semantics = [#tpu.dimension_semantics<parallel>], iteration_bounds = array<i64: 2>, scalar_prefetch = 0 : i64, scratch_operands = 2 : i64, tpu.core_type = #tpu.core_type<tc>, window_params = [{transform_indices = @transform_0, window_bounds = array<i64: 1, 16, 16, 8>}, {pipeline_mode = #tpu.pipeline_mode<synchronous>, transform_indices = @transform_1, window_bounds = array<i64: 72, 8>}, {pipeline_mode = #tpu.pipeline_mode<synchronous>, transform_indices = @transform_2, window_bounds = array<i64: 1, 8>}, {pipeline_mode = #tpu.pipeline_mode<synchronous>, transform_indices = @transform_3, window_bounds = array<i64: 72, 8>}, {pipeline_mode = #tpu.pipeline_mode<synchronous>, transform_indices = @transform_4, window_bounds = array<i64: 1, 8>}, {transform_indices = @transform_5, window_bounds = array<i64: 1, 16, 16, 8>}]} {
    %c0 = arith.constant 0 : index
    %c0_0 = arith.constant 0 : index
    %c0_1 = arith.constant 0 : index
    %c0_2 = arith.constant 0 : index
    %0 = vector.load %arg1[%c0, %c0_0, %c0_1, %c0_2] : memref<1x16x16x8xf32, #tpu.memory_space<vmem>>, vector<1x16x16x8xf32>
    %1 = vector.shape_cast %0 : vector<1x16x16x8xf32> to vector<16x16x8xf32>
    %c1 = arith.constant 1 : index
    %c1_3 = arith.constant 1 : index
    %c0_4 = arith.constant 0 : index
    %2 = vector.load %arg7[%c1, %c1_3, %c0_4] : memref<18x18x8xf32, #tpu.memory_space<vmem>>, vector<16x16x8xf32>
    tpu.vector_store %arg7[%c1, %c1_3, %c0_4], %1 {strides = array<i32>} : memref<18x18x8xf32, #tpu.memory_space<vmem>>, vector<16x16x8xf32>,
    %3 = vector.extract_strided_slice %1 {offsets = [1, 0, 0], sizes = [1, 16, 8], strides = [1, 1, 1]} : vector<16x16x8xf32> to vector<1x16x8xf32>
    %c0_5 = arith.constant 0 : index
    %c1_6 = arith.constant 1 : index
    %c0_7 = arith.constant 0 : index
    %4 = vector.load %arg7[%c0_5, %c1_6, %c0_7] : memref<18x18x8xf32, #tpu.memory_space<vmem>>, vector<1x16x8xf32>
    tpu.vector_store %arg7[%c0_5, %c1_6, %c0_7], %3 {strides = array<i32>} : memref<18x18x8xf32, #tpu.memory_space<vmem>>, vector<1x16x8xf32>,
    %5 = vector.extract_strided_slice %1 {offsets = [14, 0, 0], sizes = [1, 16, 8], strides = [1, 1, 1]} : vector<16x16x8xf32> to vector<1x16x8xf32>
    %c17 = arith.constant 17 : index
    %c1_8 = arith.constant 1 : index
    %c0_9 = arith.constant 0 : index
    %6 = vector.load %arg7[%c17, %c1_8, %c0_9] : memref<18x18x8xf32, #tpu.memory_space<vmem>>, vector<1x16x8xf32>
    tpu.vector_store %arg7[%c17, %c1_8, %c0_9], %5 {strides = array<i32>} : memref<18x18x8xf32, #tpu.memory_space<vmem>>, vector<1x16x8xf32>,
    %c0_10 = arith.constant 0 : index
    %c2 = arith.constant 2 : index
    %c0_11 = arith.constant 0 : index
    %7 = vector.load %arg7[%c0_10, %c2, %c0_11] : memref<18x18x8xf32, #tpu.memory_space<vmem>>, vector<18x1x8xf32>
    %c0_12 = arith.constant 0 : index
    %c0_13 = arith.constant 0 : index
    %c0_14 = arith.constant 0 : index
    %8 = vector.load %arg7[%c0_12, %c0_13, %c0_14] : memref<18x18x8xf32, #tpu.memory_space<vmem>>, vector<18x1x8xf32>
    tpu.vector_store %arg7[%c0_12, %c0_13, %c0_14], %7 {strides = array<i32>} : memref<18x18x8xf32, #tpu.memory_space<vmem>>, vector<18x1x8xf32>,
    %c0_15 = arith.constant 0 : index
    %c15 = arith.constant 15 : index
    %c0_16 = arith.constant 0 : index
    %9 = vector.load %arg7[%c0_15, %c15, %c0_16] : memref<18x18x8xf32, #tpu.memory_space<vmem>>, vector<18x1x8xf32>
    %c0_17 = arith.constant 0 : index
    %c17_18 = arith.constant 17 : index
    %c0_19 = arith.constant 0 : index
    %10 = vector.load %arg7[%c0_17, %c17_18, %c0_19] : memref<18x18x8xf32, #tpu.memory_space<vmem>>, vector<18x1x8xf32>
    tpu.vector_store %arg7[%c0_17, %c17_18, %c0_19], %9 {strides = array<i32>} : memref<18x18x8xf32, #tpu.memory_space<vmem>>, vector<18x1x8xf32>,
    %c0_20 = arith.constant 0 : index
    %c0_21 = arith.constant 0 : index
    %11 = vector.load %arg2[%c0_20, %c0_21] : memref<72x8xf32, #tpu.memory_space<vmem>>, vector<72x8xf32>
    %c0_22 = arith.constant 0 : index
    %c0_23 = arith.constant 0 : index
    %12 = vector.load %arg3[%c0_22, %c0_23] : memref<1x8xf32, #tpu.memory_space<vmem>>, vector<1x8xf32>
    %13 = vector.shape_cast %12 : vector<1x8xf32> to vector<8xf32>
    %c0_24 = arith.constant 0 : index
    %c0_25 = arith.constant 0 : index
    %c0_26 = arith.constant 0 : index
    %14 = vector.load %arg7[%c0_24, %c0_25, %c0_26] : memref<18x18x8xf32, #tpu.memory_space<vmem>>, vector<18x18x8xf32>
    %15 = vector.extract_strided_slice %14 {offsets = [0, 0, 0], sizes = [16, 16, 8], strides = [1, 1, 1]} : vector<18x18x8xf32> to vector<16x16x8xf32>
    %c0_27 = arith.constant 0 : index
    %c0_28 = arith.constant 0 : index
    %c0_29 = arith.constant 0 : index
    %16 = vector.load %arg8[%c0_27, %c0_28, %c0_29] : memref<16x16x72xf32, #tpu.memory_space<vmem>>, vector<16x16x8xf32>
    tpu.vector_store %arg8[%c0_27, %c0_28, %c0_29], %15 {strides = array<i32>} : memref<16x16x72xf32, #tpu.memory_space<vmem>>, vector<16x16x8xf32>,
    %17 = vector.extract_strided_slice %14 {offsets = [0, 1, 0], sizes = [16, 16, 8], strides = [1, 1, 1]} : vector<18x18x8xf32> to vector<16x16x8xf32>
    %c0_30 = arith.constant 0 : index
    %c0_31 = arith.constant 0 : index
    %c8 = arith.constant 8 : index
    %18 = vector.load %arg8[%c0_30, %c0_31, %c8] : memref<16x16x72xf32, #tpu.memory_space<vmem>>, vector<16x16x8xf32>
    tpu.vector_store %arg8[%c0_30, %c0_31, %c8], %17 {strides = array<i32>} : memref<16x16x72xf32, #tpu.memory_space<vmem>>, vector<16x16x8xf32>,
    %19 = vector.extract_strided_slice %14 {offsets = [0, 2, 0], sizes = [16, 16, 8], strides = [1, 1, 1]} : vector<18x18x8xf32> to vector<16x16x8xf32>
    %c0_32 = arith.constant 0 : index
    %c0_33 = arith.constant 0 : index
    %c16 = arith.constant 16 : index
    %20 = vector.load %arg8[%c0_32, %c0_33, %c16] : memref<16x16x72xf32, #tpu.memory_space<vmem>>, vector<16x16x8xf32>
    tpu.vector_store %arg8[%c0_32, %c0_33, %c16], %19 {strides = array<i32>} : memref<16x16x72xf32, #tpu.memory_space<vmem>>, vector<16x16x8xf32>,
    %21 = vector.extract_strided_slice %14 {offsets = [1, 0, 0], sizes = [16, 16, 8], strides = [1, 1, 1]} : vector<18x18x8xf32> to vector<16x16x8xf32>
    %c0_34 = arith.constant 0 : index
    %c0_35 = arith.constant 0 : index
    %c24 = arith.constant 24 : index
    %22 = vector.load %arg8[%c0_34, %c0_35, %c24] : memref<16x16x72xf32, #tpu.memory_space<vmem>>, vector<16x16x8xf32>
    tpu.vector_store %arg8[%c0_34, %c0_35, %c24], %21 {strides = array<i32>} : memref<16x16x72xf32, #tpu.memory_space<vmem>>, vector<16x16x8xf32>,
    %23 = vector.extract_strided_slice %14 {offsets = [1, 1, 0], sizes = [16, 16, 8], strides = [1, 1, 1]} : vector<18x18x8xf32> to vector<16x16x8xf32>
    %c0_36 = arith.constant 0 : index
    %c0_37 = arith.constant 0 : index
    %c32 = arith.constant 32 : index
    %24 = vector.load %arg8[%c0_36, %c0_37, %c32] : memref<16x16x72xf32, #tpu.memory_space<vmem>>, vector<16x16x8xf32>
    tpu.vector_store %arg8[%c0_36, %c0_37, %c32], %23 {strides = array<i32>} : memref<16x16x72xf32, #tpu.memory_space<vmem>>, vector<16x16x8xf32>,
    %25 = vector.extract_strided_slice %14 {offsets = [1, 2, 0], sizes = [16, 16, 8], strides = [1, 1, 1]} : vector<18x18x8xf32> to vector<16x16x8xf32>
    %c0_38 = arith.constant 0 : index
    %c0_39 = arith.constant 0 : index
    %c40 = arith.constant 40 : index
    %26 = vector.load %arg8[%c0_38, %c0_39, %c40] : memref<16x16x72xf32, #tpu.memory_space<vmem>>, vector<16x16x8xf32>
    tpu.vector_store %arg8[%c0_38, %c0_39, %c40], %25 {strides = array<i32>} : memref<16x16x72xf32, #tpu.memory_space<vmem>>, vector<16x16x8xf32>,
    %27 = vector.extract_strided_slice %14 {offsets = [2, 0, 0], sizes = [16, 16, 8], strides = [1, 1, 1]} : vector<18x18x8xf32> to vector<16x16x8xf32>
    %c0_40 = arith.constant 0 : index
    %c0_41 = arith.constant 0 : index
    %c48 = arith.constant 48 : index
    %28 = vector.load %arg8[%c0_40, %c0_41, %c48] : memref<16x16x72xf32, #tpu.memory_space<vmem>>, vector<16x16x8xf32>
    tpu.vector_store %arg8[%c0_40, %c0_41, %c48], %27 {strides = array<i32>} : memref<16x16x72xf32, #tpu.memory_space<vmem>>, vector<16x16x8xf32>,
    %29 = vector.extract_strided_slice %14 {offsets = [2, 1, 0], sizes = [16, 16, 8], strides = [1, 1, 1]} : vector<18x18x8xf32> to vector<16x16x8xf32>
    %c0_42 = arith.constant 0 : index
    %c0_43 = arith.constant 0 : index
    %c56 = arith.constant 56 : index
    %30 = vector.load %arg8[%c0_42, %c0_43, %c56] : memref<16x16x72xf32, #tpu.memory_space<vmem>>, vector<16x16x8xf32>
    tpu.vector_store %arg8[%c0_42, %c0_43, %c56], %29 {strides = array<i32>} : memref<16x16x72xf32, #tpu.memory_space<vmem>>, vector<16x16x8xf32>,
    %31 = vector.extract_strided_slice %14 {offsets = [2, 2, 0], sizes = [16, 16, 8], strides = [1, 1, 1]} : vector<18x18x8xf32> to vector<16x16x8xf32>
    %c0_44 = arith.constant 0 : index
    %c0_45 = arith.constant 0 : index
    %c64 = arith.constant 64 : index
    %32 = vector.load %arg8[%c0_44, %c0_45, %c64] : memref<16x16x72xf32, #tpu.memory_space<vmem>>, vector<16x16x8xf32>
    tpu.vector_store %arg8[%c0_44, %c0_45, %c64], %31 {strides = array<i32>} : memref<16x16x72xf32, #tpu.memory_space<vmem>>, vector<16x16x8xf32>,
    %c0_46 = arith.constant 0 : index
    %c0_47 = arith.constant 0 : index
    %c0_48 = arith.constant 0 : index
    %33 = vector.load %arg8[%c0_46, %c0_47, %c0_48] : memref<16x16x72xf32, #tpu.memory_space<vmem>>, vector<16x16x72xf32>
    %cst = arith.constant dense<0.000000e+00> : vector<16x16x8xf32>
    %34 = tpu.matmul %33, %11, %cst {dimension_numbers = #tpu.dot_dimension_numbers<[2], [0], [0, 1], [1], [0, 0, 0, 1, 1, 1], [], []>} : vector<16x16x72xf32>, vector<72x8xf32>, vector<16x16x8xf32> -> vector<16x16x8xf32>
    %35 = vector.shape_cast %13 : vector<8xf32> to vector<1x1x8xf32>
    %36 = vector.broadcast %35 : vector<1x1x8xf32> to vector<16x16x8xf32>
    %37 = arith.addf %34, %36 : vector<16x16x8xf32>
    %cst_49 = arith.constant 0.000000e+00 : f32
    %38 = vector.broadcast %cst_49 : f32 to vector<16x16x8xf32>
    %39 = arith.maximumf %37, %38 : vector<16x16x8xf32>
    %c1_50 = arith.constant 1 : index
    %c1_51 = arith.constant 1 : index
    %c0_52 = arith.constant 0 : index
    %40 = vector.load %arg7[%c1_50, %c1_51, %c0_52] : memref<18x18x8xf32, #tpu.memory_space<vmem>>, vector<16x16x8xf32>
    tpu.vector_store %arg7[%c1_50, %c1_51, %c0_52], %39 {strides = array<i32>} : memref<18x18x8xf32, #tpu.memory_space<vmem>>, vector<16x16x8xf32>,
    %41 = vector.extract_strided_slice %39 {offsets = [1, 0, 0], sizes = [1, 16, 8], strides = [1, 1, 1]} : vector<16x16x8xf32> to vector<1x16x8xf32>
    %c0_53 = arith.constant 0 : index
    %c1_54 = arith.constant 1 : index
    %c0_55 = arith.constant 0 : index
    %42 = vector.load %arg7[%c0_53, %c1_54, %c0_55] : memref<18x18x8xf32, #tpu.memory_space<vmem>>, vector<1x16x8xf32>
    tpu.vector_store %arg7[%c0_53, %c1_54, %c0_55], %41 {strides = array<i32>} : memref<18x18x8xf32, #tpu.memory_space<vmem>>, vector<1x16x8xf32>,
    %43 = vector.extract_strided_slice %39 {offsets = [14, 0, 0], sizes = [1, 16, 8], strides = [1, 1, 1]} : vector<16x16x8xf32> to vector<1x16x8xf32>
    %c17_56 = arith.constant 17 : index
    %c1_57 = arith.constant 1 : index
    %c0_58 = arith.constant 0 : index
    %44 = vector.load %arg7[%c17_56, %c1_57, %c0_58] : memref<18x18x8xf32, #tpu.memory_space<vmem>>, vector<1x16x8xf32>
    tpu.vector_store %arg7[%c17_56, %c1_57, %c0_58], %43 {strides = array<i32>} : memref<18x18x8xf32, #tpu.memory_space<vmem>>, vector<1x16x8xf32>,
    %c0_59 = arith.constant 0 : index
    %c2_60 = arith.constant 2 : index
    %c0_61 = arith.constant 0 : index
    %45 = vector.load %arg7[%c0_59, %c2_60, %c0_61] : memref<18x18x8xf32, #tpu.memory_space<vmem>>, vector<18x1x8xf32>
    %c0_62 = arith.constant 0 : index
    %c0_63 = arith.constant 0 : index
    %c0_64 = arith.constant 0 : index
    %46 = vector.load %arg7[%c0_62, %c0_63, %c0_64] : memref<18x18x8xf32, #tpu.memory_space<vmem>>, vector<18x1x8xf32>
    tpu.vector_store %arg7[%c0_62, %c0_63, %c0_64], %45 {strides = array<i32>} : memref<18x18x8xf32, #tpu.memory_space<vmem>>, vector<18x1x8xf32>,
    %c0_65 = arith.constant 0 : index
    %c15_66 = arith.constant 15 : index
    %c0_67 = arith.constant 0 : index
    %47 = vector.load %arg7[%c0_65, %c15_66, %c0_67] : memref<18x18x8xf32, #tpu.memory_space<vmem>>, vector<18x1x8xf32>
    %c0_68 = arith.constant 0 : index
    %c17_69 = arith.constant 17 : index
    %c0_70 = arith.constant 0 : index
    %48 = vector.load %arg7[%c0_68, %c17_69, %c0_70] : memref<18x18x8xf32, #tpu.memory_space<vmem>>, vector<18x1x8xf32>
    tpu.vector_store %arg7[%c0_68, %c17_69, %c0_70], %47 {strides = array<i32>} : memref<18x18x8xf32, #tpu.memory_space<vmem>>, vector<18x1x8xf32>,
    %c0_71 = arith.constant 0 : index
    %c0_72 = arith.constant 0 : index
    %49 = vector.load %arg4[%c0_71, %c0_72] : memref<72x8xf32, #tpu.memory_space<vmem>>, vector<72x8xf32>
    %c0_73 = arith.constant 0 : index
    %c0_74 = arith.constant 0 : index
    %50 = vector.load %arg5[%c0_73, %c0_74] : memref<1x8xf32, #tpu.memory_space<vmem>>, vector<1x8xf32>
    %51 = vector.shape_cast %50 : vector<1x8xf32> to vector<8xf32>
    %c0_75 = arith.constant 0 : index
    %c0_76 = arith.constant 0 : index
    %c0_77 = arith.constant 0 : index
    %52 = vector.load %arg7[%c0_75, %c0_76, %c0_77] : memref<18x18x8xf32, #tpu.memory_space<vmem>>, vector<18x18x8xf32>
    %53 = vector.extract_strided_slice %52 {offsets = [0, 0, 0], sizes = [16, 16, 8], strides = [1, 1, 1]} : vector<18x18x8xf32> to vector<16x16x8xf32>
    %c0_78 = arith.constant 0 : index
    %c0_79 = arith.constant 0 : index
    %c0_80 = arith.constant 0 : index
    %54 = vector.load %arg8[%c0_78, %c0_79, %c0_80] : memref<16x16x72xf32, #tpu.memory_space<vmem>>, vector<16x16x8xf32>
    tpu.vector_store %arg8[%c0_78, %c0_79, %c0_80], %53 {strides = array<i32>} : memref<16x16x72xf32, #tpu.memory_space<vmem>>, vector<16x16x8xf32>,
    %55 = vector.extract_strided_slice %52 {offsets = [0, 1, 0], sizes = [16, 16, 8], strides = [1, 1, 1]} : vector<18x18x8xf32> to vector<16x16x8xf32>
    %c0_81 = arith.constant 0 : index
    %c0_82 = arith.constant 0 : index
    %c8_83 = arith.constant 8 : index
    %56 = vector.load %arg8[%c0_81, %c0_82, %c8_83] : memref<16x16x72xf32, #tpu.memory_space<vmem>>, vector<16x16x8xf32>
    tpu.vector_store %arg8[%c0_81, %c0_82, %c8_83], %55 {strides = array<i32>} : memref<16x16x72xf32, #tpu.memory_space<vmem>>, vector<16x16x8xf32>,
    %57 = vector.extract_strided_slice %52 {offsets = [0, 2, 0], sizes = [16, 16, 8], strides = [1, 1, 1]} : vector<18x18x8xf32> to vector<16x16x8xf32>
    %c0_84 = arith.constant 0 : index
    %c0_85 = arith.constant 0 : index
    %c16_86 = arith.constant 16 : index
    %58 = vector.load %arg8[%c0_84, %c0_85, %c16_86] : memref<16x16x72xf32, #tpu.memory_space<vmem>>, vector<16x16x8xf32>
    tpu.vector_store %arg8[%c0_84, %c0_85, %c16_86], %57 {strides = array<i32>} : memref<16x16x72xf32, #tpu.memory_space<vmem>>, vector<16x16x8xf32>,
    %59 = vector.extract_strided_slice %52 {offsets = [1, 0, 0], sizes = [16, 16, 8], strides = [1, 1, 1]} : vector<18x18x8xf32> to vector<16x16x8xf32>
    %c0_87 = arith.constant 0 : index
    %c0_88 = arith.constant 0 : index
    %c24_89 = arith.constant 24 : index
    %60 = vector.load %arg8[%c0_87, %c0_88, %c24_89] : memref<16x16x72xf32, #tpu.memory_space<vmem>>, vector<16x16x8xf32>
    tpu.vector_store %arg8[%c0_87, %c0_88, %c24_89], %59 {strides = array<i32>} : memref<16x16x72xf32, #tpu.memory_space<vmem>>, vector<16x16x8xf32>,
    %61 = vector.extract_strided_slice %52 {offsets = [1, 1, 0], sizes = [16, 16, 8], strides = [1, 1, 1]} : vector<18x18x8xf32> to vector<16x16x8xf32>
    %c0_90 = arith.constant 0 : index
    %c0_91 = arith.constant 0 : index
    %c32_92 = arith.constant 32 : index
    %62 = vector.load %arg8[%c0_90, %c0_91, %c32_92] : memref<16x16x72xf32, #tpu.memory_space<vmem>>, vector<16x16x8xf32>
    tpu.vector_store %arg8[%c0_90, %c0_91, %c32_92], %61 {strides = array<i32>} : memref<16x16x72xf32, #tpu.memory_space<vmem>>, vector<16x16x8xf32>,
    %63 = vector.extract_strided_slice %52 {offsets = [1, 2, 0], sizes = [16, 16, 8], strides = [1, 1, 1]} : vector<18x18x8xf32> to vector<16x16x8xf32>
    %c0_93 = arith.constant 0 : index
    %c0_94 = arith.constant 0 : index
    %c40_95 = arith.constant 40 : index
    %64 = vector.load %arg8[%c0_93, %c0_94, %c40_95] : memref<16x16x72xf32, #tpu.memory_space<vmem>>, vector<16x16x8xf32>
    tpu.vector_store %arg8[%c0_93, %c0_94, %c40_95], %63 {strides = array<i32>} : memref<16x16x72xf32, #tpu.memory_space<vmem>>, vector<16x16x8xf32>,
    %65 = vector.extract_strided_slice %52 {offsets = [2, 0, 0], sizes = [16, 16, 8], strides = [1, 1, 1]} : vector<18x18x8xf32> to vector<16x16x8xf32>
    %c0_96 = arith.constant 0 : index
    %c0_97 = arith.constant 0 : index
    %c48_98 = arith.constant 48 : index
    %66 = vector.load %arg8[%c0_96, %c0_97, %c48_98] : memref<16x16x72xf32, #tpu.memory_space<vmem>>, vector<16x16x8xf32>
    tpu.vector_store %arg8[%c0_96, %c0_97, %c48_98], %65 {strides = array<i32>} : memref<16x16x72xf32, #tpu.memory_space<vmem>>, vector<16x16x8xf32>,
    %67 = vector.extract_strided_slice %52 {offsets = [2, 1, 0], sizes = [16, 16, 8], strides = [1, 1, 1]} : vector<18x18x8xf32> to vector<16x16x8xf32>
    %c0_99 = arith.constant 0 : index
    %c0_100 = arith.constant 0 : index
    %c56_101 = arith.constant 56 : index
    %68 = vector.load %arg8[%c0_99, %c0_100, %c56_101] : memref<16x16x72xf32, #tpu.memory_space<vmem>>, vector<16x16x8xf32>
    tpu.vector_store %arg8[%c0_99, %c0_100, %c56_101], %67 {strides = array<i32>} : memref<16x16x72xf32, #tpu.memory_space<vmem>>, vector<16x16x8xf32>,
    %69 = vector.extract_strided_slice %52 {offsets = [2, 2, 0], sizes = [16, 16, 8], strides = [1, 1, 1]} : vector<18x18x8xf32> to vector<16x16x8xf32>
    %c0_102 = arith.constant 0 : index
    %c0_103 = arith.constant 0 : index
    %c64_104 = arith.constant 64 : index
    %70 = vector.load %arg8[%c0_102, %c0_103, %c64_104] : memref<16x16x72xf32, #tpu.memory_space<vmem>>, vector<16x16x8xf32>
    tpu.vector_store %arg8[%c0_102, %c0_103, %c64_104], %69 {strides = array<i32>} : memref<16x16x72xf32, #tpu.memory_space<vmem>>, vector<16x16x8xf32>,
    %c0_105 = arith.constant 0 : index
    %c0_106 = arith.constant 0 : index
    %c0_107 = arith.constant 0 : index
    %71 = vector.load %arg8[%c0_105, %c0_106, %c0_107] : memref<16x16x72xf32, #tpu.memory_space<vmem>>, vector<16x16x72xf32>
    %cst_108 = arith.constant dense<0.000000e+00> : vector<16x16x8xf32>
    %72 = tpu.matmul %71, %49, %cst_108 {dimension_numbers = #tpu.dot_dimension_numbers<[2], [0], [0, 1], [1], [0, 0, 0, 1, 1, 1], [], []>} : vector<16x16x72xf32>, vector<72x8xf32>, vector<16x16x8xf32> -> vector<16x16x8xf32>
    %73 = vector.shape_cast %51 : vector<8xf32> to vector<1x1x8xf32>
    %74 = vector.broadcast %73 : vector<1x1x8xf32> to vector<16x16x8xf32>
    %75 = arith.addf %72, %74 : vector<16x16x8xf32>
    %cst_109 = arith.constant 0.000000e+00 : f32
    %76 = vector.broadcast %cst_109 : f32 to vector<16x16x8xf32>
    %77 = arith.maximumf %75, %76 : vector<16x16x8xf32>
    %78 = arith.addf %77, %1 : vector<16x16x8xf32>
    %c0_110 = arith.constant 0 : index
    %c0_111 = arith.constant 0 : index
    %c0_112 = arith.constant 0 : index
    %c0_113 = arith.constant 0 : index
    %79 = vector.load %arg6[%c0_110, %c0_111, %c0_112, %c0_113] : memref<1x16x16x8xf32, #tpu.memory_space<vmem>>, vector<1x16x16x8xf32>
    %80 = vector.shape_cast %79 : vector<1x16x16x8xf32> to vector<16x16x8xf32>
    %81 = vector.shape_cast %78 : vector<16x16x8xf32> to vector<1x16x16x8xf32>
    tpu.vector_store %arg6[%c0_110, %c0_111, %c0_112, %c0_113], %81 {strides = array<i32>} : memref<1x16x16x8xf32, #tpu.memory_space<vmem>>, vector<1x16x16x8xf32>,
    return
  }
  func.func @transform_0(%arg0: i32) -> (i32, i32, i32, i32) {
    %c0_i32 = arith.constant 0 : i32
    %c0_i32_0 = arith.constant 0 : i32
    %c0_i32_1 = arith.constant 0 : i32
    %c0_i32_2 = arith.constant 0 : i32
    return %arg0, %c0_i32, %c0_i32_0, %c0_i32_1 : i32, i32, i32, i32
  }
  func.func @transform_1(%arg0: i32) -> (i32, i32) {
    %c0_i32 = arith.constant 0 : i32
    %c0_i32_0 = arith.constant 0 : i32
    %c0_i32_1 = arith.constant 0 : i32
    return %c0_i32, %c0_i32_0 : i32, i32
  }
  func.func @transform_2(%arg0: i32) -> (i32, i32) {
    %c0_i32 = arith.constant 0 : i32
    %c0_i32_0 = arith.constant 0 : i32
    %c0_i32_1 = arith.constant 0 : i32
    return %c0_i32, %c0_i32_0 : i32, i32
  }
  func.func @transform_3(%arg0: i32) -> (i32, i32) {
    %c0_i32 = arith.constant 0 : i32
    %c0_i32_0 = arith.constant 0 : i32
    %c0_i32_1 = arith.constant 0 : i32
    return %c0_i32, %c0_i32_0 : i32, i32
  }
  func.func @transform_4(%arg0: i32) -> (i32, i32) {
    %c0_i32 = arith.constant 0 : i32
    %c0_i32_0 = arith.constant 0 : i32
    %c0_i32_1 = arith.constant 0 : i32
    return %c0_i32, %c0_i32_0 : i32, i32
  }
  func.func @transform_5(%arg0: i32) -> (i32, i32, i32, i32) {
    %c0_i32 = arith.constant 0 : i32
    %c0_i32_0 = arith.constant 0 : i32
    %c0_i32_1 = arith.constant 0 : i32
    %c0_i32_2 = arith.constant 0 : i32
    return %arg0, %c0_i32, %c0_i32_0, %c0_i32_1 : i32, i32, i32, i32
  }
}

</mosaic_0001>

<llo_original>
// kernel: tpu_custom_call.1
$region0: #{tpu_custom_call.1}
  #allocation0 [shape = 'u32[]', space=smem, size = 0x4, offset = 0x4, fixed_abs, tag = 'smem constant byte address 0x4 - core index']
  #allocation1 [shape = 'u32[144,128]{1,0:T(1,128)}', space=vmem, size = 0x12000, scoped, tag = 'internal scratch']
  #allocation2 [shape = 'f32[18,18,8]{2,1,0:T(8,128)}', space=vmem, size = 0x36000, scoped, tag = 'scratch operand']
  #allocation3 [shape = 'f32[16,16,72]{2,1,0:T(8,128)}', space=vmem, size = 0x20000, scoped, tag = 'scratch operand']
  %s0 = inlined_call_operand.vmem [shape: f32[2,16,16,8], index: 0, kind: input, shape index: {}]
  %s1 = inlined_call_operand.vmem [shape: f32[72,8], index: 1, kind: input, shape index: {}]
  %s2 = inlined_call_operand.vmem [shape: f32[1,8], index: 2, kind: input, shape index: {}]
  %s3 = inlined_call_operand.vmem [shape: f32[72,8], index: 3, kind: input, shape index: {}]
  %s4 = inlined_call_operand.vmem [shape: f32[1,8], index: 4, kind: input, shape index: {}]
  %s5 = inlined_call_operand.vmem [shape: f32[2,16,16,8], index: 5, kind: output, shape index: {}]
  %s6 = sld [smem:[#allocation0]]
  $region53: #{tpu_custom_call.1} parent=0
    _
  %s8 = ssub.s32 1, %s6
  %s9 = scalar_select 0, %s8, %s6
  loop: start=0, step=1, limit=4
  $region2: #{tpu_custom_call.1} parent=0 // loop_pre_header
    _
  $region3: #{tpu_custom_call.1} parent=0 // loop_header
    %s11 = sphi 0, %s15
    %p12 = scmp.ge.s32.totalorder %s11, 4
    %s21 = sphi 0, %s23
    %s24 = sphi 0, %s21
    %s25 = sphi 0, %s24
    %s41 = sphi 0, %s25
    %s45 = sphi 0, %s45
    %s47 = sphi 0, %s45
    %s48 = sphi 0, %s47
    %s62 = sphi 0, %s48
    %s66 = sphi 0, %s66
    %s68 = sphi 0, %s66
    %s69 = sphi 0, %s68
    %s83 = sphi 0, %s69
    %s87 = sphi 0, %s87
    %s89 = sphi 0, %s87
    %s90 = sphi 0, %s89
    %s104 = sphi 0, %s90
    %s108 = sphi 0, %s108
    %s110 = sphi 0, %s108
    %s111 = sphi 0, %s110
    %s125 = sphi 0, %s111
    %s131 = sphi 0, %s133
    %s134 = sphi 0, %s131
    %s135 = sphi 0, %s134
    %s151 = sphi 0, %s135
  $region4: #{tpu_custom_call.1} parent=0 // loop_header_branch
    %14 = sbr.rel (%p12) target = $region8
  $region5: #{tpu_custom_call.1} parent=0 // loop_body
    %s16 = ssub.s32 %s11, 1
    %s17 = ssub.s32 %s11, 2
    %s18 = sadd.s32 %s11, 1
    %s19 = ssub.s32 %s11, %s18
    %p20 = scmp.eq.s32.totalorder %s19, 0
    %s22 = sadd.s32 %s21, 1
    %s23 = scalar_select %p20, %s21, %s22
    %p26 = pneg %p20
    %p27 = scmp.eq.s32.totalorder %s11, 1
    %p28 = por %p26, %p27
    %p29 = scmp.ne.s32.totalorder %s21, %s24
    %p30 = scmp.eq.s32.totalorder %s11, 0
    %p31 = por %p29, %p30
    %p32 = scmp.ne.s32.totalorder %s21, %s24
    %p33 = scmp.eq.s32.totalorder %s16, 1
    %p34 = por %p32, %p33
    %p35 = scmp.ne.s32.totalorder %s24, %s25
    %p36 = scmp.eq.s32.totalorder %s16, 0
    %p37 = por %p35, %p36
    %p38 = scmp.ne.s32.totalorder %s24, %s25
    %p39 = scmp.eq.s32.totalorder %s17, 1
    %p40 = por %p38, %p39
    %p42 = scmp.ne.s32.totalorder %s25, %s41
    %p43 = scmp.eq.s32.totalorder %s17, 0
    %p44 = por %p42, %p43
    %s46 = sadd.s32 %s45, 1
    %p49 = scmp.eq.s32.totalorder %s11, 1
    %p50 = scmp.ne.s32.totalorder %s45, %s47
    %p51 = scmp.eq.s32.totalorder %s11, 0
    %p52 = por %p50, %p51
    %p53 = scmp.ne.s32.totalorder %s45, %s47
    %p54 = scmp.eq.s32.totalorder %s16, 1
    %p55 = por %p53, %p54
    %p56 = scmp.ne.s32.totalorder %s47, %s48
    %p57 = scmp.eq.s32.totalorder %s16, 0
    %p58 = por %p56, %p57
    %p59 = scmp.ne.s32.totalorder %s47, %s48
    %p60 = scmp.eq.s32.totalorder %s17, 1
    %p61 = por %p59, %p60
    %p63 = scmp.ne.s32.totalorder %s48, %s62
    %p64 = scmp.eq.s32.totalorder %s17, 0
    %p65 = por %p63, %p64
    %s67 = sadd.s32 %s66, 1
    %p70 = scmp.eq.s32.totalorder %s11, 1
    %p71 = scmp.ne.s32.totalorder %s66, %s68
    %p72 = scmp.eq.s32.totalorder %s11, 0
    %p73 = por %p71, %p72
    %p74 = scmp.ne.s32.totalorder %s66, %s68
    %p75 = scmp.eq.s32.totalorder %s16, 1
    %p76 = por %p74, %p75
    %p77 = scmp.ne.s32.totalorder %s68, %s69
    %p78 = scmp.eq.s32.totalorder %s16, 0
    %p79 = por %p77, %p78
    %p80 = scmp.ne.s32.totalorder %s68, %s69
    %p81 = scmp.eq.s32.totalorder %s17, 1
    %p82 = por %p80, %p81
    %p84 = scmp.ne.s32.totalorder %s69, %s83
    %p85 = scmp.eq.s32.totalorder %s17, 0
    %p86 = por %p84, %p85
    %s88 = sadd.s32 %s87, 1
    %p91 = scmp.eq.s32.totalorder %s11, 1
    %p92 = scmp.ne.s32.totalorder %s87, %s89
    %p93 = scmp.eq.s32.totalorder %s11, 0
    %p94 = por %p92, %p93
    %p95 = scmp.ne.s32.totalorder %s87, %s89
    %p96 = scmp.eq.s32.totalorder %s16, 1
    %p97 = por %p95, %p96
    %p98 = scmp.ne.s32.totalorder %s89, %s90
    %p99 = scmp.eq.s32.totalorder %s16, 0
    %p100 = por %p98, %p99
    %p101 = scmp.ne.s32.totalorder %s89, %s90
    %p102 = scmp.eq.s32.totalorder %s17, 1
    %p103 = por %p101, %p102
    %p105 = scmp.ne.s32.totalorder %s90, %s104
    %p106 = scmp.eq.s32.totalorder %s17, 0
    %p107 = por %p105, %p106
    %s109 = sadd.s32 %s108, 1
    %p112 = scmp.eq.s32.totalorder %s11, 1
    %p113 = scmp.ne.s32.totalorder %s108, %s110
    %p114 = scmp.eq.s32.totalorder %s11, 0
    %p115 = por %p113, %p114
    %p116 = scmp.ne.s32.totalorder %s108, %s110
    %p117 = scmp.eq.s32.totalorder %s16, 1
    %p118 = por %p116, %p117
    %p119 = scmp.ne.s32.totalorder %s110, %s111
    %p120 = scmp.eq.s32.totalorder %s16, 0
    %p121 = por %p119, %p120
    %p122 = scmp.ne.s32.totalorder %s110, %s111
    %p123 = scmp.eq.s32.totalorder %s17, 1
    %p124 = por %p122, %p123
    %p126 = scmp.ne.s32.totalorder %s111, %s125
    %p127 = scmp.eq.s32.totalorder %s17, 0
    %p128 = por %p126, %p127
    %s129 = ssub.s32 %s11, %s18
    %p130 = scmp.eq.s32.totalorder %s129, 0
    %s132 = sadd.s32 %s131, 1
    %s133 = scalar_select %p130, %s131, %s132
    %p136 = pneg %p130
    %p137 = scmp.eq.s32.totalorder %s11, 1
    %p138 = por %p136, %p137
    %p139 = scmp.ne.s32.totalorder %s131, %s134
    %p140 = scmp.eq.s32.totalorder %s11, 0
    %p141 = por %p139, %p140
    %p142 = scmp.ne.s32.totalorder %s131, %s134
    %p143 = scmp.eq.s32.totalorder %s16, 1
    %p144 = por %p142, %p143
    %p145 = scmp.ne.s32.totalorder %s134, %s135
    %p146 = scmp.eq.s32.totalorder %s16, 0
    %p147 = por %p145, %p146
    %p148 = scmp.ne.s32.totalorder %s134, %s135
    %p149 = scmp.eq.s32.totalorder %s17, 1
    %p150 = por %p148, %p149
    %p152 = scmp.ne.s32.totalorder %s135, %s151
    %p153 = scmp.eq.s32.totalorder %s17, 0
    %p154 = por %p152, %p153
    %p155 = scmp.le.s32.totalorder 1, %s11
    %p156 = scmp.lt.s32.totalorder %s11, 3
    %p157 = pnand %p155, %p156
    %p158 = pneg %p157
    // Predicated region
    $region9: #{tpu_custom_call.1} parent=5 // pred_check
      _
    $region10: #{tpu_custom_call.1} parent=5 // pred_check_branch
      %160 = sbr.rel (%p157) target = $region12
    $region11: #{tpu_custom_call.1} parent=5 // pred_region
      %s161 = ssub.s32 %s11, 1
      // Predicated region
      $region13: #{tpu_custom_call.1} parent=11 // pred_check
        %p162 = pneg %p58
      $region14: #{tpu_custom_call.1} parent=11 // pred_check_branch
        %164 = sbr.rel (%p162) target = $region16
      $region15: #{tpu_custom_call.1} parent=11 // pred_region
        _
      $region16: #{tpu_custom_call.1} parent=11 // pred_fallthru
        _
      // Predicated region
      $region17: #{tpu_custom_call.1} parent=11 // pred_check
        %p165 = pneg %p79
      $region18: #{tpu_custom_call.1} parent=11 // pred_check_branch
        %167 = sbr.rel (%p165) target = $region20
      $region19: #{tpu_custom_call.1} parent=11 // pred_region
        _
      $region20: #{tpu_custom_call.1} parent=11 // pred_fallthru
        _
      // Predicated region
      $region21: #{tpu_custom_call.1} parent=11 // pred_check
        %p168 = pneg %p100
      $region22: #{tpu_custom_call.1} parent=11 // pred_check_branch
        %170 = sbr.rel (%p168) target = $region24
      $region23: #{tpu_custom_call.1} parent=11 // pred_region
        _
      $region24: #{tpu_custom_call.1} parent=11 // pred_fallthru
        _
      // Predicated region
      $region25: #{tpu_custom_call.1} parent=11 // pred_check
        %p171 = pneg %p121
      $region26: #{tpu_custom_call.1} parent=11 // pred_check_branch
        %173 = sbr.rel (%p171) target = $region28
      $region27: #{tpu_custom_call.1} parent=11 // pred_region
        _
      $region28: #{tpu_custom_call.1} parent=11 // pred_fallthru
        _
    $region12: #{tpu_custom_call.1} parent=5 // pred_fallthru
      _
    %p174 = scmp.lt.s32.totalorder %s11, 2
    // Predicated region
    $region29: #{tpu_custom_call.1} parent=5 // pred_check
      %p175 = pneg %p174
    $region30: #{tpu_custom_call.1} parent=5 // pred_check_branch
      %177 = sbr.rel (%p175) target = $region32
    $region31: #{tpu_custom_call.1} parent=5 // pred_region
      // Predicated region
      $region33: #{tpu_custom_call.1} parent=31 // pred_check
        %p178 = pneg %p31
      $region34: #{tpu_custom_call.1} parent=31 // pred_check_branch
        %180 = sbr.rel (%p178) target = $region36
      $region35: #{tpu_custom_call.1} parent=31 // pred_region
        %p181 = scmp.lt.s32.totalorder %s11, 1
        %s182 = scalar_select %p181, %s11, 1
        %s183 = smul.addr %s182, 32
        %s184 = smul.addr %s183, 8
        %s185 = scalar_lea.vmem %s0, %s184
      $region36: #{tpu_custom_call.1} parent=31 // pred_fallthru
        _
    $region32: #{tpu_custom_call.1} parent=5 // pred_fallthru
      _
    %p186 = scmp.le.s32.totalorder 1, %s11
    %p187 = scmp.lt.s32.totalorder %s11, 3
    %p188 = pnand %p186, %p187
    %p189 = pneg %p188
    // Predicated region
    $region37: #{tpu_custom_call.1} parent=5 // pred_check
      _
    $region38: #{tpu_custom_call.1} parent=5 // pred_check_branch
      %191 = sbr.rel (%p188) target = $region40
    $region39: #{tpu_custom_call.1} parent=5 // pred_region
      %s192 = ssub.s32 %s11, 1
      %p193 = scmp.lt.s32.totalorder %s16, 1
      %s194 = scalar_select %p193, %s16, 1
      %s195 = smul.addr %s194, 32
      %s196 = smul.addr %s195, 8
      %s197 = scalar_lea.vmem %s0, %s196
      %p198 = pneg %p37
      %p199 = pneg %p34
      %p200 = pneg %p58
      %p201 = pneg %p55
      %p202 = pneg %p79
      %p203 = pneg %p76
      %p204 = pneg %p100
      %p205 = pneg %p97
      %p206 = pneg %p121
      %p207 = pneg %p118
      %p208 = pneg %p147
      %p209 = pneg %p144
      %p210 = scmp.lt.s32.totalorder %s16, 1
      %s211 = scalar_select %p210, %s16, 1
      %s212 = smul.addr %s211, 32
      %s213 = smul.addr %s212, 8
      %s214 = scalar_lea.vmem %s5, %s213
      %p215 = scmp.lt.s32.totalorder %s16, 1
      %s216 = scalar_select %p215, %s16, 1
      %s217 = smul.addr %s216, 32
      %s218 = smul.addr %s217, 8
      %s219 = scalar_lea.vmem %s0, %s218
      %p220 = scmp.lt.s32.totalorder %s16, 1
      %s221 = scalar_select %p220, %s16, 1
      %s222 = smul.addr %s221, 32
      %s223 = smul.addr %s222, 8
      %s224 = scalar_lea.vmem %s5, %s223
      %v225 = vld [vmem:[%s219] sm:$0xff]
      %v226 = vld [vmem:[%s219 + $0x8] sm:$0xff]
      %v227 = vld [vmem:[%s219 + $0x10] sm:$0xff]
      %v228 = vld [vmem:[%s219 + $0x18] sm:$0xff]
      %v229 = vld [vmem:[%s219 + $0x20] sm:$0xff]
      %v230 = vld [vmem:[%s219 + $0x28] sm:$0xff]
      %v231 = vld [vmem:[%s219 + $0x30] sm:$0xff]
      %v232 = vld [vmem:[%s219 + $0x38] sm:$0xff]
      %v233 = vld [vmem:[%s219 + $0x40] sm:$0xff]
      %v234 = vld [vmem:[%s219 + $0x48] sm:$0xff]
      %v235 = vld [vmem:[%s219 + $0x50] sm:$0xff]
      %v236 = vld [vmem:[%s219 + $0x58] sm:$0xff]
      %v237 = vld [vmem:[%s219 + $0x60] sm:$0xff]
      %v238 = vld [vmem:[%s219 + $0x68] sm:$0xff]
      %v239 = vld [vmem:[%s219 + $0x70] sm:$0xff]
      %v240 = vld [vmem:[%s219 + $0x78] sm:$0xff]
      %v241 = vld [vmem:[%s219 + $0x80] sm:$0xff]
      %v242 = vld [vmem:[%s219 + $0x88] sm:$0xff]
      %v243 = vld [vmem:[%s219 + $0x90] sm:$0xff]
      %v244 = vld [vmem:[%s219 + $0x98] sm:$0xff]
      %v245 = vld [vmem:[%s219 + $0xa0] sm:$0xff]
      %v246 = vld [vmem:[%s219 + $0xa8] sm:$0xff]
      %v247 = vld [vmem:[%s219 + $0xb0] sm:$0xff]
      %v248 = vld [vmem:[%s219 + $0xb8] sm:$0xff]
      %v249 = vld [vmem:[%s219 + $0xc0] sm:$0xff]
      %v250 = vld [vmem:[%s219 + $0xc8] sm:$0xff]
      %v251 = vld [vmem:[%s219 + $0xd0] sm:$0xff]
      %v252 = vld [vmem:[%s219 + $0xd8] sm:$0xff]
      %v253 = vld [vmem:[%s219 + $0xe0] sm:$0xff]
      %v254 = vld [vmem:[%s219 + $0xe8] sm:$0xff]
      %v255 = vld [vmem:[%s219 + $0xf0] sm:$0xff]
      %v256 = vld [vmem:[%s219 + $0xf8] sm:$0xff]
      %s257 = scalar_lea.vmem [#allocation2], 24
      %vm258 = vcmask 64512
      %259 = vst.msk [vmem:[%s257 + $0x1] sm:$0xff] %vm258, %v225
      %260 = vst.msk [vmem:[%s257 + $0x9] sm:$0xff] %vm258, %v226
      %261 = vst.msk [vmem:[%s257 + $0x19] sm:$0xff] %vm258, %v227
      %262 = vst.msk [vmem:[%s257 + $0x21] sm:$0xff] %vm258, %v228
      %263 = vst.msk [vmem:[%s257 + $0x31] sm:$0xff] %vm258, %v229
      %264 = vst.msk [vmem:[%s257 + $0x39] sm:$0xff] %vm258, %v230
      %265 = vst.msk [vmem:[%s257 + $0x49] sm:$0xff] %vm258, %v231
      %266 = vst.msk [vmem:[%s257 + $0x51] sm:$0xff] %vm258, %v232
      %267 = vst.msk [vmem:[%s257 + $0x61] sm:$0xff] %vm258, %v233
      %268 = vst.msk [vmem:[%s257 + $0x69] sm:$0xff] %vm258, %v234
      %269 = vst.msk [vmem:[%s257 + $0x79] sm:$0xff] %vm258, %v235
      %270 = vst.msk [vmem:[%s257 + $0x81] sm:$0xff] %vm258, %v236
      %271 = vst.msk [vmem:[%s257 + $0x91] sm:$0xff] %vm258, %v237
      %272 = vst.msk [vmem:[%s257 + $0x99] sm:$0xff] %vm258, %v238
      %273 = vst.msk [vmem:[%s257 + $0xa9] sm:$0xff] %vm258, %v239
      %274 = vst.msk [vmem:[%s257 + $0xb1] sm:$0xff] %vm258, %v240
      %275 = vst.msk [vmem:[%s257 + $0xc1] sm:$0xff] %vm258, %v241
      %276 = vst.msk [vmem:[%s257 + $0xc9] sm:$0xff] %vm258, %v242
      %277 = vst.msk [vmem:[%s257 + $0xd9] sm:$0xff] %vm258, %v243
      %278 = vst.msk [vmem:[%s257 + $0xe1] sm:$0xff] %vm258, %v244
      %279 = vst.msk [vmem:[%s257 + $0xf1] sm:$0xff] %vm258, %v245
      %280 = vst.msk [vmem:[%s257 + $0xf9] sm:$0xff] %vm258, %v246
      %281 = vst.msk [vmem:[%s257 + $0x109] sm:$0xff] %vm258, %v247
      %282 = vst.msk [vmem:[%s257 + $0x111] sm:$0xff] %vm258, %v248
      %283 = vst.msk [vmem:[%s257 + $0x121] sm:$0xff] %vm258, %v249
      %284 = vst.msk [vmem:[%s257 + $0x129] sm:$0xff] %vm258, %v250
      %285 = vst.msk [vmem:[%s257 + $0x139] sm:$0xff] %vm258, %v251
      %286 = vst.msk [vmem:[%s257 + $0x141] sm:$0xff] %vm258, %v252
      %287 = vst.msk [vmem:[%s257 + $0x151] sm:$0xff] %vm258, %v253
      %288 = vst.msk [vmem:[%s257 + $0x159] sm:$0xff] %vm258, %v254
      %289 = vst.msk [vmem:[%s257 + $0x169] sm:$0xff] %vm258, %v255
      %290 = vst.msk [vmem:[%s257 + $0x171] sm:$0xff] %vm258, %v256
      %291 = vst.msk [vmem:[#allocation2 + $0x1] sm:$0xff] %vm258, %v227
      %292 = vst.msk [vmem:[#allocation2 + $0x9] sm:$0xff] %vm258, %v228
      %s293 = scalar_lea.vmem [#allocation2], 408
      %294 = vst.msk [vmem:[%s293 + $0x1] sm:$0xff] %vm258, %v253
      %295 = vst.msk [vmem:[%s293 + $0x9] sm:$0xff] %vm258, %v254
      %v296 = vld [vmem:[#allocation2 + $0x2] sm:$0x1]
      %v297 = vld [vmem:[#allocation2 + $0x1a] sm:$0x1]
      %v298 = vld [vmem:[#allocation2 + $0x32] sm:$0x1]
      %v299 = vld [vmem:[#allocation2 + $0x4a] sm:$0x1]
      %v300 = vld [vmem:[#allocation2 + $0x62] sm:$0x1]
      %v301 = vld [vmem:[#allocation2 + $0x7a] sm:$0x1]
      %v302 = vld [vmem:[#allocation2 + $0x92] sm:$0x1]
      %v303 = vld [vmem:[#allocation2 + $0xaa] sm:$0x1]
      %v304 = vld [vmem:[#allocation2 + $0xc2] sm:$0x1]
      %v305 = vld [vmem:[#allocation2 + $0xda] sm:$0x1]
      %v306 = vld [vmem:[#allocation2 + $0xf2] sm:$0x1]
      %v307 = vld [vmem:[#allocation2 + $0x10a] sm:$0x1]
      %v308 = vld [vmem:[#allocation2 + $0x122] sm:$0x1]
      %v309 = vld [vmem:[#allocation2 + $0x13a] sm:$0x1]
      %v310 = vld [vmem:[#allocation2 + $0x152] sm:$0x1]
      %v311 = vld [vmem:[#allocation2 + $0x16a] sm:$0x1]
      %v312 = vld [vmem:[#allocation2 + $0x182] sm:$0x1]
      %v313 = vld [vmem:[#allocation2 + $0x19a] sm:$0x1]
      %vm314 = vcmask 57344
      %315 = vst.msk [vmem:[#allocation2] sm:$0x1] %vm314, %v296
      %316 = vst.msk [vmem:[#allocation2 + $0x18] sm:$0x1] %vm314, %v297
      %317 = vst.msk [vmem:[#allocation2 + $0x30] sm:$0x1] %vm314, %v298
      %318 = vst.msk [vmem:[#allocation2 + $0x48] sm:$0x1] %vm314, %v299
      %319 = vst.msk [vmem:[#allocation2 + $0x60] sm:$0x1] %vm314, %v300
      %320 = vst.msk [vmem:[#allocation2 + $0x78] sm:$0x1] %vm314, %v301
      %321 = vst.msk [vmem:[#allocation2 + $0x90] sm:$0x1] %vm314, %v302
      %322 = vst.msk [vmem:[#allocation2 + $0xa8] sm:$0x1] %vm314, %v303
      %323 = vst.msk [vmem:[#allocation2 + $0xc0] sm:$0x1] %vm314, %v304
      %324 = vst.msk [vmem:[#allocation2 + $0xd8] sm:$0x1] %vm314, %v305
      %325 = vst.msk [vmem:[#allocation2 + $0xf0] sm:$0x1] %vm314, %v306
      %326 = vst.msk [vmem:[#allocation2 + $0x108] sm:$0x1] %vm314, %v307
      %327 = vst.msk [vmem:[#allocation2 + $0x120] sm:$0x1] %vm314, %v308
      %328 = vst.msk [vmem:[#allocation2 + $0x138] sm:$0x1] %vm314, %v309
      %329 = vst.msk [vmem:[#allocation2 + $0x150] sm:$0x1] %vm314, %v310
      %330 = vst.msk [vmem:[#allocation2 + $0x168] sm:$0x1] %vm314, %v311
      %331 = vst.msk [vmem:[#allocation2 + $0x180] sm:$0x1] %vm314, %v312
      %332 = vst.msk [vmem:[#allocation2 + $0x198] sm:$0x1] %vm314, %v313
      %v333 = vld [vmem:[#allocation2 + $0xf] sm:$0x1]
      %v334 = vld [vmem:[#allocation2 + $0x27] sm:$0x1]
      %v335 = vld [vmem:[#allocation2 + $0x3f] sm:$0x1]
      %v336 = vld [vmem:[#allocation2 + $0x57] sm:$0x1]
      %v337 = vld [vmem:[#allocation2 + $0x6f] sm:$0x1]
      %v338 = vld [vmem:[#allocation2 + $0x87] sm:$0x1]
      %v339 = vld [vmem:[#allocation2 + $0x9f] sm:$0x1]
      %v340 = vld [vmem:[#allocation2 + $0xb7] sm:$0x1]
      %v341 = vld [vmem:[#allocation2 + $0xcf] sm:$0x1]
      %v342 = vld [vmem:[#allocation2 + $0xe7] sm:$0x1]
      %v343 = vld [vmem:[#allocation2 + $0xff] sm:$0x1]
      %v344 = vld [vmem:[#allocation2 + $0x117] sm:$0x1]
      %v345 = vld [vmem:[#allocation2 + $0x12f] sm:$0x1]
      %v346 = vld [vmem:[#allocation2 + $0x147] sm:$0x1]
      %v347 = vld [vmem:[#allocation2 + $0x15f] sm:$0x1]
      %v348 = vld [vmem:[#allocation2 + $0x177] sm:$0x1]
      %v349 = vld [vmem:[#allocation2 + $0x18f] sm:$0x1]
      %v350 = vld [vmem:[#allocation2 + $0x1a7] sm:$0x1]
      %351 = vst.msk [vmem:[#allocation2 + $0x11] sm:$0x1] %vm314, %v333
      %352 = vst.msk [vmem:[#allocation2 + $0x29] sm:$0x1] %vm314, %v334
      %353 = vst.msk [vmem:[#allocation2 + $0x41] sm:$0x1] %vm314, %v335
      %354 = vst.msk [vmem:[#allocation2 + $0x59] sm:$0x1] %vm314, %v336
      %355 = vst.msk [vmem:[#allocation2 + $0x71] sm:$0x1] %vm314, %v337
      %356 = vst.msk [vmem:[#allocation2 + $0x89] sm:$0x1] %vm314, %v338
      %357 = vst.msk [vmem:[#allocation2 + $0xa1] sm:$0x1] %vm314, %v339
      %358 = vst.msk [vmem:[#allocation2 + $0xb9] sm:$0x1] %vm314, %v340
      %359 = vst.msk [vmem:[#allocation2 + $0xd1] sm:$0x1] %vm314, %v341
      %360 = vst.msk [vmem:[#allocation2 + $0xe9] sm:$0x1] %vm314, %v342
      %361 = vst.msk [vmem:[#allocation2 + $0x101] sm:$0x1] %vm314, %v343
      %362 = vst.msk [vmem:[#allocation2 + $0x119] sm:$0x1] %vm314, %v344
      %363 = vst.msk [vmem:[#allocation2 + $0x131] sm:$0x1] %vm314, %v345
      %364 = vst.msk [vmem:[#allocation2 + $0x149] sm:$0x1] %vm314, %v346
      %365 = vst.msk [vmem:[#allocation2 + $0x161] sm:$0x1] %vm314, %v347
      %366 = vst.msk [vmem:[#allocation2 + $0x179] sm:$0x1] %vm314, %v348
      %367 = vst.msk [vmem:[#allocation2 + $0x191] sm:$0x1] %vm314, %v349
      %368 = vst.msk [vmem:[#allocation2 + $0x1a9] sm:$0x1] %vm314, %v350
      %v369 = vld [vmem:[%s1] sm:$0xff]
      %v370 = vld [vmem:[%s1 + $0x8] sm:$0xff]
      %v371 = vld [vmem:[%s1 + $0x10] sm:$0xff]
      %v372 = vld [vmem:[%s1 + $0x18] sm:$0xff]
      %v373 = vld [vmem:[%s1 + $0x20] sm:$0xff]
      %v374 = vld [vmem:[%s1 + $0x28] sm:$0xff]
      %v375 = vld [vmem:[%s1 + $0x30] sm:$0xff]
      %v376 = vld [vmem:[%s1 + $0x38] sm:$0xff]
      %v377 = vld [vmem:[%s1 + $0x40] sm:$0xff]
      %v378 = vld [vmem:[%s2] sm:$0x1]
      %v379 = vld [vmem:[#allocation2] sm:$0xff]
      %v380 = vld [vmem:[#allocation2 + $0x8] sm:$0xff]
      %v381 = vld [vmem:[#allocation2 + $0x10] sm:$0x3]
      %v382 = vld [vmem:[#allocation2 + $0x18] sm:$0xff]
      %v383 = vld [vmem:[#allocation2 + $0x20] sm:$0xff]
      %v384 = vld [vmem:[#allocation2 + $0x28] sm:$0x3]
      %v385 = vld [vmem:[#allocation2 + $0x30] sm:$0xff]
      %v386 = vld [vmem:[#allocation2 + $0x38] sm:$0xff]
      %v387 = vld [vmem:[#allocation2 + $0x40] sm:$0x3]
      %v388 = vld [vmem:[#allocation2 + $0x48] sm:$0xff]
      %v389 = vld [vmem:[#allocation2 + $0x50] sm:$0xff]
      %v390 = vld [vmem:[#allocation2 + $0x58] sm:$0x3]
      %v391 = vld [vmem:[#allocation2 + $0x60] sm:$0xff]
      %v392 = vld [vmem:[#allocation2 + $0x68] sm:$0xff]
      %v393 = vld [vmem:[#allocation2 + $0x70] sm:$0x3]
      %v394 = vld [vmem:[#allocation2 + $0x78] sm:$0xff]
      %v395 = vld [vmem:[#allocation2 + $0x80] sm:$0xff]
      %v396 = vld [vmem:[#allocation2 + $0x88] sm:$0x3]
      %v397 = vld [vmem:[#allocation2 + $0x90] sm:$0xff]
      %v398 = vld [vmem:[#allocation2 + $0x98] sm:$0xff]
      %v399 = vld [vmem:[#allocation2 + $0xa0] sm:$0x3]
      %v400 = vld [vmem:[#allocation2 + $0xa8] sm:$0xff]
      %v401 = vld [vmem:[#allocation2 + $0xb0] sm:$0xff]
      %v402 = vld [vmem:[#allocation2 + $0xb8] sm:$0x3]
      %v403 = vld [vmem:[#allocation2 + $0xc0] sm:$0xff]
      %v404 = vld [vmem:[#allocation2 + $0xc8] sm:$0xff]
      %v405 = vld [vmem:[#allocation2 + $0xd0] sm:$0x3]
      %v406 = vld [vmem:[#allocation2 + $0xd8] sm:$0xff]
      %v407 = vld [vmem:[#allocation2 + $0xe0] sm:$0xff]
      %v408 = vld [vmem:[#allocation2 + $0xe8] sm:$0x3]
      %v409 = vld [vmem:[#allocation2 + $0xf0] sm:$0xff]
      %v410 = vld [vmem:[#allocation2 + $0xf8] sm:$0xff]
      %v411 = vld [vmem:[#allocation2 + $0x100] sm:$0x3]
      %v412 = vld [vmem:[#allocation2 + $0x108] sm:$0xff]
      %v413 = vld [vmem:[#allocation2 + $0x110] sm:$0xff]
      %v414 = vld [vmem:[#allocation2 + $0x118] sm:$0x3]
      %v415 = vld [vmem:[#allocation2 + $0x120] sm:$0xff]
      %v416 = vld [vmem:[#allocation2 + $0x128] sm:$0xff]
      %v417 = vld [vmem:[#allocation2 + $0x130] sm:$0x3]
      %v418 = vld [vmem:[#allocation2 + $0x138] sm:$0xff]
      %v419 = vld [vmem:[#allocation2 + $0x140] sm:$0xff]
      %v420 = vld [vmem:[#allocation2 + $0x148] sm:$0x3]
      %v421 = vld [vmem:[#allocation2 + $0x150] sm:$0xff]
      %v422 = vld [vmem:[#allocation2 + $0x158] sm:$0xff]
      %v423 = vld [vmem:[#allocation2 + $0x160] sm:$0x3]
      %v424 = vld [vmem:[#allocation2 + $0x168] sm:$0xff]
      %v425 = vld [vmem:[#allocation2 + $0x170] sm:$0xff]
      %v426 = vld [vmem:[#allocation2 + $0x178] sm:$0x3]
      %v427 = vld [vmem:[#allocation2 + $0x180] sm:$0xff]
      %v428 = vld [vmem:[#allocation2 + $0x188] sm:$0xff]
      %v429 = vld [vmem:[#allocation2 + $0x190] sm:$0x3]
      %v430 = vld [vmem:[#allocation2 + $0x198] sm:$0xff]
      %v431 = vld [vmem:[#allocation2 + $0x1a0] sm:$0xff]
      %v432 = vld [vmem:[#allocation2 + $0x1a8] sm:$0x3]
      %433 = vst.msk [vmem:[#allocation3] sm:$0xff] %vm258, %v379
      %434 = vst.msk [vmem:[#allocation3 + $0x8] sm:$0xff] %vm258, %v380
      %435 = vst.msk [vmem:[#allocation3 + $0x10] sm:$0xff] %vm258, %v382
      %436 = vst.msk [vmem:[#allocation3 + $0x18] sm:$0xff] %vm258, %v383
      %437 = vst.msk [vmem:[#allocation3 + $0x20] sm:$0xff] %vm258, %v385
      %438 = vst.msk [vmem:[#allocation3 + $0x28] sm:$0xff] %vm258, %v386
      %439 = vst.msk [vmem:[#allocation3 + $0x30] sm:$0xff] %vm258, %v388
      %440 = vst.msk [vmem:[#allocation3 + $0x38] sm:$0xff] %vm258, %v389
      %441 = vst.msk [vmem:[#allocation3 + $0x40] sm:$0xff] %vm258, %v391
      %442 = vst.msk [vmem:[#allocation3 + $0x48] sm:$0xff] %vm258, %v392
      %443 = vst.msk [vmem:[#allocation3 + $0x50] sm:$0xff] %vm258, %v394
      %444 = vst.msk [vmem:[#allocation3 + $0x58] sm:$0xff] %vm258, %v395
      %445 = vst.msk [vmem:[#allocation3 + $0x60] sm:$0xff] %vm258, %v397
      %446 = vst.msk [vmem:[#allocation3 + $0x68] sm:$0xff] %vm258, %v398
      %447 = vst.msk [vmem:[#allocation3 + $0x70] sm:$0xff] %vm258, %v400
      %448 = vst.msk [vmem:[#allocation3 + $0x78] sm:$0xff] %vm258, %v401
      %449 = vst.msk [vmem:[#allocation3 + $0x80] sm:$0xff] %vm258, %v403
      %450 = vst.msk [vmem:[#allocation3 + $0x88] sm:$0xff] %vm258, %v404
      %451 = vst.msk [vmem:[#allocation3 + $0x90] sm:$0xff] %vm258, %v406
      %452 = vst.msk [vmem:[#allocation3 + $0x98] sm:$0xff] %vm258, %v407
      %453 = vst.msk [vmem:[#allocation3 + $0xa0] sm:$0xff] %vm258, %v409
      %454 = vst.msk [vmem:[#allocation3 + $0xa8] sm:$0xff] %vm258, %v410
      %455 = vst.msk [vmem:[#allocation3 + $0xb0] sm:$0xff] %vm258, %v412
      %456 = vst.msk [vmem:[#allocation3 + $0xb8] sm:$0xff] %vm258, %v413
      %457 = vst.msk [vmem:[#allocation3 + $0xc0] sm:$0xff] %vm258, %v415
      %458 = vst.msk [vmem:[#allocation3 + $0xc8] sm:$0xff] %vm258, %v416
      %459 = vst.msk [vmem:[#allocation3 + $0xd0] sm:$0xff] %vm258, %v418
      %460 = vst.msk [vmem:[#allocation3 + $0xd8] sm:$0xff] %vm258, %v419
      %461 = vst.msk [vmem:[#allocation3 + $0xe0] sm:$0xff] %vm258, %v421
      %462 = vst.msk [vmem:[#allocation3 + $0xe8] sm:$0xff] %vm258, %v422
      %463 = vst.msk [vmem:[#allocation3 + $0xf0] sm:$0xff] %vm258, %v424
      %464 = vst.msk [vmem:[#allocation3 + $0xf8] sm:$0xff] %vm258, %v425
      %513 = vrot.lane.b32.xlu0 %v379, 8
      %v514 = vpop.permute.xlu0 %513
      %515 = vrot.lane.b32.xlu0 %v380, 8
      %v516 = vpop.permute.xlu0 %515
      %517 = vrot.lane.b32.xlu0 %v381, 8
      %v518 = vpop.permute.xlu0 %517
      %519 = vrot.lane.b32.xlu0 %v382, 8
      %v520 = vpop.permute.xlu0 %519
      %521 = vrot.lane.b32.xlu0 %v383, 8
      %v522 = vpop.permute.xlu0 %521
      %523 = vrot.lane.b32.xlu0 %v384, 8
      %v524 = vpop.permute.xlu0 %523
      %525 = vrot.lane.b32.xlu0 %v385, 8
      %v526 = vpop.permute.xlu0 %525
      %527 = vrot.lane.b32.xlu0 %v386, 8
      %v528 = vpop.permute.xlu0 %527
      %529 = vrot.lane.b32.xlu0 %v387, 8
      %v530 = vpop.permute.xlu0 %529
      %531 = vrot.lane.b32.xlu0 %v388, 8
      %v532 = vpop.permute.xlu0 %531
      %533 = vrot.lane.b32.xlu0 %v389, 8
      %v534 = vpop.permute.xlu0 %533
      %535 = vrot.lane.b32.xlu0 %v390, 8
      %v536 = vpop.permute.xlu0 %535
      %537 = vrot.lane.b32.xlu0 %v391, 8
      %v538 = vpop.permute.xlu0 %537
      %539 = vrot.lane.b32.xlu0 %v392, 8
      %v540 = vpop.permute.xlu0 %539
      %541 = vrot.lane.b32.xlu0 %v393, 8
      %v542 = vpop.permute.xlu0 %541
      %543 = vrot.lane.b32.xlu0 %v394, 8
      %v544 = vpop.permute.xlu0 %543
      %545 = vrot.lane.b32.xlu0 %v395, 8
      %v546 = vpop.permute.xlu0 %545
      %547 = vrot.lane.b32.xlu0 %v396, 8
      %v548 = vpop.permute.xlu0 %547
      %549 = vrot.lane.b32.xlu0 %v397, 8
      %v550 = vpop.permute.xlu0 %549
      %551 = vrot.lane.b32.xlu0 %v398, 8
      %v552 = vpop.permute.xlu0 %551
      %553 = vrot.lane.b32.xlu0 %v399, 8
      %v554 = vpop.permute.xlu0 %553
      %555 = vrot.lane.b32.xlu0 %v400, 8
      %v556 = vpop.permute.xlu0 %555
      %557 = vrot.lane.b32.xlu0 %v401, 8
      %v558 = vpop.permute.xlu0 %557
      %559 = vrot.lane.b32.xlu0 %v402, 8
      %v560 = vpop.permute.xlu0 %559
      %561 = vrot.lane.b32.xlu0 %v403, 8
      %v562 = vpop.permute.xlu0 %561
      %563 = vrot.lane.b32.xlu0 %v404, 8
      %v564 = vpop.permute.xlu0 %563
      %565 = vrot.lane.b32.xlu0 %v405, 8
      %v566 = vpop.permute.xlu0 %565
      %567 = vrot.lane.b32.xlu0 %v406, 8
      %v568 = vpop.permute.xlu0 %567
      %569 = vrot.lane.b32.xlu0 %v407, 8
      %v570 = vpop.permute.xlu0 %569
      %571 = vrot.lane.b32.xlu0 %v408, 8
      %v572 = vpop.permute.xlu0 %571
      %573 = vrot.lane.b32.xlu0 %v409, 8
      %v574 = vpop.permute.xlu0 %573
      %575 = vrot.lane.b32.xlu0 %v410, 8
      %v576 = vpop.permute.xlu0 %575
      %577 = vrot.lane.b32.xlu0 %v411, 8
      %v578 = vpop.permute.xlu0 %577
      %579 = vrot.lane.b32.xlu0 %v412, 8
      %v580 = vpop.permute.xlu0 %579
      %581 = vrot.lane.b32.xlu0 %v413, 8
      %v582 = vpop.permute.xlu0 %581
      %583 = vrot.lane.b32.xlu0 %v414, 8
      %v584 = vpop.permute.xlu0 %583
      %585 = vrot.lane.b32.xlu0 %v415, 8
      %v586 = vpop.permute.xlu0 %585
      %587 = vrot.lane.b32.xlu0 %v416, 8
      %v588 = vpop.permute.xlu0 %587
      %589 = vrot.lane.b32.xlu0 %v417, 8
      %v590 = vpop.permute.xlu0 %589
      %591 = vrot.lane.b32.xlu0 %v418, 8
      %v592 = vpop.permute.xlu0 %591
      %593 = vrot.lane.b32.xlu0 %v419, 8
      %v594 = vpop.permute.xlu0 %593
      %595 = vrot.lane.b32.xlu0 %v420, 8
      %v596 = vpop.permute.xlu0 %595
      %597 = vrot.lane.b32.xlu0 %v421, 8
      %v598 = vpop.permute.xlu0 %597
      %599 = vrot.lane.b32.xlu0 %v422, 8
      %v600 = vpop.permute.xlu0 %599
      %601 = vrot.lane.b32.xlu0 %v423, 8
      %v602 = vpop.permute.xlu0 %601
      %603 = vrot.lane.b32.xlu0 %v424, 8
      %v604 = vpop.permute.xlu0 %603
      %605 = vrot.lane.b32.xlu0 %v425, 8
      %v606 = vpop.permute.xlu0 %605
      %607 = vrot.lane.b32.xlu0 %v426, 8
      %v608 = vpop.permute.xlu0 %607
      %vm657 = vcmask 130113
      %658 = vst.msk [vmem:[#allocation3 - $0x1] sm:$0xfe] %vm657, %v514
      %vm659 = vcmask 130112
      %660 = vst.msk [vmem:[#allocation3 + $0x7] sm:$0xff] %vm659, %v516
      %vm661 = vcmask 122944
      %662 = vst.msk [vmem:[#allocation3 + $0xf] sm:$0x1] %vm661, %v518
      %663 = vst.msk [vmem:[#allocation3 + $0xf] sm:$0xfe] %vm657, %v520
      %664 = vst.msk [vmem:[#allocation3 + $0x17] sm:$0xff] %vm659, %v522
      %665 = vst.msk [vmem:[#allocation3 + $0x1f] sm:$0x1] %vm661, %v524
      %666 = vst.msk [vmem:[#allocation3 + $0x1f] sm:$0xfe] %vm657, %v526
      %667 = vst.msk [vmem:[#allocation3 + $0x27] sm:$0xff] %vm659, %v528
      %668 = vst.msk [vmem:[#allocation3 + $0x2f] sm:$0x1] %vm661, %v530
      %669 = vst.msk [vmem:[#allocation3 + $0x2f] sm:$0xfe] %vm657, %v532
      %670 = vst.msk [vmem:[#allocation3 + $0x37] sm:$0xff] %vm659, %v534
      %671 = vst.msk [vmem:[#allocation3 + $0x3f] sm:$0x1] %vm661, %v536
      %672 = vst.msk [vmem:[#allocation3 + $0x3f] sm:$0xfe] %vm657, %v538
      %673 = vst.msk [vmem:[#allocation3 + $0x47] sm:$0xff] %vm659, %v540
      %674 = vst.msk [vmem:[#allocation3 + $0x4f] sm:$0x1] %vm661, %v542
      %675 = vst.msk [vmem:[#allocation3 + $0x4f] sm:$0xfe] %vm657, %v544
      %676 = vst.msk [vmem:[#allocation3 + $0x57] sm:$0xff] %vm659, %v546
      %677 = vst.msk [vmem:[#allocation3 + $0x5f] sm:$0x1] %vm661, %v548
      %678 = vst.msk [vmem:[#allocation3 + $0x5f] sm:$0xfe] %vm657, %v550
      %679 = vst.msk [vmem:[#allocation3 + $0x67] sm:$0xff] %vm659, %v552
      %680 = vst.msk [vmem:[#allocation3 + $0x6f] sm:$0x1] %vm661, %v554
      %681 = vst.msk [vmem:[#allocation3 + $0x6f] sm:$0xfe] %vm657, %v556
      %682 = vst.msk [vmem:[#allocation3 + $0x77] sm:$0xff] %vm659, %v558
      %683 = vst.msk [vmem:[#allocation3 + $0x7f] sm:$0x1] %vm661, %v560
      %684 = vst.msk [vmem:[#allocation3 + $0x7f] sm:$0xfe] %vm657, %v562
      %685 = vst.msk [vmem:[#allocation3 + $0x87] sm:$0xff] %vm659, %v564
      %686 = vst.msk [vmem:[#allocation3 + $0x8f] sm:$0x1] %vm661, %v566
      %687 = vst.msk [vmem:[#allocation3 + $0x8f] sm:$0xfe] %vm657, %v568
      %688 = vst.msk [vmem:[#allocation3 + $0x97] sm:$0xff] %vm659, %v570
      %689 = vst.msk [vmem:[#allocation3 + $0x9f] sm:$0x1] %vm661, %v572
      %690 = vst.msk [vmem:[#allocation3 + $0x9f] sm:$0xfe] %vm657, %v574
      %691 = vst.msk [vmem:[#allocation3 + $0xa7] sm:$0xff] %vm659, %v576
      %692 = vst.msk [vmem:[#allocation3 + $0xaf] sm:$0x1] %vm661, %v578
      %693 = vst.msk [vmem:[#allocation3 + $0xaf] sm:$0xfe] %vm657, %v580
      %694 = vst.msk [vmem:[#allocation3 + $0xb7] sm:$0xff] %vm659, %v582
      %695 = vst.msk [vmem:[#allocation3 + $0xbf] sm:$0x1] %vm661, %v584
      %696 = vst.msk [vmem:[#allocation3 + $0xbf] sm:$0xfe] %vm657, %v586
      %697 = vst.msk [vmem:[#allocation3 + $0xc7] sm:$0xff] %vm659, %v588
      %698 = vst.msk [vmem:[#allocation3 + $0xcf] sm:$0x1] %vm661, %v590
      %699 = vst.msk [vmem:[#allocation3 + $0xcf] sm:$0xfe] %vm657, %v592
      %700 = vst.msk [vmem:[#allocation3 + $0xd7] sm:$0xff] %vm659, %v594
      %701 = vst.msk [vmem:[#allocation3 + $0xdf] sm:$0x1] %vm661, %v596
      %702 = vst.msk [vmem:[#allocation3 + $0xdf] sm:$0xfe] %vm657, %v598
      %703 = vst.msk [vmem:[#allocation3 + $0xe7] sm:$0xff] %vm659, %v600
      %704 = vst.msk [vmem:[#allocation3 + $0xef] sm:$0x1] %vm661, %v602
      %705 = vst.msk [vmem:[#allocation3 + $0xef] sm:$0xfe] %vm657, %v604
      %706 = vst.msk [vmem:[#allocation3 + $0xf7] sm:$0xff] %vm659, %v606
      %707 = vst.msk [vmem:[#allocation3 + $0xff] sm:$0x1] %vm661, %v608
      %708 = vrot.lane.b32.xlu0 %v379, 16
      %v709 = vpop.permute.xlu0 %708
      %710 = vrot.lane.b32.xlu0 %v380, 16
      %v711 = vpop.permute.xlu0 %710
      %712 = vrot.lane.b32.xlu0 %v381, 16
      %v713 = vpop.permute.xlu0 %712
      %714 = vrot.lane.b32.xlu0 %v382, 16
      %v715 = vpop.permute.xlu0 %714
      %716 = vrot.lane.b32.xlu0 %v383, 16
      %v717 = vpop.permute.xlu0 %716
      %718 = vrot.lane.b32.xlu0 %v384, 16
      %v719 = vpop.permute.xlu0 %718
      %720 = vrot.lane.b32.xlu0 %v385, 16
      %v721 = vpop.permute.xlu0 %720
      %722 = vrot.lane.b32.xlu0 %v386, 16
      %v723 = vpop.permute.xlu0 %722
      %724 = vrot.lane.b32.xlu0 %v387, 16
      %v725 = vpop.permute.xlu0 %724
      %726 = vrot.lane.b32.xlu0 %v388, 16
      %v727 = vpop.permute.xlu0 %726
      %728 = vrot.lane.b32.xlu0 %v389, 16
      %v729 = vpop.permute.xlu0 %728
      %730 = vrot.lane.b32.xlu0 %v390, 16
      %v731 = vpop.permute.xlu0 %730
      %732 = vrot.lane.b32.xlu0 %v391, 16
      %v733 = vpop.permute.xlu0 %732
      %734 = vrot.lane.b32.xlu0 %v392, 16
      %v735 = vpop.permute.xlu0 %734
      %736 = vrot.lane.b32.xlu0 %v393, 16
      %v737 = vpop.permute.xlu0 %736
      %738 = vrot.lane.b32.xlu0 %v394, 16
      %v739 = vpop.permute.xlu0 %738
      %740 = vrot.lane.b32.xlu0 %v395, 16
      %v741 = vpop.permute.xlu0 %740
      %742 = vrot.lane.b32.xlu0 %v396, 16
      %v743 = vpop.permute.xlu0 %742
      %744 = vrot.lane.b32.xlu0 %v397, 16
      %v745 = vpop.permute.xlu0 %744
      %746 = vrot.lane.b32.xlu0 %v398, 16
      %v747 = vpop.permute.xlu0 %746
      %748 = vrot.lane.b32.xlu0 %v399, 16
      %v749 = vpop.permute.xlu0 %748
      %750 = vrot.lane.b32.xlu0 %v400, 16
      %v751 = vpop.permute.xlu0 %750
      %752 = vrot.lane.b32.xlu0 %v401, 16
      %v753 = vpop.permute.xlu0 %752
      %754 = vrot.lane.b32.xlu0 %v402, 16
      %v755 = vpop.permute.xlu0 %754
      %756 = vrot.lane.b32.xlu0 %v403, 16
      %v757 = vpop.permute.xlu0 %756
      %758 = vrot.lane.b32.xlu0 %v404, 16
      %v759 = vpop.permute.xlu0 %758
      %760 = vrot.lane.b32.xlu0 %v405, 16
      %v761 = vpop.permute.xlu0 %760
      %762 = vrot.lane.b32.xlu0 %v406, 16
      %v763 = vpop.permute.xlu0 %762
      %764 = vrot.lane.b32.xlu0 %v407, 16
      %v765 = vpop.permute.xlu0 %764
      %766 = vrot.lane.b32.xlu0 %v408, 16
      %v767 = vpop.permute.xlu0 %766
      %768 = vrot.lane.b32.xlu0 %v409, 16
      %v769 = vpop.permute.xlu0 %768
      %770 = vrot.lane.b32.xlu0 %v410, 16
      %v771 = vpop.permute.xlu0 %770
      %772 = vrot.lane.b32.xlu0 %v411, 16
      %v773 = vpop.permute.xlu0 %772
      %774 = vrot.lane.b32.xlu0 %v412, 16
      %v775 = vpop.permute.xlu0 %774
      %776 = vrot.lane.b32.xlu0 %v413, 16
      %v777 = vpop.permute.xlu0 %776
      %778 = vrot.lane.b32.xlu0 %v414, 16
      %v779 = vpop.permute.xlu0 %778
      %780 = vrot.lane.b32.xlu0 %v415, 16
      %v781 = vpop.permute.xlu0 %780
      %782 = vrot.lane.b32.xlu0 %v416, 16
      %v783 = vpop.permute.xlu0 %782
      %784 = vrot.lane.b32.xlu0 %v417, 16
      %v785 = vpop.permute.xlu0 %784
      %786 = vrot.lane.b32.xlu0 %v418, 16
      %v787 = vpop.permute.xlu0 %786
      %788 = vrot.lane.b32.xlu0 %v419, 16
      %v789 = vpop.permute.xlu0 %788
      %790 = vrot.lane.b32.xlu0 %v420, 16
      %v791 = vpop.permute.xlu0 %790
      %792 = vrot.lane.b32.xlu0 %v421, 16
      %v793 = vpop.permute.xlu0 %792
      %794 = vrot.lane.b32.xlu0 %v422, 16
      %v795 = vpop.permute.xlu0 %794
      %796 = vrot.lane.b32.xlu0 %v423, 16
      %v797 = vpop.permute.xlu0 %796
      %798 = vrot.lane.b32.xlu0 %v424, 16
      %v799 = vpop.permute.xlu0 %798
      %800 = vrot.lane.b32.xlu0 %v425, 16
      %v801 = vpop.permute.xlu0 %800
      %802 = vrot.lane.b32.xlu0 %v426, 16
      %v803 = vpop.permute.xlu0 %802
      %vm852 = vcmask 195714
      %853 = vst.msk [vmem:[#allocation3 - $0x2] sm:$0xfc] %vm852, %v709
      %vm854 = vcmask 195712
      %855 = vst.msk [vmem:[#allocation3 + $0x6] sm:$0xff] %vm854, %v711
      %vm856 = vcmask 189568
      %857 = vst.msk [vmem:[#allocation3 + $0xe] sm:$0x3] %vm856, %v713
      %858 = vst.msk [vmem:[#allocation3 + $0xe] sm:$0xfc] %vm852, %v715
      %859 = vst.msk [vmem:[#allocation3 + $0x16] sm:$0xff] %vm854, %v717
      %860 = vst.msk [vmem:[#allocation3 + $0x1e] sm:$0x3] %vm856, %v719
      %861 = vst.msk [vmem:[#allocation3 + $0x1e] sm:$0xfc] %vm852, %v721
      %862 = vst.msk [vmem:[#allocation3 + $0x26] sm:$0xff] %vm854, %v723
      %863 = vst.msk [vmem:[#allocation3 + $0x2e] sm:$0x3] %vm856, %v725
      %864 = vst.msk [vmem:[#allocation3 + $0x2e] sm:$0xfc] %vm852, %v727
      %865 = vst.msk [vmem:[#allocation3 + $0x36] sm:$0xff] %vm854, %v729
      %866 = vst.msk [vmem:[#allocation3 + $0x3e] sm:$0x3] %vm856, %v731
      %867 = vst.msk [vmem:[#allocation3 + $0x3e] sm:$0xfc] %vm852, %v733
      %868 = vst.msk [vmem:[#allocation3 + $0x46] sm:$0xff] %vm854, %v735
      %869 = vst.msk [vmem:[#allocation3 + $0x4e] sm:$0x3] %vm856, %v737
      %870 = vst.msk [vmem:[#allocation3 + $0x4e] sm:$0xfc] %vm852, %v739
      %871 = vst.msk [vmem:[#allocation3 + $0x56] sm:$0xff] %vm854, %v741
      %872 = vst.msk [vmem:[#allocation3 + $0x5e] sm:$0x3] %vm856, %v743
      %873 = vst.msk [vmem:[#allocation3 + $0x5e] sm:$0xfc] %vm852, %v745
      %874 = vst.msk [vmem:[#allocation3 + $0x66] sm:$0xff] %vm854, %v747
      %875 = vst.msk [vmem:[#allocation3 + $0x6e] sm:$0x3] %vm856, %v749
      %876 = vst.msk [vmem:[#allocation3 + $0x6e] sm:$0xfc] %vm852, %v751
      %877 = vst.msk [vmem:[#allocation3 + $0x76] sm:$0xff] %vm854, %v753
      %878 = vst.msk [vmem:[#allocation3 + $0x7e] sm:$0x3] %vm856, %v755
      %879 = vst.msk [vmem:[#allocation3 + $0x7e] sm:$0xfc] %vm852, %v757
      %880 = vst.msk [vmem:[#allocation3 + $0x86] sm:$0xff] %vm854, %v759
      %881 = vst.msk [vmem:[#allocation3 + $0x8e] sm:$0x3] %vm856, %v761
      %882 = vst.msk [vmem:[#allocation3 + $0x8e] sm:$0xfc] %vm852, %v763
      %883 = vst.msk [vmem:[#allocation3 + $0x96] sm:$0xff] %vm854, %v765
      %884 = vst.msk [vmem:[#allocation3 + $0x9e] sm:$0x3] %vm856, %v767
      %885 = vst.msk [vmem:[#allocation3 + $0x9e] sm:$0xfc] %vm852, %v769
      %886 = vst.msk [vmem:[#allocation3 + $0xa6] sm:$0xff] %vm854, %v771
      %887 = vst.msk [vmem:[#allocation3 + $0xae] sm:$0x3] %vm856, %v773
      %888 = vst.msk [vmem:[#allocation3 + $0xae] sm:$0xfc] %vm852, %v775
      %889 = vst.msk [vmem:[#allocation3 + $0xb6] sm:$0xff] %vm854, %v777
      %890 = vst.msk [vmem:[#allocation3 + $0xbe] sm:$0x3] %vm856, %v779
      %891 = vst.msk [vmem:[#allocation3 + $0xbe] sm:$0xfc] %vm852, %v781
      %892 = vst.msk [vmem:[#allocation3 + $0xc6] sm:$0xff] %vm854, %v783
      %893 = vst.msk [vmem:[#allocation3 + $0xce] sm:$0x3] %vm856, %v785
      %894 = vst.msk [vmem:[#allocation3 + $0xce] sm:$0xfc] %vm852, %v787
      %895 = vst.msk [vmem:[#allocation3 + $0xd6] sm:$0xff] %vm854, %v789
      %896 = vst.msk [vmem:[#allocation3 + $0xde] sm:$0x3] %vm856, %v791
      %897 = vst.msk [vmem:[#allocation3 + $0xde] sm:$0xfc] %vm852, %v793
      %898 = vst.msk [vmem:[#allocation3 + $0xe6] sm:$0xff] %vm854, %v795
      %899 = vst.msk [vmem:[#allocation3 + $0xee] sm:$0x3] %vm856, %v797
      %900 = vst.msk [vmem:[#allocation3 + $0xee] sm:$0xfc] %vm852, %v799
      %901 = vst.msk [vmem:[#allocation3 + $0xf6] sm:$0xff] %vm854, %v801
      %902 = vst.msk [vmem:[#allocation3 + $0xfe] sm:$0x3] %vm856, %v803
      %905 = vrot.lane.b32.xlu0 %v382, 24
      %v906 = vpop.permute.xlu0 %905
      %907 = vrot.lane.b32.xlu0 %v383, 24
      %v908 = vpop.permute.xlu0 %907
      %909 = vrot.lane.b32.xlu0 %v385, 24
      %v910 = vpop.permute.xlu0 %909
      %911 = vrot.lane.b32.xlu0 %v386, 24
      %v912 = vpop.permute.xlu0 %911
      %913 = vrot.lane.b32.xlu0 %v388, 24
      %v914 = vpop.permute.xlu0 %913
      %915 = vrot.lane.b32.xlu0 %v389, 24
      %v916 = vpop.permute.xlu0 %915
      %917 = vrot.lane.b32.xlu0 %v391, 24
      %v918 = vpop.permute.xlu0 %917
      %919 = vrot.lane.b32.xlu0 %v392, 24
      %v920 = vpop.permute.xlu0 %919
      %921 = vrot.lane.b32.xlu0 %v394, 24
      %v922 = vpop.permute.xlu0 %921
      %923 = vrot.lane.b32.xlu0 %v395, 24
      %v924 = vpop.permute.xlu0 %923
      %925 = vrot.lane.b32.xlu0 %v397, 24
      %v926 = vpop.permute.xlu0 %925
      %927 = vrot.lane.b32.xlu0 %v398, 24
      %v928 = vpop.permute.xlu0 %927
      %929 = vrot.lane.b32.xlu0 %v400, 24
      %v930 = vpop.permute.xlu0 %929
      %931 = vrot.lane.b32.xlu0 %v401, 24
      %v932 = vpop.permute.xlu0 %931
      %933 = vrot.lane.b32.xlu0 %v403, 24
      %v934 = vpop.permute.xlu0 %933
      %935 = vrot.lane.b32.xlu0 %v404, 24
      %v936 = vpop.permute.xlu0 %935
      %937 = vrot.lane.b32.xlu0 %v406, 24
      %v938 = vpop.permute.xlu0 %937
      %939 = vrot.lane.b32.xlu0 %v407, 24
      %v940 = vpop.permute.xlu0 %939
      %941 = vrot.lane.b32.xlu0 %v409, 24
      %v942 = vpop.permute.xlu0 %941
      %943 = vrot.lane.b32.xlu0 %v410, 24
      %v944 = vpop.permute.xlu0 %943
      %945 = vrot.lane.b32.xlu0 %v412, 24
      %v946 = vpop.permute.xlu0 %945
      %947 = vrot.lane.b32.xlu0 %v413, 24
      %v948 = vpop.permute.xlu0 %947
      %949 = vrot.lane.b32.xlu0 %v415, 24
      %v950 = vpop.permute.xlu0 %949
      %951 = vrot.lane.b32.xlu0 %v416, 24
      %v952 = vpop.permute.xlu0 %951
      %953 = vrot.lane.b32.xlu0 %v418, 24
      %v954 = vpop.permute.xlu0 %953
      %955 = vrot.lane.b32.xlu0 %v419, 24
      %v956 = vpop.permute.xlu0 %955
      %957 = vrot.lane.b32.xlu0 %v421, 24
      %v958 = vpop.permute.xlu0 %957
      %959 = vrot.lane.b32.xlu0 %v422, 24
      %v960 = vpop.permute.xlu0 %959
      %961 = vrot.lane.b32.xlu0 %v424, 24
      %v962 = vpop.permute.xlu0 %961
      %963 = vrot.lane.b32.xlu0 %v425, 24
      %v964 = vpop.permute.xlu0 %963
      %965 = vrot.lane.b32.xlu0 %v427, 24
      %v966 = vpop.permute.xlu0 %965
      %967 = vrot.lane.b32.xlu0 %v428, 24
      %v968 = vpop.permute.xlu0 %967
      %vm1001 = vcmask 261312
      %1002 = vst.msk [vmem:[#allocation3] sm:$0xff] %vm1001, %v906
      %1003 = vst.msk [vmem:[#allocation3 + $0x8] sm:$0xff] %vm1001, %v908
      %1004 = vst.msk [vmem:[#allocation3 + $0x10] sm:$0xff] %vm1001, %v910
      %1005 = vst.msk [vmem:[#allocation3 + $0x18] sm:$0xff] %vm1001, %v912
      %1006 = vst.msk [vmem:[#allocation3 + $0x20] sm:$0xff] %vm1001, %v914
      %1007 = vst.msk [vmem:[#allocation3 + $0x28] sm:$0xff] %vm1001, %v916
      %1008 = vst.msk [vmem:[#allocation3 + $0x30] sm:$0xff] %vm1001, %v918
      %1009 = vst.msk [vmem:[#allocation3 + $0x38] sm:$0xff] %vm1001, %v920
      %1010 = vst.msk [vmem:[#allocation3 + $0x40] sm:$0xff] %vm1001, %v922
      %1011 = vst.msk [vmem:[#allocation3 + $0x48] sm:$0xff] %vm1001, %v924
      %1012 = vst.msk [vmem:[#allocation3 + $0x50] sm:$0xff] %vm1001, %v926
      %1013 = vst.msk [vmem:[#allocation3 + $0x58] sm:$0xff] %vm1001, %v928
      %1014 = vst.msk [vmem:[#allocation3 + $0x60] sm:$0xff] %vm1001, %v930
      %1015 = vst.msk [vmem:[#allocation3 + $0x68] sm:$0xff] %vm1001, %v932
      %1016 = vst.msk [vmem:[#allocation3 + $0x70] sm:$0xff] %vm1001, %v934
      %1017 = vst.msk [vmem:[#allocation3 + $0x78] sm:$0xff] %vm1001, %v936
      %1018 = vst.msk [vmem:[#allocation3 + $0x80] sm:$0xff] %vm1001, %v938
      %1019 = vst.msk [vmem:[#allocation3 + $0x88] sm:$0xff] %vm1001, %v940
      %1020 = vst.msk [vmem:[#allocation3 + $0x90] sm:$0xff] %vm1001, %v942
      %1021 = vst.msk [vmem:[#allocation3 + $0x98] sm:$0xff] %vm1001, %v944
      %1022 = vst.msk [vmem:[#allocation3 + $0xa0] sm:$0xff] %vm1001, %v946
      %1023 = vst.msk [vmem:[#allocation3 + $0xa8] sm:$0xff] %vm1001, %v948
      %1024 = vst.msk [vmem:[#allocation3 + $0xb0] sm:$0xff] %vm1001, %v950
      %1025 = vst.msk [vmem:[#allocation3 + $0xb8] sm:$0xff] %vm1001, %v952
      %1026 = vst.msk [vmem:[#allocation3 + $0xc0] sm:$0xff] %vm1001, %v954
      %1027 = vst.msk [vmem:[#allocation3 + $0xc8] sm:$0xff] %vm1001, %v956
      %1028 = vst.msk [vmem:[#allocation3 + $0xd0] sm:$0xff] %vm1001, %v958
      %1029 = vst.msk [vmem:[#allocation3 + $0xd8] sm:$0xff] %vm1001, %v960
      %1030 = vst.msk [vmem:[#allocation3 + $0xe0] sm:$0xff] %vm1001, %v962
      %1031 = vst.msk [vmem:[#allocation3 + $0xe8] sm:$0xff] %vm1001, %v964
      %1032 = vst.msk [vmem:[#allocation3 + $0xf0] sm:$0xff] %vm1001, %v966
      %1033 = vst.msk [vmem:[#allocation3 + $0xf8] sm:$0xff] %vm1001, %v968
      %1035 = vrot.lane.b32.xlu0 %v382, 32
      %v1036 = vpop.permute.xlu0 %1035
      %1037 = vrot.lane.b32.xlu0 %v383, 32
      %v1038 = vpop.permute.xlu0 %1037
      %1039 = vrot.lane.b32.xlu0 %v384, 32
      %v1040 = vpop.permute.xlu0 %1039
      %1041 = vrot.lane.b32.xlu0 %v385, 32
      %v1042 = vpop.permute.xlu0 %1041
      %1043 = vrot.lane.b32.xlu0 %v386, 32
      %v1044 = vpop.permute.xlu0 %1043
      %1045 = vrot.lane.b32.xlu0 %v387, 32
      %v1046 = vpop.permute.xlu0 %1045
      %1047 = vrot.lane.b32.xlu0 %v388, 32
      %v1048 = vpop.permute.xlu0 %1047
      %1049 = vrot.lane.b32.xlu0 %v389, 32
      %v1050 = vpop.permute.xlu0 %1049
      %1051 = vrot.lane.b32.xlu0 %v390, 32
      %v1052 = vpop.permute.xlu0 %1051
      %1053 = vrot.lane.b32.xlu0 %v391, 32
      %v1054 = vpop.permute.xlu0 %1053
      %1055 = vrot.lane.b32.xlu0 %v392, 32
      %v1056 = vpop.permute.xlu0 %1055
      %1057 = vrot.lane.b32.xlu0 %v393, 32
      %v1058 = vpop.permute.xlu0 %1057
      %1059 = vrot.lane.b32.xlu0 %v394, 32
      %v1060 = vpop.permute.xlu0 %1059
      %1061 = vrot.lane.b32.xlu0 %v395, 32
      %v1062 = vpop.permute.xlu0 %1061
      %1063 = vrot.lane.b32.xlu0 %v396, 32
      %v1064 = vpop.permute.xlu0 %1063
      %1065 = vrot.lane.b32.xlu0 %v397, 32
      %v1066 = vpop.permute.xlu0 %1065
      %1067 = vrot.lane.b32.xlu0 %v398, 32
      %v1068 = vpop.permute.xlu0 %1067
      %1069 = vrot.lane.b32.xlu0 %v399, 32
      %v1070 = vpop.permute.xlu0 %1069
      %1071 = vrot.lane.b32.xlu0 %v400, 32
      %v1072 = vpop.permute.xlu0 %1071
      %1073 = vrot.lane.b32.xlu0 %v401, 32
      %v1074 = vpop.permute.xlu0 %1073
      %1075 = vrot.lane.b32.xlu0 %v402, 32
      %v1076 = vpop.permute.xlu0 %1075
      %1077 = vrot.lane.b32.xlu0 %v403, 32
      %v1078 = vpop.permute.xlu0 %1077
      %1079 = vrot.lane.b32.xlu0 %v404, 32
      %v1080 = vpop.permute.xlu0 %1079
      %1081 = vrot.lane.b32.xlu0 %v405, 32
      %v1082 = vpop.permute.xlu0 %1081
      %1083 = vrot.lane.b32.xlu0 %v406, 32
      %v1084 = vpop.permute.xlu0 %1083
      %1085 = vrot.lane.b32.xlu0 %v407, 32
      %v1086 = vpop.permute.xlu0 %1085
      %1087 = vrot.lane.b32.xlu0 %v408, 32
      %v1088 = vpop.permute.xlu0 %1087
      %1089 = vrot.lane.b32.xlu0 %v409, 32
      %v1090 = vpop.permute.xlu0 %1089
      %1091 = vrot.lane.b32.xlu0 %v410, 32
      %v1092 = vpop.permute.xlu0 %1091
      %1093 = vrot.lane.b32.xlu0 %v411, 32
      %v1094 = vpop.permute.xlu0 %1093
      %1095 = vrot.lane.b32.xlu0 %v412, 32
      %v1096 = vpop.permute.xlu0 %1095
      %1097 = vrot.lane.b32.xlu0 %v413, 32
      %v1098 = vpop.permute.xlu0 %1097
      %1099 = vrot.lane.b32.xlu0 %v414, 32
      %v1100 = vpop.permute.xlu0 %1099
      %1101 = vrot.lane.b32.xlu0 %v415, 32
      %v1102 = vpop.permute.xlu0 %1101
      %1103 = vrot.lane.b32.xlu0 %v416, 32
      %v1104 = vpop.permute.xlu0 %1103
      %1105 = vrot.lane.b32.xlu0 %v417, 32
      %v1106 = vpop.permute.xlu0 %1105
      %1107 = vrot.lane.b32.xlu0 %v418, 32
      %v1108 = vpop.permute.xlu0 %1107
      %1109 = vrot.lane.b32.xlu0 %v419, 32
      %v1110 = vpop.permute.xlu0 %1109
      %1111 = vrot.lane.b32.xlu0 %v420, 32
      %v1112 = vpop.permute.xlu0 %1111
      %1113 = vrot.lane.b32.xlu0 %v421, 32
      %v1114 = vpop.permute.xlu0 %1113
      %1115 = vrot.lane.b32.xlu0 %v422, 32
      %v1116 = vpop.permute.xlu0 %1115
      %1117 = vrot.lane.b32.xlu0 %v423, 32
      %v1118 = vpop.permute.xlu0 %1117
      %1119 = vrot.lane.b32.xlu0 %v424, 32
      %v1120 = vpop.permute.xlu0 %1119
      %1121 = vrot.lane.b32.xlu0 %v425, 32
      %v1122 = vpop.permute.xlu0 %1121
      %1123 = vrot.lane.b32.xlu0 %v426, 32
      %v1124 = vpop.permute.xlu0 %1123
      %1125 = vrot.lane.b32.xlu0 %v427, 32
      %v1126 = vpop.permute.xlu0 %1125
      %1127 = vrot.lane.b32.xlu0 %v428, 32
      %v1128 = vpop.permute.xlu0 %1127
      %1129 = vrot.lane.b32.xlu0 %v429, 32
      %v1130 = vpop.permute.xlu0 %1129
      %vm1179 = vcmask 326913
      %1180 = vst.msk [vmem:[#allocation3 - $0x1] sm:$0xfe] %vm1179, %v1036
      %vm1181 = vcmask 326912
      %1182 = vst.msk [vmem:[#allocation3 + $0x7] sm:$0xff] %vm1181, %v1038
      %vm1183 = vcmask 319744
      %1184 = vst.msk [vmem:[#allocation3 + $0xf] sm:$0x1] %vm1183, %v1040
      %1185 = vst.msk [vmem:[#allocation3 + $0xf] sm:$0xfe] %vm1179, %v1042
      %1186 = vst.msk [vmem:[#allocation3 + $0x17] sm:$0xff] %vm1181, %v1044
      %1187 = vst.msk [vmem:[#allocation3 + $0x1f] sm:$0x1] %vm1183, %v1046
      %1188 = vst.msk [vmem:[#allocation3 + $0x1f] sm:$0xfe] %vm1179, %v1048
      %1189 = vst.msk [vmem:[#allocation3 + $0x27] sm:$0xff] %vm1181, %v1050
      %1190 = vst.msk [vmem:[#allocation3 + $0x2f] sm:$0x1] %vm1183, %v1052
      %1191 = vst.msk [vmem:[#allocation3 + $0x2f] sm:$0xfe] %vm1179, %v1054
      %1192 = vst.msk [vmem:[#allocation3 + $0x37] sm:$0xff] %vm1181, %v1056
      %1193 = vst.msk [vmem:[#allocation3 + $0x3f] sm:$0x1] %vm1183, %v1058
      %1194 = vst.msk [vmem:[#allocation3 + $0x3f] sm:$0xfe] %vm1179, %v1060
      %1195 = vst.msk [vmem:[#allocation3 + $0x47] sm:$0xff] %vm1181, %v1062
      %1196 = vst.msk [vmem:[#allocation3 + $0x4f] sm:$0x1] %vm1183, %v1064
      %1197 = vst.msk [vmem:[#allocation3 + $0x4f] sm:$0xfe] %vm1179, %v1066
      %1198 = vst.msk [vmem:[#allocation3 + $0x57] sm:$0xff] %vm1181, %v1068
      %1199 = vst.msk [vmem:[#allocation3 + $0x5f] sm:$0x1] %vm1183, %v1070
      %1200 = vst.msk [vmem:[#allocation3 + $0x5f] sm:$0xfe] %vm1179, %v1072
      %1201 = vst.msk [vmem:[#allocation3 + $0x67] sm:$0xff] %vm1181, %v1074
      %1202 = vst.msk [vmem:[#allocation3 + $0x6f] sm:$0x1] %vm1183, %v1076
      %1203 = vst.msk [vmem:[#allocation3 + $0x6f] sm:$0xfe] %vm1179, %v1078
      %1204 = vst.msk [vmem:[#allocation3 + $0x77] sm:$0xff] %vm1181, %v1080
      %1205 = vst.msk [vmem:[#allocation3 + $0x7f] sm:$0x1] %vm1183, %v1082
      %1206 = vst.msk [vmem:[#allocation3 + $0x7f] sm:$0xfe] %vm1179, %v1084
      %1207 = vst.msk [vmem:[#allocation3 + $0x87] sm:$0xff] %vm1181, %v1086
      %1208 = vst.msk [vmem:[#allocation3 + $0x8f] sm:$0x1] %vm1183, %v1088
      %1209 = vst.msk [vmem:[#allocation3 + $0x8f] sm:$0xfe] %vm1179, %v1090
      %1210 = vst.msk [vmem:[#allocation3 + $0x97] sm:$0xff] %vm1181, %v1092
      %1211 = vst.msk [vmem:[#allocation3 + $0x9f] sm:$0x1] %vm1183, %v1094
      %1212 = vst.msk [vmem:[#allocation3 + $0x9f] sm:$0xfe] %vm1179, %v1096
      %1213 = vst.msk [vmem:[#allocation3 + $0xa7] sm:$0xff] %vm1181, %v1098
      %1214 = vst.msk [vmem:[#allocation3 + $0xaf] sm:$0x1] %vm1183, %v1100
      %1215 = vst.msk [vmem:[#allocation3 + $0xaf] sm:$0xfe] %vm1179, %v1102
      %1216 = vst.msk [vmem:[#allocation3 + $0xb7] sm:$0xff] %vm1181, %v1104
      %1217 = vst.msk [vmem:[#allocation3 + $0xbf] sm:$0x1] %vm1183, %v1106
      %1218 = vst.msk [vmem:[#allocation3 + $0xbf] sm:$0xfe] %vm1179, %v1108
      %1219 = vst.msk [vmem:[#allocation3 + $0xc7] sm:$0xff] %vm1181, %v1110
      %1220 = vst.msk [vmem:[#allocation3 + $0xcf] sm:$0x1] %vm1183, %v1112
      %1221 = vst.msk [vmem:[#allocation3 + $0xcf] sm:$0xfe] %vm1179, %v1114
      %1222 = vst.msk [vmem:[#allocation3 + $0xd7] sm:$0xff] %vm1181, %v1116
      %1223 = vst.msk [vmem:[#allocation3 + $0xdf] sm:$0x1] %vm1183, %v1118
      %1224 = vst.msk [vmem:[#allocation3 + $0xdf] sm:$0xfe] %vm1179, %v1120
      %1225 = vst.msk [vmem:[#allocation3 + $0xe7] sm:$0xff] %vm1181, %v1122
      %1226 = vst.msk [vmem:[#allocation3 + $0xef] sm:$0x1] %vm1183, %v1124
      %1227 = vst.msk [vmem:[#allocation3 + $0xef] sm:$0xfe] %vm1179, %v1126
      %1228 = vst.msk [vmem:[#allocation3 + $0xf7] sm:$0xff] %vm1181, %v1128
      %1229 = vst.msk [vmem:[#allocation3 + $0xff] sm:$0x1] %vm1183, %v1130
      %1230 = vrot.lane.b32.xlu0 %v382, 40
      %v1231 = vpop.permute.xlu0 %1230
      %1232 = vrot.lane.b32.xlu0 %v383, 40
      %v1233 = vpop.permute.xlu0 %1232
      %1234 = vrot.lane.b32.xlu0 %v384, 40
      %v1235 = vpop.permute.xlu0 %1234
      %1236 = vrot.lane.b32.xlu0 %v385, 40
      %v1237 = vpop.permute.xlu0 %1236
      %1238 = vrot.lane.b32.xlu0 %v386, 40
      %v1239 = vpop.permute.xlu0 %1238
      %1240 = vrot.lane.b32.xlu0 %v387, 40
      %v1241 = vpop.permute.xlu0 %1240
      %1242 = vrot.lane.b32.xlu0 %v388, 40
      %v1243 = vpop.permute.xlu0 %1242
      %1244 = vrot.lane.b32.xlu0 %v389, 40
      %v1245 = vpop.permute.xlu0 %1244
      %1246 = vrot.lane.b32.xlu0 %v390, 40
      %v1247 = vpop.permute.xlu0 %1246
      %1248 = vrot.lane.b32.xlu0 %v391, 40
      %v1249 = vpop.permute.xlu0 %1248
      %1250 = vrot.lane.b32.xlu0 %v392, 40
      %v1251 = vpop.permute.xlu0 %1250
      %1252 = vrot.lane.b32.xlu0 %v393, 40
      %v1253 = vpop.permute.xlu0 %1252
      %1254 = vrot.lane.b32.xlu0 %v394, 40
      %v1255 = vpop.permute.xlu0 %1254
      %1256 = vrot.lane.b32.xlu0 %v395, 40
      %v1257 = vpop.permute.xlu0 %1256
      %1258 = vrot.lane.b32.xlu0 %v396, 40
      %v1259 = vpop.permute.xlu0 %1258
      %1260 = vrot.lane.b32.xlu0 %v397, 40
      %v1261 = vpop.permute.xlu0 %1260
      %1262 = vrot.lane.b32.xlu0 %v398, 40
      %v1263 = vpop.permute.xlu0 %1262
      %1264 = vrot.lane.b32.xlu0 %v399, 40
      %v1265 = vpop.permute.xlu0 %1264
      %1266 = vrot.lane.b32.xlu0 %v400, 40
      %v1267 = vpop.permute.xlu0 %1266
      %1268 = vrot.lane.b32.xlu0 %v401, 40
      %v1269 = vpop.permute.xlu0 %1268
      %1270 = vrot.lane.b32.xlu0 %v402, 40
      %v1271 = vpop.permute.xlu0 %1270
      %1272 = vrot.lane.b32.xlu0 %v403, 40
      %v1273 = vpop.permute.xlu0 %1272
      %1274 = vrot.lane.b32.xlu0 %v404, 40
      %v1275 = vpop.permute.xlu0 %1274
      %1276 = vrot.lane.b32.xlu0 %v405, 40
      %v1277 = vpop.permute.xlu0 %1276
      %1278 = vrot.lane.b32.xlu0 %v406, 40
      %v1279 = vpop.permute.xlu0 %1278
      %1280 = vrot.lane.b32.xlu0 %v407, 40
      %v1281 = vpop.permute.xlu0 %1280
      %1282 = vrot.lane.b32.xlu0 %v408, 40
      %v1283 = vpop.permute.xlu0 %1282
      %1284 = vrot.lane.b32.xlu0 %v409, 40
      %v1285 = vpop.permute.xlu0 %1284
      %1286 = vrot.lane.b32.xlu0 %v410, 40
      %v1287 = vpop.permute.xlu0 %1286
      %1288 = vrot.lane.b32.xlu0 %v411, 40
      %v1289 = vpop.permute.xlu0 %1288
      %1290 = vrot.lane.b32.xlu0 %v412, 40
      %v1291 = vpop.permute.xlu0 %1290
      %1292 = vrot.lane.b32.xlu0 %v413, 40
      %v1293 = vpop.permute.xlu0 %1292
      %1294 = vrot.lane.b32.xlu0 %v414, 40
      %v1295 = vpop.permute.xlu0 %1294
      %1296 = vrot.lane.b32.xlu0 %v415, 40
      %v1297 = vpop.permute.xlu0 %1296
      %1298 = vrot.lane.b32.xlu0 %v416, 40
      %v1299 = vpop.permute.xlu0 %1298
      %1300 = vrot.lane.b32.xlu0 %v417, 40
      %v1301 = vpop.permute.xlu0 %1300
      %1302 = vrot.lane.b32.xlu0 %v418, 40
      %v1303 = vpop.permute.xlu0 %1302
      %1304 = vrot.lane.b32.xlu0 %v419, 40
      %v1305 = vpop.permute.xlu0 %1304
      %1306 = vrot.lane.b32.xlu0 %v420, 40
      %v1307 = vpop.permute.xlu0 %1306
      %1308 = vrot.lane.b32.xlu0 %v421, 40
      %v1309 = vpop.permute.xlu0 %1308
      %1310 = vrot.lane.b32.xlu0 %v422, 40
      %v1311 = vpop.permute.xlu0 %1310
      %1312 = vrot.lane.b32.xlu0 %v423, 40
      %v1313 = vpop.permute.xlu0 %1312
      %1314 = vrot.lane.b32.xlu0 %v424, 40
      %v1315 = vpop.permute.xlu0 %1314
      %1316 = vrot.lane.b32.xlu0 %v425, 40
      %v1317 = vpop.permute.xlu0 %1316
      %1318 = vrot.lane.b32.xlu0 %v426, 40
      %v1319 = vpop.permute.xlu0 %1318
      %1320 = vrot.lane.b32.xlu0 %v427, 40
      %v1321 = vpop.permute.xlu0 %1320
      %1322 = vrot.lane.b32.xlu0 %v428, 40
      %v1323 = vpop.permute.xlu0 %1322
      %1324 = vrot.lane.b32.xlu0 %v429, 40
      %v1325 = vpop.permute.xlu0 %1324
      %vm1374 = vcmask 392514
      %1375 = vst.msk [vmem:[#allocation3 - $0x2] sm:$0xfc] %vm1374, %v1231
      %vm1376 = vcmask 392512
      %1377 = vst.msk [vmem:[#allocation3 + $0x6] sm:$0xff] %vm1376, %v1233
      %vm1378 = vcmask 386368
      %1379 = vst.msk [vmem:[#allocation3 + $0xe] sm:$0x3] %vm1378, %v1235
      %1380 = vst.msk [vmem:[#allocation3 + $0xe] sm:$0xfc] %vm1374, %v1237
      %1381 = vst.msk [vmem:[#allocation3 + $0x16] sm:$0xff] %vm1376, %v1239
      %1382 = vst.msk [vmem:[#allocation3 + $0x1e] sm:$0x3] %vm1378, %v1241
      %1383 = vst.msk [vmem:[#allocation3 + $0x1e] sm:$0xfc] %vm1374, %v1243
      %1384 = vst.msk [vmem:[#allocation3 + $0x26] sm:$0xff] %vm1376, %v1245
      %1385 = vst.msk [vmem:[#allocation3 + $0x2e] sm:$0x3] %vm1378, %v1247
      %1386 = vst.msk [vmem:[#allocation3 + $0x2e] sm:$0xfc] %vm1374, %v1249
      %1387 = vst.msk [vmem:[#allocation3 + $0x36] sm:$0xff] %vm1376, %v1251
      %1388 = vst.msk [vmem:[#allocation3 + $0x3e] sm:$0x3] %vm1378, %v1253
      %1389 = vst.msk [vmem:[#allocation3 + $0x3e] sm:$0xfc] %vm1374, %v1255
      %1390 = vst.msk [vmem:[#allocation3 + $0x46] sm:$0xff] %vm1376, %v1257
      %1391 = vst.msk [vmem:[#allocation3 + $0x4e] sm:$0x3] %vm1378, %v1259
      %1392 = vst.msk [vmem:[#allocation3 + $0x4e] sm:$0xfc] %vm1374, %v1261
      %1393 = vst.msk [vmem:[#allocation3 + $0x56] sm:$0xff] %vm1376, %v1263
      %1394 = vst.msk [vmem:[#allocation3 + $0x5e] sm:$0x3] %vm1378, %v1265
      %1395 = vst.msk [vmem:[#allocation3 + $0x5e] sm:$0xfc] %vm1374, %v1267
      %1396 = vst.msk [vmem:[#allocation3 + $0x66] sm:$0xff] %vm1376, %v1269
      %1397 = vst.msk [vmem:[#allocation3 + $0x6e] sm:$0x3] %vm1378, %v1271
      %1398 = vst.msk [vmem:[#allocation3 + $0x6e] sm:$0xfc] %vm1374, %v1273
      %1399 = vst.msk [vmem:[#allocation3 + $0x76] sm:$0xff] %vm1376, %v1275
      %1400 = vst.msk [vmem:[#allocation3 + $0x7e] sm:$0x3] %vm1378, %v1277
      %1401 = vst.msk [vmem:[#allocation3 + $0x7e] sm:$0xfc] %vm1374, %v1279
      %1402 = vst.msk [vmem:[#allocation3 + $0x86] sm:$0xff] %vm1376, %v1281
      %1403 = vst.msk [vmem:[#allocation3 + $0x8e] sm:$0x3] %vm1378, %v1283
      %1404 = vst.msk [vmem:[#allocation3 + $0x8e] sm:$0xfc] %vm1374, %v1285
      %1405 = vst.msk [vmem:[#allocation3 + $0x96] sm:$0xff] %vm1376, %v1287
      %1406 = vst.msk [vmem:[#allocation3 + $0x9e] sm:$0x3] %vm1378, %v1289
      %1407 = vst.msk [vmem:[#allocation3 + $0x9e] sm:$0xfc] %vm1374, %v1291
      %1408 = vst.msk [vmem:[#allocation3 + $0xa6] sm:$0xff] %vm1376, %v1293
      %1409 = vst.msk [vmem:[#allocation3 + $0xae] sm:$0x3] %vm1378, %v1295
      %1410 = vst.msk [vmem:[#allocation3 + $0xae] sm:$0xfc] %vm1374, %v1297
      %1411 = vst.msk [vmem:[#allocation3 + $0xb6] sm:$0xff] %vm1376, %v1299
      %1412 = vst.msk [vmem:[#allocation3 + $0xbe] sm:$0x3] %vm1378, %v1301
      %1413 = vst.msk [vmem:[#allocation3 + $0xbe] sm:$0xfc] %vm1374, %v1303
      %1414 = vst.msk [vmem:[#allocation3 + $0xc6] sm:$0xff] %vm1376, %v1305
      %1415 = vst.msk [vmem:[#allocation3 + $0xce] sm:$0x3] %vm1378, %v1307
      %1416 = vst.msk [vmem:[#allocation3 + $0xce] sm:$0xfc] %vm1374, %v1309
      %1417 = vst.msk [vmem:[#allocation3 + $0xd6] sm:$0xff] %vm1376, %v1311
      %1418 = vst.msk [vmem:[#allocation3 + $0xde] sm:$0x3] %vm1378, %v1313
      %1419 = vst.msk [vmem:[#allocation3 + $0xde] sm:$0xfc] %vm1374, %v1315
      %1420 = vst.msk [vmem:[#allocation3 + $0xe6] sm:$0xff] %vm1376, %v1317
      %1421 = vst.msk [vmem:[#allocation3 + $0xee] sm:$0x3] %vm1378, %v1319
      %1422 = vst.msk [vmem:[#allocation3 + $0xee] sm:$0xfc] %vm1374, %v1321
      %1423 = vst.msk [vmem:[#allocation3 + $0xf6] sm:$0xff] %vm1376, %v1323
      %1424 = vst.msk [vmem:[#allocation3 + $0xfe] sm:$0x3] %vm1378, %v1325
      %1427 = vrot.lane.b32.xlu0 %v385, 48
      %v1428 = vpop.permute.xlu0 %1427
      %1429 = vrot.lane.b32.xlu0 %v386, 48
      %v1430 = vpop.permute.xlu0 %1429
      %1431 = vrot.lane.b32.xlu0 %v388, 48
      %v1432 = vpop.permute.xlu0 %1431
      %1433 = vrot.lane.b32.xlu0 %v389, 48
      %v1434 = vpop.permute.xlu0 %1433
      %1435 = vrot.lane.b32.xlu0 %v391, 48
      %v1436 = vpop.permute.xlu0 %1435
      %1437 = vrot.lane.b32.xlu0 %v392, 48
      %v1438 = vpop.permute.xlu0 %1437
      %1439 = vrot.lane.b32.xlu0 %v394, 48
      %v1440 = vpop.permute.xlu0 %1439
      %1441 = vrot.lane.b32.xlu0 %v395, 48
      %v1442 = vpop.permute.xlu0 %1441
      %1443 = vrot.lane.b32.xlu0 %v397, 48
      %v1444 = vpop.permute.xlu0 %1443
      %1445 = vrot.lane.b32.xlu0 %v398, 48
      %v1446 = vpop.permute.xlu0 %1445
      %1447 = vrot.lane.b32.xlu0 %v400, 48
      %v1448 = vpop.permute.xlu0 %1447
      %1449 = vrot.lane.b32.xlu0 %v401, 48
      %v1450 = vpop.permute.xlu0 %1449
      %1451 = vrot.lane.b32.xlu0 %v403, 48
      %v1452 = vpop.permute.xlu0 %1451
      %1453 = vrot.lane.b32.xlu0 %v404, 48
      %v1454 = vpop.permute.xlu0 %1453
      %1455 = vrot.lane.b32.xlu0 %v406, 48
      %v1456 = vpop.permute.xlu0 %1455
      %1457 = vrot.lane.b32.xlu0 %v407, 48
      %v1458 = vpop.permute.xlu0 %1457
      %1459 = vrot.lane.b32.xlu0 %v409, 48
      %v1460 = vpop.permute.xlu0 %1459
      %1461 = vrot.lane.b32.xlu0 %v410, 48
      %v1462 = vpop.permute.xlu0 %1461
      %1463 = vrot.lane.b32.xlu0 %v412, 48
      %v1464 = vpop.permute.xlu0 %1463
      %1465 = vrot.lane.b32.xlu0 %v413, 48
      %v1466 = vpop.permute.xlu0 %1465
      %1467 = vrot.lane.b32.xlu0 %v415, 48
      %v1468 = vpop.permute.xlu0 %1467
      %1469 = vrot.lane.b32.xlu0 %v416, 48
      %v1470 = vpop.permute.xlu0 %1469
      %1471 = vrot.lane.b32.xlu0 %v418, 48
      %v1472 = vpop.permute.xlu0 %1471
      %1473 = vrot.lane.b32.xlu0 %v419, 48
      %v1474 = vpop.permute.xlu0 %1473
      %1475 = vrot.lane.b32.xlu0 %v421, 48
      %v1476 = vpop.permute.xlu0 %1475
      %1477 = vrot.lane.b32.xlu0 %v422, 48
      %v1478 = vpop.permute.xlu0 %1477
      %1479 = vrot.lane.b32.xlu0 %v424, 48
      %v1480 = vpop.permute.xlu0 %1479
      %1481 = vrot.lane.b32.xlu0 %v425, 48
      %v1482 = vpop.permute.xlu0 %1481
      %1483 = vrot.lane.b32.xlu0 %v427, 48
      %v1484 = vpop.permute.xlu0 %1483
      %1485 = vrot.lane.b32.xlu0 %v428, 48
      %v1486 = vpop.permute.xlu0 %1485
      %1487 = vrot.lane.b32.xlu0 %v430, 48
      %v1488 = vpop.permute.xlu0 %1487
      %1489 = vrot.lane.b32.xlu0 %v431, 48
      %v1490 = vpop.permute.xlu0 %1489
      %vm1523 = vcmask 458112
      %1524 = vst.msk [vmem:[#allocation3] sm:$0xff] %vm1523, %v1428
      %1525 = vst.msk [vmem:[#allocation3 + $0x8] sm:$0xff] %vm1523, %v1430
      %1526 = vst.msk [vmem:[#allocation3 + $0x10] sm:$0xff] %vm1523, %v1432
      %1527 = vst.msk [vmem:[#allocation3 + $0x18] sm:$0xff] %vm1523, %v1434
      %1528 = vst.msk [vmem:[#allocation3 + $0x20] sm:$0xff] %vm1523, %v1436
      %1529 = vst.msk [vmem:[#allocation3 + $0x28] sm:$0xff] %vm1523, %v1438
      %1530 = vst.msk [vmem:[#allocation3 + $0x30] sm:$0xff] %vm1523, %v1440
      %1531 = vst.msk [vmem:[#allocation3 + $0x38] sm:$0xff] %vm1523, %v1442
      %1532 = vst.msk [vmem:[#allocation3 + $0x40] sm:$0xff] %vm1523, %v1444
      %1533 = vst.msk [vmem:[#allocation3 + $0x48] sm:$0xff] %vm1523, %v1446
      %1534 = vst.msk [vmem:[#allocation3 + $0x50] sm:$0xff] %vm1523, %v1448
      %1535 = vst.msk [vmem:[#allocation3 + $0x58] sm:$0xff] %vm1523, %v1450
      %1536 = vst.msk [vmem:[#allocation3 + $0x60] sm:$0xff] %vm1523, %v1452
      %1537 = vst.msk [vmem:[#allocation3 + $0x68] sm:$0xff] %vm1523, %v1454
      %1538 = vst.msk [vmem:[#allocation3 + $0x70] sm:$0xff] %vm1523, %v1456
      %1539 = vst.msk [vmem:[#allocation3 + $0x78] sm:$0xff] %vm1523, %v1458
      %1540 = vst.msk [vmem:[#allocation3 + $0x80] sm:$0xff] %vm1523, %v1460
      %1541 = vst.msk [vmem:[#allocation3 + $0x88] sm:$0xff] %vm1523, %v1462
      %1542 = vst.msk [vmem:[#allocation3 + $0x90] sm:$0xff] %vm1523, %v1464
      %1543 = vst.msk [vmem:[#allocation3 + $0x98] sm:$0xff] %vm1523, %v1466
      %1544 = vst.msk [vmem:[#allocation3 + $0xa0] sm:$0xff] %vm1523, %v1468
      %1545 = vst.msk [vmem:[#allocation3 + $0xa8] sm:$0xff] %vm1523, %v1470
      %1546 = vst.msk [vmem:[#allocation3 + $0xb0] sm:$0xff] %vm1523, %v1472
      %1547 = vst.msk [vmem:[#allocation3 + $0xb8] sm:$0xff] %vm1523, %v1474
      %1548 = vst.msk [vmem:[#allocation3 + $0xc0] sm:$0xff] %vm1523, %v1476
      %1549 = vst.msk [vmem:[#allocation3 + $0xc8] sm:$0xff] %vm1523, %v1478
      %1550 = vst.msk [vmem:[#allocation3 + $0xd0] sm:$0xff] %vm1523, %v1480
      %1551 = vst.msk [vmem:[#allocation3 + $0xd8] sm:$0xff] %vm1523, %v1482
      %1552 = vst.msk [vmem:[#allocation3 + $0xe0] sm:$0xff] %vm1523, %v1484
      %1553 = vst.msk [vmem:[#allocation3 + $0xe8] sm:$0xff] %vm1523, %v1486
      %1554 = vst.msk [vmem:[#allocation3 + $0xf0] sm:$0xff] %vm1523, %v1488
      %1555 = vst.msk [vmem:[#allocation3 + $0xf8] sm:$0xff] %vm1523, %v1490
      %1557 = vrot.lane.b32.xlu0 %v385, 56
      %v1558 = vpop.permute.xlu0 %1557
      %1559 = vrot.lane.b32.xlu0 %v386, 56
      %v1560 = vpop.permute.xlu0 %1559
      %1561 = vrot.lane.b32.xlu0 %v387, 56
      %v1562 = vpop.permute.xlu0 %1561
      %1563 = vrot.lane.b32.xlu0 %v388, 56
      %v1564 = vpop.permute.xlu0 %1563
      %1565 = vrot.lane.b32.xlu0 %v389, 56
      %v1566 = vpop.permute.xlu0 %1565
      %1567 = vrot.lane.b32.xlu0 %v390, 56
      %v1568 = vpop.permute.xlu0 %1567
      %1569 = vrot.lane.b32.xlu0 %v391, 56
      %v1570 = vpop.permute.xlu0 %1569
      %1571 = vrot.lane.b32.xlu0 %v392, 56
      %v1572 = vpop.permute.xlu0 %1571
      %1573 = vrot.lane.b32.xlu0 %v393, 56
      %v1574 = vpop.permute.xlu0 %1573
      %1575 = vrot.lane.b32.xlu0 %v394, 56
      %v1576 = vpop.permute.xlu0 %1575
      %1577 = vrot.lane.b32.xlu0 %v395, 56
      %v1578 = vpop.permute.xlu0 %1577
      %1579 = vrot.lane.b32.xlu0 %v396, 56
      %v1580 = vpop.permute.xlu0 %1579
      %1581 = vrot.lane.b32.xlu0 %v397, 56
      %v1582 = vpop.permute.xlu0 %1581
      %1583 = vrot.lane.b32.xlu0 %v398, 56
      %v1584 = vpop.permute.xlu0 %1583
      %1585 = vrot.lane.b32.xlu0 %v399, 56
      %v1586 = vpop.permute.xlu0 %1585
      %1587 = vrot.lane.b32.xlu0 %v400, 56
      %v1588 = vpop.permute.xlu0 %1587
      %1589 = vrot.lane.b32.xlu0 %v401, 56
      %v1590 = vpop.permute.xlu0 %1589
      %1591 = vrot.lane.b32.xlu0 %v402, 56
      %v1592 = vpop.permute.xlu0 %1591
      %1593 = vrot.lane.b32.xlu0 %v403, 56
      %v1594 = vpop.permute.xlu0 %1593
      %1595 = vrot.lane.b32.xlu0 %v404, 56
      %v1596 = vpop.permute.xlu0 %1595
      %1597 = vrot.lane.b32.xlu0 %v405, 56
      %v1598 = vpop.permute.xlu0 %1597
      %1599 = vrot.lane.b32.xlu0 %v406, 56
      %v1600 = vpop.permute.xlu0 %1599
      %1601 = vrot.lane.b32.xlu0 %v407, 56
      %v1602 = vpop.permute.xlu0 %1601
      %1603 = vrot.lane.b32.xlu0 %v408, 56
      %v1604 = vpop.permute.xlu0 %1603
      %1605 = vrot.lane.b32.xlu0 %v409, 56
      %v1606 = vpop.permute.xlu0 %1605
      %1607 = vrot.lane.b32.xlu0 %v410, 56
      %v1608 = vpop.permute.xlu0 %1607
      %1609 = vrot.lane.b32.xlu0 %v411, 56
      %v1610 = vpop.permute.xlu0 %1609
      %1611 = vrot.lane.b32.xlu0 %v412, 56
      %v1612 = vpop.permute.xlu0 %1611
      %1613 = vrot.lane.b32.xlu0 %v413, 56
      %v1614 = vpop.permute.xlu0 %1613
      %1615 = vrot.lane.b32.xlu0 %v414, 56
      %v1616 = vpop.permute.xlu0 %1615
      %1617 = vrot.lane.b32.xlu0 %v415, 56
      %v1618 = vpop.permute.xlu0 %1617
      %1619 = vrot.lane.b32.xlu0 %v416, 56
      %v1620 = vpop.permute.xlu0 %1619
      %1621 = vrot.lane.b32.xlu0 %v417, 56
      %v1622 = vpop.permute.xlu0 %1621
      %1623 = vrot.lane.b32.xlu0 %v418, 56
      %v1624 = vpop.permute.xlu0 %1623
      %1625 = vrot.lane.b32.xlu0 %v419, 56
      %v1626 = vpop.permute.xlu0 %1625
      %1627 = vrot.lane.b32.xlu0 %v420, 56
      %v1628 = vpop.permute.xlu0 %1627
      %1629 = vrot.lane.b32.xlu0 %v421, 56
      %v1630 = vpop.permute.xlu0 %1629
      %1631 = vrot.lane.b32.xlu0 %v422, 56
      %v1632 = vpop.permute.xlu0 %1631
      %1633 = vrot.lane.b32.xlu0 %v423, 56
      %v1634 = vpop.permute.xlu0 %1633
      %1635 = vrot.lane.b32.xlu0 %v424, 56
      %v1636 = vpop.permute.xlu0 %1635
      %1637 = vrot.lane.b32.xlu0 %v425, 56
      %v1638 = vpop.permute.xlu0 %1637
      %1639 = vrot.lane.b32.xlu0 %v426, 56
      %v1640 = vpop.permute.xlu0 %1639
      %1641 = vrot.lane.b32.xlu0 %v427, 56
      %v1642 = vpop.permute.xlu0 %1641
      %1643 = vrot.lane.b32.xlu0 %v428, 56
      %v1644 = vpop.permute.xlu0 %1643
      %1645 = vrot.lane.b32.xlu0 %v429, 56
      %v1646 = vpop.permute.xlu0 %1645
      %1647 = vrot.lane.b32.xlu0 %v430, 56
      %v1648 = vpop.permute.xlu0 %1647
      %1649 = vrot.lane.b32.xlu0 %v431, 56
      %v1650 = vpop.permute.xlu0 %1649
      %1651 = vrot.lane.b32.xlu0 %v432, 56
      %v1652 = vpop.permute.xlu0 %1651
      %vm1701 = vcmask 523713
      %1702 = vst.msk [vmem:[#allocation3 - $0x1] sm:$0xfe] %vm1701, %v1558
      %vm1703 = vcmask 523712
      %1704 = vst.msk [vmem:[#allocation3 + $0x7] sm:$0xff] %vm1703, %v1560
      %vm1705 = vcmask 516544
      %1706 = vst.msk [vmem:[#allocation3 + $0xf] sm:$0x1] %vm1705, %v1562
      %1707 = vst.msk [vmem:[#allocation3 + $0xf] sm:$0xfe] %vm1701, %v1564
      %1708 = vst.msk [vmem:[#allocation3 + $0x17] sm:$0xff] %vm1703, %v1566
      %1709 = vst.msk [vmem:[#allocation3 + $0x1f] sm:$0x1] %vm1705, %v1568
      %1710 = vst.msk [vmem:[#allocation3 + $0x1f] sm:$0xfe] %vm1701, %v1570
      %1711 = vst.msk [vmem:[#allocation3 + $0x27] sm:$0xff] %vm1703, %v1572
      %1712 = vst.msk [vmem:[#allocation3 + $0x2f] sm:$0x1] %vm1705, %v1574
      %1713 = vst.msk [vmem:[#allocation3 + $0x2f] sm:$0xfe] %vm1701, %v1576
      %1714 = vst.msk [vmem:[#allocation3 + $0x37] sm:$0xff] %vm1703, %v1578
      %1715 = vst.msk [vmem:[#allocation3 + $0x3f] sm:$0x1] %vm1705, %v1580
      %1716 = vst.msk [vmem:[#allocation3 + $0x3f] sm:$0xfe] %vm1701, %v1582
      %1717 = vst.msk [vmem:[#allocation3 + $0x47] sm:$0xff] %vm1703, %v1584
      %1718 = vst.msk [vmem:[#allocation3 + $0x4f] sm:$0x1] %vm1705, %v1586
      %1719 = vst.msk [vmem:[#allocation3 + $0x4f] sm:$0xfe] %vm1701, %v1588
      %1720 = vst.msk [vmem:[#allocation3 + $0x57] sm:$0xff] %vm1703, %v1590
      %1721 = vst.msk [vmem:[#allocation3 + $0x5f] sm:$0x1] %vm1705, %v1592
      %1722 = vst.msk [vmem:[#allocation3 + $0x5f] sm:$0xfe] %vm1701, %v1594
      %1723 = vst.msk [vmem:[#allocation3 + $0x67] sm:$0xff] %vm1703, %v1596
      %1724 = vst.msk [vmem:[#allocation3 + $0x6f] sm:$0x1] %vm1705, %v1598
      %1725 = vst.msk [vmem:[#allocation3 + $0x6f] sm:$0xfe] %vm1701, %v1600
      %1726 = vst.msk [vmem:[#allocation3 + $0x77] sm:$0xff] %vm1703, %v1602
      %1727 = vst.msk [vmem:[#allocation3 + $0x7f] sm:$0x1] %vm1705, %v1604
      %1728 = vst.msk [vmem:[#allocation3 + $0x7f] sm:$0xfe] %vm1701, %v1606
      %1729 = vst.msk [vmem:[#allocation3 + $0x87] sm:$0xff] %vm1703, %v1608
      %1730 = vst.msk [vmem:[#allocation3 + $0x8f] sm:$0x1] %vm1705, %v1610
      %1731 = vst.msk [vmem:[#allocation3 + $0x8f] sm:$0xfe] %vm1701, %v1612
      %1732 = vst.msk [vmem:[#allocation3 + $0x97] sm:$0xff] %vm1703, %v1614
      %1733 = vst.msk [vmem:[#allocation3 + $0x9f] sm:$0x1] %vm1705, %v1616
      %1734 = vst.msk [vmem:[#allocation3 + $0x9f] sm:$0xfe] %vm1701, %v1618
      %1735 = vst.msk [vmem:[#allocation3 + $0xa7] sm:$0xff] %vm1703, %v1620
      %1736 = vst.msk [vmem:[#allocation3 + $0xaf] sm:$0x1] %vm1705, %v1622
      %1737 = vst.msk [vmem:[#allocation3 + $0xaf] sm:$0xfe] %vm1701, %v1624
      %1738 = vst.msk [vmem:[#allocation3 + $0xb7] sm:$0xff] %vm1703, %v1626
      %1739 = vst.msk [vmem:[#allocation3 + $0xbf] sm:$0x1] %vm1705, %v1628
      %1740 = vst.msk [vmem:[#allocation3 + $0xbf] sm:$0xfe] %vm1701, %v1630
      %1741 = vst.msk [vmem:[#allocation3 + $0xc7] sm:$0xff] %vm1703, %v1632
      %1742 = vst.msk [vmem:[#allocation3 + $0xcf] sm:$0x1] %vm1705, %v1634
      %1743 = vst.msk [vmem:[#allocation3 + $0xcf] sm:$0xfe] %vm1701, %v1636
      %1744 = vst.msk [vmem:[#allocation3 + $0xd7] sm:$0xff] %vm1703, %v1638
      %1745 = vst.msk [vmem:[#allocation3 + $0xdf] sm:$0x1] %vm1705, %v1640
      %1746 = vst.msk [vmem:[#allocation3 + $0xdf] sm:$0xfe] %vm1701, %v1642
      %1747 = vst.msk [vmem:[#allocation3 + $0xe7] sm:$0xff] %vm1703, %v1644
      %1748 = vst.msk [vmem:[#allocation3 + $0xef] sm:$0x1] %vm1705, %v1646
      %1749 = vst.msk [vmem:[#allocation3 + $0xef] sm:$0xfe] %vm1701, %v1648
      %1750 = vst.msk [vmem:[#allocation3 + $0xf7] sm:$0xff] %vm1703, %v1650
      %1751 = vst.msk [vmem:[#allocation3 + $0xff] sm:$0x1] %vm1705, %v1652
      %1752 = vrot.lane.b32.xlu0 %v385, 64
      %v1753 = vpop.permute.xlu0 %1752
      %1754 = vrot.lane.b32.xlu0 %v386, 64
      %v1755 = vpop.permute.xlu0 %1754
      %1756 = vrot.lane.b32.xlu0 %v387, 64
      %v1757 = vpop.permute.xlu0 %1756
      %1758 = vrot.lane.b32.xlu0 %v388, 64
      %v1759 = vpop.permute.xlu0 %1758
      %1760 = vrot.lane.b32.xlu0 %v389, 64
      %v1761 = vpop.permute.xlu0 %1760
      %1762 = vrot.lane.b32.xlu0 %v390, 64
      %v1763 = vpop.permute.xlu0 %1762
      %1764 = vrot.lane.b32.xlu0 %v391, 64
      %v1765 = vpop.permute.xlu0 %1764
      %1766 = vrot.lane.b32.xlu0 %v392, 64
      %v1767 = vpop.permute.xlu0 %1766
      %1768 = vrot.lane.b32.xlu0 %v393, 64
      %v1769 = vpop.permute.xlu0 %1768
      %1770 = vrot.lane.b32.xlu0 %v394, 64
      %v1771 = vpop.permute.xlu0 %1770
      %1772 = vrot.lane.b32.xlu0 %v395, 64
      %v1773 = vpop.permute.xlu0 %1772
      %1774 = vrot.lane.b32.xlu0 %v396, 64
      %v1775 = vpop.permute.xlu0 %1774
      %1776 = vrot.lane.b32.xlu0 %v397, 64
      %v1777 = vpop.permute.xlu0 %1776
      %1778 = vrot.lane.b32.xlu0 %v398, 64
      %v1779 = vpop.permute.xlu0 %1778
      %1780 = vrot.lane.b32.xlu0 %v399, 64
      %v1781 = vpop.permute.xlu0 %1780
      %1782 = vrot.lane.b32.xlu0 %v400, 64
      %v1783 = vpop.permute.xlu0 %1782
      %1784 = vrot.lane.b32.xlu0 %v401, 64
      %v1785 = vpop.permute.xlu0 %1784
      %1786 = vrot.lane.b32.xlu0 %v402, 64
      %v1787 = vpop.permute.xlu0 %1786
      %1788 = vrot.lane.b32.xlu0 %v403, 64
      %v1789 = vpop.permute.xlu0 %1788
      %1790 = vrot.lane.b32.xlu0 %v404, 64
      %v1791 = vpop.permute.xlu0 %1790
      %1792 = vrot.lane.b32.xlu0 %v405, 64
      %v1793 = vpop.permute.xlu0 %1792
      %1794 = vrot.lane.b32.xlu0 %v406, 64
      %v1795 = vpop.permute.xlu0 %1794
      %1796 = vrot.lane.b32.xlu0 %v407, 64
      %v1797 = vpop.permute.xlu0 %1796
      %1798 = vrot.lane.b32.xlu0 %v408, 64
      %v1799 = vpop.permute.xlu0 %1798
      %1800 = vrot.lane.b32.xlu0 %v409, 64
      %v1801 = vpop.permute.xlu0 %1800
      %1802 = vrot.lane.b32.xlu0 %v410, 64
      %v1803 = vpop.permute.xlu0 %1802
      %1804 = vrot.lane.b32.xlu0 %v411, 64
      %v1805 = vpop.permute.xlu0 %1804
      %1806 = vrot.lane.b32.xlu0 %v412, 64
      %v1807 = vpop.permute.xlu0 %1806
      %1808 = vrot.lane.b32.xlu0 %v413, 64
      %v1809 = vpop.permute.xlu0 %1808
      %1810 = vrot.lane.b32.xlu0 %v414, 64
      %v1811 = vpop.permute.xlu0 %1810
      %1812 = vrot.lane.b32.xlu0 %v415, 64
      %v1813 = vpop.permute.xlu0 %1812
      %1814 = vrot.lane.b32.xlu0 %v416, 64
      %v1815 = vpop.permute.xlu0 %1814
      %1816 = vrot.lane.b32.xlu0 %v417, 64
      %v1817 = vpop.permute.xlu0 %1816
      %1818 = vrot.lane.b32.xlu0 %v418, 64
      %v1819 = vpop.permute.xlu0 %1818
      %1820 = vrot.lane.b32.xlu0 %v419, 64
      %v1821 = vpop.permute.xlu0 %1820
      %1822 = vrot.lane.b32.xlu0 %v420, 64
      %v1823 = vpop.permute.xlu0 %1822
      %1824 = vrot.lane.b32.xlu0 %v421, 64
      %v1825 = vpop.permute.xlu0 %1824
      %1826 = vrot.lane.b32.xlu0 %v422, 64
      %v1827 = vpop.permute.xlu0 %1826
      %1828 = vrot.lane.b32.xlu0 %v423, 64
      %v1829 = vpop.permute.xlu0 %1828
      %1830 = vrot.lane.b32.xlu0 %v424, 64
      %v1831 = vpop.permute.xlu0 %1830
      %1832 = vrot.lane.b32.xlu0 %v425, 64
      %v1833 = vpop.permute.xlu0 %1832
      %1834 = vrot.lane.b32.xlu0 %v426, 64
      %v1835 = vpop.permute.xlu0 %1834
      %1836 = vrot.lane.b32.xlu0 %v427, 64
      %v1837 = vpop.permute.xlu0 %1836
      %1838 = vrot.lane.b32.xlu0 %v428, 64
      %v1839 = vpop.permute.xlu0 %1838
      %1840 = vrot.lane.b32.xlu0 %v429, 64
      %v1841 = vpop.permute.xlu0 %1840
      %1842 = vrot.lane.b32.xlu0 %v430, 64
      %v1843 = vpop.permute.xlu0 %1842
      %1844 = vrot.lane.b32.xlu0 %v431, 64
      %v1845 = vpop.permute.xlu0 %1844
      %1846 = vrot.lane.b32.xlu0 %v432, 64
      %v1847 = vpop.permute.xlu0 %1846
      %vm1896 = vcmask 589314
      %1897 = vst.msk [vmem:[#allocation3 - $0x2] sm:$0xfc] %vm1896, %v1753
      %vm1898 = vcmask 589312
      %1899 = vst.msk [vmem:[#allocation3 + $0x6] sm:$0xff] %vm1898, %v1755
      %vm1900 = vcmask 583168
      %1901 = vst.msk [vmem:[#allocation3 + $0xe] sm:$0x3] %vm1900, %v1757
      %1902 = vst.msk [vmem:[#allocation3 + $0xe] sm:$0xfc] %vm1896, %v1759
      %1903 = vst.msk [vmem:[#allocation3 + $0x16] sm:$0xff] %vm1898, %v1761
      %1904 = vst.msk [vmem:[#allocation3 + $0x1e] sm:$0x3] %vm1900, %v1763
      %1905 = vst.msk [vmem:[#allocation3 + $0x1e] sm:$0xfc] %vm1896, %v1765
      %1906 = vst.msk [vmem:[#allocation3 + $0x26] sm:$0xff] %vm1898, %v1767
      %1907 = vst.msk [vmem:[#allocation3 + $0x2e] sm:$0x3] %vm1900, %v1769
      %1908 = vst.msk [vmem:[#allocation3 + $0x2e] sm:$0xfc] %vm1896, %v1771
      %1909 = vst.msk [vmem:[#allocation3 + $0x36] sm:$0xff] %vm1898, %v1773
      %1910 = vst.msk [vmem:[#allocation3 + $0x3e] sm:$0x3] %vm1900, %v1775
      %1911 = vst.msk [vmem:[#allocation3 + $0x3e] sm:$0xfc] %vm1896, %v1777
      %1912 = vst.msk [vmem:[#allocation3 + $0x46] sm:$0xff] %vm1898, %v1779
      %1913 = vst.msk [vmem:[#allocation3 + $0x4e] sm:$0x3] %vm1900, %v1781
      %1914 = vst.msk [vmem:[#allocation3 + $0x4e] sm:$0xfc] %vm1896, %v1783
      %1915 = vst.msk [vmem:[#allocation3 + $0x56] sm:$0xff] %vm1898, %v1785
      %1916 = vst.msk [vmem:[#allocation3 + $0x5e] sm:$0x3] %vm1900, %v1787
      %1917 = vst.msk [vmem:[#allocation3 + $0x5e] sm:$0xfc] %vm1896, %v1789
      %1918 = vst.msk [vmem:[#allocation3 + $0x66] sm:$0xff] %vm1898, %v1791
      %1919 = vst.msk [vmem:[#allocation3 + $0x6e] sm:$0x3] %vm1900, %v1793
      %1920 = vst.msk [vmem:[#allocation3 + $0x6e] sm:$0xfc] %vm1896, %v1795
      %1921 = vst.msk [vmem:[#allocation3 + $0x76] sm:$0xff] %vm1898, %v1797
      %1922 = vst.msk [vmem:[#allocation3 + $0x7e] sm:$0x3] %vm1900, %v1799
      %1923 = vst.msk [vmem:[#allocation3 + $0x7e] sm:$0xfc] %vm1896, %v1801
      %1924 = vst.msk [vmem:[#allocation3 + $0x86] sm:$0xff] %vm1898, %v1803
      %1925 = vst.msk [vmem:[#allocation3 + $0x8e] sm:$0x3] %vm1900, %v1805
      %1926 = vst.msk [vmem:[#allocation3 + $0x8e] sm:$0xfc] %vm1896, %v1807
      %1927 = vst.msk [vmem:[#allocation3 + $0x96] sm:$0xff] %vm1898, %v1809
      %1928 = vst.msk [vmem:[#allocation3 + $0x9e] sm:$0x3] %vm1900, %v1811
      %1929 = vst.msk [vmem:[#allocation3 + $0x9e] sm:$0xfc] %vm1896, %v1813
      %1930 = vst.msk [vmem:[#allocation3 + $0xa6] sm:$0xff] %vm1898, %v1815
      %1931 = vst.msk [vmem:[#allocation3 + $0xae] sm:$0x3] %vm1900, %v1817
      %1932 = vst.msk [vmem:[#allocation3 + $0xae] sm:$0xfc] %vm1896, %v1819
      %1933 = vst.msk [vmem:[#allocation3 + $0xb6] sm:$0xff] %vm1898, %v1821
      %1934 = vst.msk [vmem:[#allocation3 + $0xbe] sm:$0x3] %vm1900, %v1823
      %1935 = vst.msk [vmem:[#allocation3 + $0xbe] sm:$0xfc] %vm1896, %v1825
      %1936 = vst.msk [vmem:[#allocation3 + $0xc6] sm:$0xff] %vm1898, %v1827
      %1937 = vst.msk [vmem:[#allocation3 + $0xce] sm:$0x3] %vm1900, %v1829
      %1938 = vst.msk [vmem:[#allocation3 + $0xce] sm:$0xfc] %vm1896, %v1831
      %1939 = vst.msk [vmem:[#allocation3 + $0xd6] sm:$0xff] %vm1898, %v1833
      %1940 = vst.msk [vmem:[#allocation3 + $0xde] sm:$0x3] %vm1900, %v1835
      %1941 = vst.msk [vmem:[#allocation3 + $0xde] sm:$0xfc] %vm1896, %v1837
      %1942 = vst.msk [vmem:[#allocation3 + $0xe6] sm:$0xff] %vm1898, %v1839
      %1943 = vst.msk [vmem:[#allocation3 + $0xee] sm:$0x3] %vm1900, %v1841
      %1944 = vst.msk [vmem:[#allocation3 + $0xee] sm:$0xfc] %vm1896, %v1843
      %1945 = vst.msk [vmem:[#allocation3 + $0xf6] sm:$0xff] %vm1898, %v1845
      %1946 = vst.msk [vmem:[#allocation3 + $0xfe] sm:$0x3] %vm1900, %v1847
      %v1947 = vld [vmem:[#allocation3] sm:$0xff]
      %v1948 = vld [vmem:[#allocation3 + $0x8] sm:$0xff]
      %v1949 = vld [vmem:[#allocation3 + $0x10] sm:$0xff]
      %v1950 = vld [vmem:[#allocation3 + $0x18] sm:$0xff]
      %v1951 = vld [vmem:[#allocation3 + $0x20] sm:$0xff]
      %v1952 = vld [vmem:[#allocation3 + $0x28] sm:$0xff]
      %v1953 = vld [vmem:[#allocation3 + $0x30] sm:$0xff]
      %v1954 = vld [vmem:[#allocation3 + $0x38] sm:$0xff]
      %v1955 = vld [vmem:[#allocation3 + $0x40] sm:$0xff]
      %v1956 = vld [vmem:[#allocation3 + $0x48] sm:$0xff]
      %v1957 = vld [vmem:[#allocation3 + $0x50] sm:$0xff]
      %v1958 = vld [vmem:[#allocation3 + $0x58] sm:$0xff]
      %v1959 = vld [vmem:[#allocation3 + $0x60] sm:$0xff]
      %v1960 = vld [vmem:[#allocation3 + $0x68] sm:$0xff]
      %v1961 = vld [vmem:[#allocation3 + $0x70] sm:$0xff]
      %v1962 = vld [vmem:[#allocation3 + $0x78] sm:$0xff]
      %v1963 = vld [vmem:[#allocation3 + $0x80] sm:$0xff]
      %v1964 = vld [vmem:[#allocation3 + $0x88] sm:$0xff]
      %v1965 = vld [vmem:[#allocation3 + $0x90] sm:$0xff]
      %v1966 = vld [vmem:[#allocation3 + $0x98] sm:$0xff]
      %v1967 = vld [vmem:[#allocation3 + $0xa0] sm:$0xff]
      %v1968 = vld [vmem:[#allocation3 + $0xa8] sm:$0xff]
      %v1969 = vld [vmem:[#allocation3 + $0xb0] sm:$0xff]
      %v1970 = vld [vmem:[#allocation3 + $0xb8] sm:$0xff]
      %v1971 = vld [vmem:[#allocation3 + $0xc0] sm:$0xff]
      %v1972 = vld [vmem:[#allocation3 + $0xc8] sm:$0xff]
      %v1973 = vld [vmem:[#allocation3 + $0xd0] sm:$0xff]
      %v1974 = vld [vmem:[#allocation3 + $0xd8] sm:$0xff]
      %v1975 = vld [vmem:[#allocation3 + $0xe0] sm:$0xff]
      %v1976 = vld [vmem:[#allocation3 + $0xe8] sm:$0xff]
      %v1977 = vld [vmem:[#allocation3 + $0xf0] sm:$0xff]
      %v1978 = vld [vmem:[#allocation3 + $0xf8] sm:$0xff]
      %v1980 = vlaneseq
      %v1981 = vshrl.u32 %v1980, 7
      %v1982 = vsub.s32 0, %v1981
      %v1983 = vrot.slane %v378, %v1982
      %vm1985 = vcmask 588800
      %v1987 = vsel %vm1985, %v1947, 0
      %v1990 = vsel %vm1985, %v1948, 0
      %v1993 = vsel %vm1985, %v1949, 0
      %v1996 = vsel %vm1985, %v1950, 0
      %v1999 = vsel %vm1985, %v1951, 0
      %v2002 = vsel %vm1985, %v1952, 0
      %v2005 = vsel %vm1985, %v1953, 0
      %v2008 = vsel %vm1985, %v1954, 0
      %v2011 = vsel %vm1985, %v1955, 0
      %v2014 = vsel %vm1985, %v1956, 0
      %v2017 = vsel %vm1985, %v1957, 0
      %v2020 = vsel %vm1985, %v1958, 0
      %v2023 = vsel %vm1985, %v1959, 0
      %v2026 = vsel %vm1985, %v1960, 0
      %v2029 = vsel %vm1985, %v1961, 0
      %v2032 = vsel %vm1985, %v1962, 0
      %v2035 = vsel %vm1985, %v1963, 0
      %v2038 = vsel %vm1985, %v1964, 0
      %v2041 = vsel %vm1985, %v1965, 0
      %v2044 = vsel %vm1985, %v1966, 0
      %v2047 = vsel %vm1985, %v1967, 0
      %v2050 = vsel %vm1985, %v1968, 0
      %v2053 = vsel %vm1985, %v1969, 0
      %v2056 = vsel %vm1985, %v1970, 0
      %v2059 = vsel %vm1985, %v1971, 0
      %v2062 = vsel %vm1985, %v1972, 0
      %v2065 = vsel %vm1985, %v1973, 0
      %v2068 = vsel %vm1985, %v1974, 0
      %v2071 = vsel %vm1985, %v1975, 0
      %v2074 = vsel %vm1985, %v1976, 0
      %v2077 = vsel %vm1985, %v1977, 0
      %v2080 = vsel %vm1985, %v1978, 0
      %2082 = vmatprep.subr.mxu0 0.0
      %2083 = vmatpush1.msra.mxu0 %v369
      %2084 = vmatprep.subr.mxu0 0.0
      %2085 = vmatpush1.msra.mxu0 %v370
      %2086 = vmatprep.subr.mxu0 0.0
      %2087 = vmatpush1.msra.mxu0 %v371
      %2088 = vmatprep.subr.mxu0 0.0
      %2089 = vmatpush1.msra.mxu0 %v372
      %2090 = vmatprep.subr.mxu0 0.0
      %2091 = vmatpush1.msra.mxu0 %v373
      %2092 = vmatprep.subr.mxu0 0.0
      %2093 = vmatpush1.msra.mxu0 %v374
      %2094 = vmatprep.subr.mxu0 0.0
      %2095 = vmatpush1.msra.mxu0 %v375
      %2096 = vmatprep.subr.mxu0 0.0
      %2097 = vmatpush1.msra.mxu0 %v376
      %2098 = vmatprep.subr.mxu0 0.0
      %2099 = vmatpush1.msra.mxu0 %v377
      %2100 = vmatprep.subr.mxu0 0.0
      %2101 = vmatpush1.msra.mxu0 0.0
      %2102 = vmatprep.subr.mxu0 0.0
      %2103 = vmatpush1.msra.mxu0 0.0
      %2104 = vmatprep.subr.mxu0 0.0
      %2105 = vmatpush1.msra.mxu0 0.0
      %2106 = vmatprep.subr.mxu0 0.0
      %2107 = vmatpush1.msra.mxu0 0.0
      %2108 = vmatprep.subr.mxu0 0.0
      %2109 = vmatpush1.msra.mxu0 0.0
      %2110 = vmatprep.subr.mxu0 0.0
      %2111 = vmatpush1.msra.mxu0 0.0
      %2112 = vmatprep.subr.mxu0 0.0
      %2113 = vmatpush1.msra.mxu0 0.0
      %2114 = vmatprep.subr.mxu0 0.0
      %2115 = vmatpush1.msra.mxu0 0.0
      %2116 = vmatprep.subr.mxu0 0.0
      %2117 = vmatpush1.msra.mxu0 0.0
      %2118 = vmatprep.subr.mxu0 0.0
      %2119 = vmatpush1.msra.mxu0 0.0
      %2120 = vmatprep.subr.mxu0 0.0
      %2121 = vmatpush1.msra.mxu0 0.0
      %2122 = vmatprep.subr.mxu0 0.0
      %2123 = vmatpush1.msra.mxu0 0.0
      %2124 = vmatprep.subr.mxu0 0.0
      %2125 = vmatpush1.msra.mxu0 0.0
      %2126 = vmatprep.subr.mxu0 0.0
      %2127 = vmatpush1.msra.mxu0 0.0
      %2128 = vmatprep.subr.mxu0 0.0
      %2129 = vmatpush1.msra.mxu0 0.0
      %2130 = vmatprep.subr.mxu0 0.0
      %2131 = vmatpush1.msra.mxu0 0.0
      %2132 = vmatprep.subr.mxu0 0.0
      %2133 = vmatpush1.msra.mxu0 0.0
      %2134 = vmatprep.subr.mxu0 0.0
      %2135 = vmatpush1.msra.mxu0 0.0
      %2136 = vmatprep.subr.mxu0 0.0
      %2137 = vmatpush1.msra.mxu0 0.0
      %2138 = vmatprep.subr.mxu0 0.0
      %2139 = vmatpush1.msra.mxu0 0.0
      %2140 = vmatprep.subr.mxu0 0.0
      %2141 = vmatpush1.msra.mxu0 0.0
      %2142 = vmatprep.subr.mxu0 0.0
      %2143 = vmatpush1.msra.mxu0 0.0
      %2144 = vmatprep.subr.mxu0 0.0
      %2145 = vmatpush1.msra.mxu0 0.0
      %2146 = vmatprep.mubr.f32.mxu0 0.0
      %2147 = vmatmul.mubr.f32.gmra.mrb[0].mxu0 %v1987
      %v2148 = vpop.f32.mrb[0].mxu0
      %v2149 = vadd.f32 %v1983, %v2148
      %v2150 = vpop.f32.mrb[0].mxu0
      %2151 = vmatprep.mubr.f32.mxu0 0.0
      %2152 = vmatmul.mubr.f32.gmra.mrb[0].mxu0 %v1990
      %v2153 = vpop.f32.mrb[0].mxu0
      %v2154 = vadd.f32 %v1983, %v2153
      %v2155 = vpop.f32.mrb[0].mxu0
      %2156 = vmatprep.mubr.f32.mxu0 0.0
      %2157 = vmatmul.mubr.f32.gmra.mrb[0].mxu0 %v1993
      %v2158 = vpop.f32.mrb[0].mxu0
      %v2159 = vadd.f32 %v1983, %v2158
      %v2160 = vpop.f32.mrb[0].mxu0
      %2161 = vmatprep.mubr.f32.mxu0 0.0
      %2162 = vmatmul.mubr.f32.gmra.mrb[0].mxu0 %v1996
      %v2163 = vpop.f32.mrb[0].mxu0
      %v2164 = vadd.f32 %v1983, %v2163
      %v2165 = vpop.f32.mrb[0].mxu0
      %2166 = vmatprep.mubr.f32.mxu0 0.0
      %2167 = vmatmul.mubr.f32.gmra.mrb[0].mxu0 %v1999
      %v2168 = vpop.f32.mrb[0].mxu0
      %v2169 = vadd.f32 %v1983, %v2168
      %v2170 = vpop.f32.mrb[0].mxu0
      %2171 = vmatprep.mubr.f32.mxu0 0.0
      %2172 = vmatmul.mubr.f32.gmra.mrb[0].mxu0 %v2002
      %v2173 = vpop.f32.mrb[0].mxu0
      %v2174 = vadd.f32 %v1983, %v2173
      %v2175 = vpop.f32.mrb[0].mxu0
      %2176 = vmatprep.mubr.f32.mxu0 0.0
      %2177 = vmatmul.mubr.f32.gmra.mrb[0].mxu0 %v2005
      %v2178 = vpop.f32.mrb[0].mxu0
      %v2179 = vadd.f32 %v1983, %v2178
      %v2180 = vpop.f32.mrb[0].mxu0
      %2181 = vmatprep.mubr.f32.mxu0 0.0
      %2182 = vmatmul.mubr.f32.gmra.mrb[0].mxu0 %v2008
      %v2183 = vpop.f32.mrb[0].mxu0
      %v2184 = vadd.f32 %v1983, %v2183
      %v2185 = vpop.f32.mrb[0].mxu0
      %2186 = vmatprep.mubr.f32.mxu0 0.0
      %2187 = vmatmul.mubr.f32.gmra.mrb[0].mxu0 %v2011
      %v2188 = vpop.f32.mrb[0].mxu0
      %v2189 = vadd.f32 %v1983, %v2188
      %v2190 = vpop.f32.mrb[0].mxu0
      %2191 = vmatprep.mubr.f32.mxu0 0.0
      %2192 = vmatmul.mubr.f32.gmra.mrb[0].mxu0 %v2014
      %v2193 = vpop.f32.mrb[0].mxu0
      %v2194 = vadd.f32 %v1983, %v2193
      %v2195 = vpop.f32.mrb[0].mxu0
      %2196 = vmatprep.mubr.f32.mxu0 0.0
      %2197 = vmatmul.mubr.f32.gmra.mrb[0].mxu0 %v2017
      %v2198 = vpop.f32.mrb[0].mxu0
      %v2199 = vadd.f32 %v1983, %v2198
      %v2200 = vpop.f32.mrb[0].mxu0
      %2201 = vmatprep.mubr.f32.mxu0 0.0
      %2202 = vmatmul.mubr.f32.gmra.mrb[0].mxu0 %v2020
      %v2203 = vpop.f32.mrb[0].mxu0
      %v2204 = vadd.f32 %v1983, %v2203
      %v2205 = vpop.f32.mrb[0].mxu0
      %2206 = vmatprep.mubr.f32.mxu0 0.0
      %2207 = vmatmul.mubr.f32.gmra.mrb[0].mxu0 %v2023
      %v2208 = vpop.f32.mrb[0].mxu0
      %v2209 = vadd.f32 %v1983, %v2208
      %v2210 = vpop.f32.mrb[0].mxu0
      %2211 = vmatprep.mubr.f32.mxu0 0.0
      %2212 = vmatmul.mubr.f32.gmra.mrb[0].mxu0 %v2026
      %v2213 = vpop.f32.mrb[0].mxu0
      %v2214 = vadd.f32 %v1983, %v2213
      %v2215 = vpop.f32.mrb[0].mxu0
      %2216 = vmatprep.mubr.f32.mxu0 0.0
      %2217 = vmatmul.mubr.f32.gmra.mrb[0].mxu0 %v2029
      %v2218 = vpop.f32.mrb[0].mxu0
      %v2219 = vadd.f32 %v1983, %v2218
      %v2220 = vpop.f32.mrb[0].mxu0
      %2221 = vmatprep.mubr.f32.mxu0 0.0
      %2222 = vmatmul.mubr.f32.gmra.mrb[0].mxu0 %v2032
      %v2223 = vpop.f32.mrb[0].mxu0
      %v2224 = vadd.f32 %v1983, %v2223
      %v2225 = vpop.f32.mrb[0].mxu0
      %2226 = vmatprep.mubr.f32.mxu0 0.0
      %2227 = vmatmul.mubr.f32.gmra.mrb[0].mxu0 %v2035
      %v2228 = vpop.f32.mrb[0].mxu0
      %v2229 = vadd.f32 %v1983, %v2228
      %v2230 = vpop.f32.mrb[0].mxu0
      %2231 = vmatprep.mubr.f32.mxu0 0.0
      %2232 = vmatmul.mubr.f32.gmra.mrb[0].mxu0 %v2038
      %v2233 = vpop.f32.mrb[0].mxu0
      %v2234 = vadd.f32 %v1983, %v2233
      %v2235 = vpop.f32.mrb[0].mxu0
      %2236 = vmatprep.mubr.f32.mxu0 0.0
      %2237 = vmatmul.mubr.f32.gmra.mrb[0].mxu0 %v2041
      %v2238 = vpop.f32.mrb[0].mxu0
      %v2239 = vadd.f32 %v1983, %v2238
      %v2240 = vpop.f32.mrb[0].mxu0
      %2241 = vmatprep.mubr.f32.mxu0 0.0
      %2242 = vmatmul.mubr.f32.gmra.mrb[0].mxu0 %v2044
      %v2243 = vpop.f32.mrb[0].mxu0
      %v2244 = vadd.f32 %v1983, %v2243
      %v2245 = vpop.f32.mrb[0].mxu0
      %2246 = vmatprep.mubr.f32.mxu0 0.0
      %2247 = vmatmul.mubr.f32.gmra.mrb[0].mxu0 %v2047
      %v2248 = vpop.f32.mrb[0].mxu0
      %v2249 = vadd.f32 %v1983, %v2248
      %v2250 = vpop.f32.mrb[0].mxu0
      %2251 = vmatprep.mubr.f32.mxu0 0.0
      %2252 = vmatmul.mubr.f32.gmra.mrb[0].mxu0 %v2050
      %v2253 = vpop.f32.mrb[0].mxu0
      %v2254 = vadd.f32 %v1983, %v2253
      %v2255 = vpop.f32.mrb[0].mxu0
      %2256 = vmatprep.mubr.f32.mxu0 0.0
      %2257 = vmatmul.mubr.f32.gmra.mrb[0].mxu0 %v2053
      %v2258 = vpop.f32.mrb[0].mxu0
      %v2259 = vadd.f32 %v1983, %v2258
      %v2260 = vpop.f32.mrb[0].mxu0
      %2261 = vmatprep.mubr.f32.mxu0 0.0
      %2262 = vmatmul.mubr.f32.gmra.mrb[0].mxu0 %v2056
      %v2263 = vpop.f32.mrb[0].mxu0
      %v2264 = vadd.f32 %v1983, %v2263
      %v2265 = vpop.f32.mrb[0].mxu0
      %2266 = vmatprep.mubr.f32.mxu0 0.0
      %2267 = vmatmul.mubr.f32.gmra.mrb[0].mxu0 %v2059
      %v2268 = vpop.f32.mrb[0].mxu0
      %v2269 = vadd.f32 %v1983, %v2268
      %v2270 = vpop.f32.mrb[0].mxu0
      %2271 = vmatprep.mubr.f32.mxu0 0.0
      %2272 = vmatmul.mubr.f32.gmra.mrb[0].mxu0 %v2062
      %v2273 = vpop.f32.mrb[0].mxu0
      %v2274 = vadd.f32 %v1983, %v2273
      %v2275 = vpop.f32.mrb[0].mxu0
      %2276 = vmatprep.mubr.f32.mxu0 0.0
      %2277 = vmatmul.mubr.f32.gmra.mrb[0].mxu0 %v2065
      %v2278 = vpop.f32.mrb[0].mxu0
      %v2279 = vadd.f32 %v1983, %v2278
      %v2280 = vpop.f32.mrb[0].mxu0
      %2281 = vmatprep.mubr.f32.mxu0 0.0
      %2282 = vmatmul.mubr.f32.gmra.mrb[0].mxu0 %v2068
      %v2283 = vpop.f32.mrb[0].mxu0
      %v2284 = vadd.f32 %v1983, %v2283
      %v2285 = vpop.f32.mrb[0].mxu0
      %2286 = vmatprep.mubr.f32.mxu0 0.0
      %2287 = vmatmul.mubr.f32.gmra.mrb[0].mxu0 %v2071
      %v2288 = vpop.f32.mrb[0].mxu0
      %v2289 = vadd.f32 %v1983, %v2288
      %v2290 = vpop.f32.mrb[0].mxu0
      %2291 = vmatprep.mubr.f32.mxu0 0.0
      %2292 = vmatmul.mubr.f32.gmra.mrb[0].mxu0 %v2074
      %v2293 = vpop.f32.mrb[0].mxu0
      %v2294 = vadd.f32 %v1983, %v2293
      %v2295 = vpop.f32.mrb[0].mxu0
      %2296 = vmatprep.mubr.f32.mxu0 0.0
      %2297 = vmatmul.mubr.f32.gmra.mrb[0].mxu0 %v2077
      %v2298 = vpop.f32.mrb[0].mxu0
      %v2299 = vadd.f32 %v1983, %v2298
      %v2300 = vpop.f32.mrb[0].mxu0
      %2301 = vmatprep.mubr.f32.mxu0 0.0
      %2302 = vmatmul.mubr.f32.gmra.mrb[0].mxu0 %v2080
      %v2303 = vpop.f32.mrb[0].mxu0
      %v2304 = vadd.f32 %v1983, %v2303
      %v2305 = vpop.f32.mrb[0].mxu0
      %2306 = vdwg.mxu0
      %v2307 = vmax.f32 %v2149, 0.0
      %v2308 = vmax.f32 %v2154, 0.0
      %v2309 = vmax.f32 %v2159, 0.0
      %v2310 = vmax.f32 %v2164, 0.0
      %v2311 = vmax.f32 %v2169, 0.0
      %v2312 = vmax.f32 %v2174, 0.0
      %v2313 = vmax.f32 %v2179, 0.0
      %v2314 = vmax.f32 %v2184, 0.0
      %v2315 = vmax.f32 %v2189, 0.0
      %v2316 = vmax.f32 %v2194, 0.0
      %v2317 = vmax.f32 %v2199, 0.0
      %v2318 = vmax.f32 %v2204, 0.0
      %v2319 = vmax.f32 %v2209, 0.0
      %v2320 = vmax.f32 %v2214, 0.0
      %v2321 = vmax.f32 %v2219, 0.0
      %v2322 = vmax.f32 %v2224, 0.0
      %v2323 = vmax.f32 %v2229, 0.0
      %v2324 = vmax.f32 %v2234, 0.0
      %v2325 = vmax.f32 %v2239, 0.0
      %v2326 = vmax.f32 %v2244, 0.0
      %v2327 = vmax.f32 %v2249, 0.0
      %v2328 = vmax.f32 %v2254, 0.0
      %v2329 = vmax.f32 %v2259, 0.0
      %v2330 = vmax.f32 %v2264, 0.0
      %v2331 = vmax.f32 %v2269, 0.0
      %v2332 = vmax.f32 %v2274, 0.0
      %v2333 = vmax.f32 %v2279, 0.0
      %v2334 = vmax.f32 %v2284, 0.0
      %v2335 = vmax.f32 %v2289, 0.0
      %v2336 = vmax.f32 %v2294, 0.0
      %v2337 = vmax.f32 %v2299, 0.0
      %v2338 = vmax.f32 %v2304, 0.0
      %2339 = vst.msk [vmem:[%s257 + $0x1] sm:$0xff] %vm258, %v2307
      %2340 = vst.msk [vmem:[%s257 + $0x9] sm:$0xff] %vm258, %v2308
      %2341 = vst.msk [vmem:[%s257 + $0x19] sm:$0xff] %vm258, %v2309
      %2342 = vst.msk [vmem:[%s257 + $0x21] sm:$0xff] %vm258, %v2310
      %2343 = vst.msk [vmem:[%s257 + $0x31] sm:$0xff] %vm258, %v2311
      %2344 = vst.msk [vmem:[%s257 + $0x39] sm:$0xff] %vm258, %v2312
      %2345 = vst.msk [vmem:[%s257 + $0x49] sm:$0xff] %vm258, %v2313
      %2346 = vst.msk [vmem:[%s257 + $0x51] sm:$0xff] %vm258, %v2314
      %2347 = vst.msk [vmem:[%s257 + $0x61] sm:$0xff] %vm258, %v2315
      %2348 = vst.msk [vmem:[%s257 + $0x69] sm:$0xff] %vm258, %v2316
      %2349 = vst.msk [vmem:[%s257 + $0x79] sm:$0xff] %vm258, %v2317
      %2350 = vst.msk [vmem:[%s257 + $0x81] sm:$0xff] %vm258, %v2318
      %2351 = vst.msk [vmem:[%s257 + $0x91] sm:$0xff] %vm258, %v2319
      %2352 = vst.msk [vmem:[%s257 + $0x99] sm:$0xff] %vm258, %v2320
      %2353 = vst.msk [vmem:[%s257 + $0xa9] sm:$0xff] %vm258, %v2321
      %2354 = vst.msk [vmem:[%s257 + $0xb1] sm:$0xff] %vm258, %v2322
      %2355 = vst.msk [vmem:[%s257 + $0xc1] sm:$0xff] %vm258, %v2323
      %2356 = vst.msk [vmem:[%s257 + $0xc9] sm:$0xff] %vm258, %v2324
      %2357 = vst.msk [vmem:[%s257 + $0xd9] sm:$0xff] %vm258, %v2325
      %2358 = vst.msk [vmem:[%s257 + $0xe1] sm:$0xff] %vm258, %v2326
      %2359 = vst.msk [vmem:[%s257 + $0xf1] sm:$0xff] %vm258, %v2327
      %2360 = vst.msk [vmem:[%s257 + $0xf9] sm:$0xff] %vm258, %v2328
      %2361 = vst.msk [vmem:[%s257 + $0x109] sm:$0xff] %vm258, %v2329
      %2362 = vst.msk [vmem:[%s257 + $0x111] sm:$0xff] %vm258, %v2330
      %2363 = vst.msk [vmem:[%s257 + $0x121] sm:$0xff] %vm258, %v2331
      %2364 = vst.msk [vmem:[%s257 + $0x129] sm:$0xff] %vm258, %v2332
      %2365 = vst.msk [vmem:[%s257 + $0x139] sm:$0xff] %vm258, %v2333
      %2366 = vst.msk [vmem:[%s257 + $0x141] sm:$0xff] %vm258, %v2334
      %2367 = vst.msk [vmem:[%s257 + $0x151] sm:$0xff] %vm258, %v2335
      %2368 = vst.msk [vmem:[%s257 + $0x159] sm:$0xff] %vm258, %v2336
      %2369 = vst.msk [vmem:[%s257 + $0x169] sm:$0xff] %vm258, %v2337
      %2370 = vst.msk [vmem:[%s257 + $0x171] sm:$0xff] %vm258, %v2338
      %2371 = vst.msk [vmem:[#allocation2 + $0x1] sm:$0xff] %vm258, %v2309
      %2372 = vst.msk [vmem:[#allocation2 + $0x9] sm:$0xff] %vm258, %v2310
      %2373 = vst.msk [vmem:[%s293 + $0x1] sm:$0xff] %vm258, %v2335
      %2374 = vst.msk [vmem:[%s293 + $0x9] sm:$0xff] %vm258, %v2336
      %v2375 = vld [vmem:[#allocation2 + $0x2] sm:$0x1]
      %v2376 = vld [vmem:[#allocation2 + $0x1a] sm:$0x1]
      %v2377 = vld [vmem:[#allocation2 + $0x32] sm:$0x1]
      %v2378 = vld [vmem:[#allocation2 + $0x4a] sm:$0x1]
      %v2379 = vld [vmem:[#allocation2 + $0x62] sm:$0x1]
      %v2380 = vld [vmem:[#allocation2 + $0x7a] sm:$0x1]
      %v2381 = vld [vmem:[#allocation2 + $0x92] sm:$0x1]
      %v2382 = vld [vmem:[#allocation2 + $0xaa] sm:$0x1]
      %v2383 = vld [vmem:[#allocation2 + $0xc2] sm:$0x1]
      %v2384 = vld [vmem:[#allocation2 + $0xda] sm:$0x1]
      %v2385 = vld [vmem:[#allocation2 + $0xf2] sm:$0x1]
      %v2386 = vld [vmem:[#allocation2 + $0x10a] sm:$0x1]
      %v2387 = vld [vmem:[#allocation2 + $0x122] sm:$0x1]
      %v2388 = vld [vmem:[#allocation2 + $0x13a] sm:$0x1]
      %v2389 = vld [vmem:[#allocation2 + $0x152] sm:$0x1]
      %v2390 = vld [vmem:[#allocation2 + $0x16a] sm:$0x1]
      %v2391 = vld [vmem:[#allocation2 + $0x182] sm:$0x1]
      %v2392 = vld [vmem:[#allocation2 + $0x19a] sm:$0x1]
      %2393 = vst.msk [vmem:[#allocation2] sm:$0x1] %vm314, %v2375
      %2394 = vst.msk [vmem:[#allocation2 + $0x18] sm:$0x1] %vm314, %v2376
      %2395 = vst.msk [vmem:[#allocation2 + $0x30] sm:$0x1] %vm314, %v2377
      %2396 = vst.msk [vmem:[#allocation2 + $0x48] sm:$0x1] %vm314, %v2378
      %2397 = vst.msk [vmem:[#allocation2 + $0x60] sm:$0x1] %vm314, %v2379
      %2398 = vst.msk [vmem:[#allocation2 + $0x78] sm:$0x1] %vm314, %v2380
      %2399 = vst.msk [vmem:[#allocation2 + $0x90] sm:$0x1] %vm314, %v2381
      %2400 = vst.msk [vmem:[#allocation2 + $0xa8] sm:$0x1] %vm314, %v2382
      %2401 = vst.msk [vmem:[#allocation2 + $0xc0] sm:$0x1] %vm314, %v2383
      %2402 = vst.msk [vmem:[#allocation2 + $0xd8] sm:$0x1] %vm314, %v2384
      %2403 = vst.msk [vmem:[#allocation2 + $0xf0] sm:$0x1] %vm314, %v2385
      %2404 = vst.msk [vmem:[#allocation2 + $0x108] sm:$0x1] %vm314, %v2386
      %2405 = vst.msk [vmem:[#allocation2 + $0x120] sm:$0x1] %vm314, %v2387
      %2406 = vst.msk [vmem:[#allocation2 + $0x138] sm:$0x1] %vm314, %v2388
      %2407 = vst.msk [vmem:[#allocation2 + $0x150] sm:$0x1] %vm314, %v2389
      %2408 = vst.msk [vmem:[#allocation2 + $0x168] sm:$0x1] %vm314, %v2390
      %2409 = vst.msk [vmem:[#allocation2 + $0x180] sm:$0x1] %vm314, %v2391
      %2410 = vst.msk [vmem:[#allocation2 + $0x198] sm:$0x1] %vm314, %v2392
      %v2411 = vld [vmem:[#allocation2 + $0xf] sm:$0x1]
      %v2412 = vld [vmem:[#allocation2 + $0x27] sm:$0x1]
      %v2413 = vld [vmem:[#allocation2 + $0x3f] sm:$0x1]
      %v2414 = vld [vmem:[#allocation2 + $0x57] sm:$0x1]
      %v2415 = vld [vmem:[#allocation2 + $0x6f] sm:$0x1]
      %v2416 = vld [vmem:[#allocation2 + $0x87] sm:$0x1]
      %v2417 = vld [vmem:[#allocation2 + $0x9f] sm:$0x1]
      %v2418 = vld [vmem:[#allocation2 + $0xb7] sm:$0x1]
      %v2419 = vld [vmem:[#allocation2 + $0xcf] sm:$0x1]
      %v2420 = vld [vmem:[#allocation2 + $0xe7] sm:$0x1]
      %v2421 = vld [vmem:[#allocation2 + $0xff] sm:$0x1]
      %v2422 = vld [vmem:[#allocation2 + $0x117] sm:$0x1]
      %v2423 = vld [vmem:[#allocation2 + $0x12f] sm:$0x1]
      %v2424 = vld [vmem:[#allocation2 + $0x147] sm:$0x1]
      %v2425 = vld [vmem:[#allocation2 + $0x15f] sm:$0x1]
      %v2426 = vld [vmem:[#allocation2 + $0x177] sm:$0x1]
      %v2427 = vld [vmem:[#allocation2 + $0x18f] sm:$0x1]
      %v2428 = vld [vmem:[#allocation2 + $0x1a7] sm:$0x1]
      %2429 = vst.msk [vmem:[#allocation2 + $0x11] sm:$0x1] %vm314, %v2411
      %2430 = vst.msk [vmem:[#allocation2 + $0x29] sm:$0x1] %vm314, %v2412
      %2431 = vst.msk [vmem:[#allocation2 + $0x41] sm:$0x1] %vm314, %v2413
      %2432 = vst.msk [vmem:[#allocation2 + $0x59] sm:$0x1] %vm314, %v2414
      %2433 = vst.msk [vmem:[#allocation2 + $0x71] sm:$0x1] %vm314, %v2415
      %2434 = vst.msk [vmem:[#allocation2 + $0x89] sm:$0x1] %vm314, %v2416
      %2435 = vst.msk [vmem:[#allocation2 + $0xa1] sm:$0x1] %vm314, %v2417
      %2436 = vst.msk [vmem:[#allocation2 + $0xb9] sm:$0x1] %vm314, %v2418
      %2437 = vst.msk [vmem:[#allocation2 + $0xd1] sm:$0x1] %vm314, %v2419
      %2438 = vst.msk [vmem:[#allocation2 + $0xe9] sm:$0x1] %vm314, %v2420
      %2439 = vst.msk [vmem:[#allocation2 + $0x101] sm:$0x1] %vm314, %v2421
      %2440 = vst.msk [vmem:[#allocation2 + $0x119] sm:$0x1] %vm314, %v2422
      %2441 = vst.msk [vmem:[#allocation2 + $0x131] sm:$0x1] %vm314, %v2423
      %2442 = vst.msk [vmem:[#allocation2 + $0x149] sm:$0x1] %vm314, %v2424
      %2443 = vst.msk [vmem:[#allocation2 + $0x161] sm:$0x1] %vm314, %v2425
      %2444 = vst.msk [vmem:[#allocation2 + $0x179] sm:$0x1] %vm314, %v2426
      %2445 = vst.msk [vmem:[#allocation2 + $0x191] sm:$0x1] %vm314, %v2427
      %2446 = vst.msk [vmem:[#allocation2 + $0x1a9] sm:$0x1] %vm314, %v2428
      %v2447 = vld [vmem:[%s3] sm:$0xff]
      %v2448 = vld [vmem:[%s3 + $0x8] sm:$0xff]
      %v2449 = vld [vmem:[%s3 + $0x10] sm:$0xff]
      %v2450 = vld [vmem:[%s3 + $0x18] sm:$0xff]
      %v2451 = vld [vmem:[%s3 + $0x20] sm:$0xff]
      %v2452 = vld [vmem:[%s3 + $0x28] sm:$0xff]
      %v2453 = vld [vmem:[%s3 + $0x30] sm:$0xff]
      %v2454 = vld [vmem:[%s3 + $0x38] sm:$0xff]
      %v2455 = vld [vmem:[%s3 + $0x40] sm:$0xff]
      %v2456 = vld [vmem:[%s4] sm:$0x1]
      %v2457 = vld [vmem:[#allocation2] sm:$0xff]
      %v2458 = vld [vmem:[#allocation2 + $0x8] sm:$0xff]
      %v2459 = vld [vmem:[#allocation2 + $0x10] sm:$0x3]
      %v2460 = vld [vmem:[#allocation2 + $0x18] sm:$0xff]
      %v2461 = vld [vmem:[#allocation2 + $0x20] sm:$0xff]
      %v2462 = vld [vmem:[#allocation2 + $0x28] sm:$0x3]
      %v2463 = vld [vmem:[#allocation2 + $0x30] sm:$0xff]
      %v2464 = vld [vmem:[#allocation2 + $0x38] sm:$0xff]
      %v2465 = vld [vmem:[#allocation2 + $0x40] sm:$0x3]
      %v2466 = vld [vmem:[#allocation2 + $0x48] sm:$0xff]
      %v2467 = vld [vmem:[#allocation2 + $0x50] sm:$0xff]
      %v2468 = vld [vmem:[#allocation2 + $0x58] sm:$0x3]
      %v2469 = vld [vmem:[#allocation2 + $0x60] sm:$0xff]
      %v2470 = vld [vmem:[#allocation2 + $0x68] sm:$0xff]
      %v2471 = vld [vmem:[#allocation2 + $0x70] sm:$0x3]
      %v2472 = vld [vmem:[#allocation2 + $0x78] sm:$0xff]
      %v2473 = vld [vmem:[#allocation2 + $0x80] sm:$0xff]
      %v2474 = vld [vmem:[#allocation2 + $0x88] sm:$0x3]
      %v2475 = vld [vmem:[#allocation2 + $0x90] sm:$0xff]
      %v2476 = vld [vmem:[#allocation2 + $0x98] sm:$0xff]
      %v2477 = vld [vmem:[#allocation2 + $0xa0] sm:$0x3]
      %v2478 = vld [vmem:[#allocation2 + $0xa8] sm:$0xff]
      %v2479 = vld [vmem:[#allocation2 + $0xb0] sm:$0xff]
      %v2480 = vld [vmem:[#allocation2 + $0xb8] sm:$0x3]
      %v2481 = vld [vmem:[#allocation2 + $0xc0] sm:$0xff]
      %v2482 = vld [vmem:[#allocation2 + $0xc8] sm:$0xff]
      %v2483 = vld [vmem:[#allocation2 + $0xd0] sm:$0x3]
      %v2484 = vld [vmem:[#allocation2 + $0xd8] sm:$0xff]
      %v2485 = vld [vmem:[#allocation2 + $0xe0] sm:$0xff]
      %v2486 = vld [vmem:[#allocation2 + $0xe8] sm:$0x3]
      %v2487 = vld [vmem:[#allocation2 + $0xf0] sm:$0xff]
      %v2488 = vld [vmem:[#allocation2 + $0xf8] sm:$0xff]
      %v2489 = vld [vmem:[#allocation2 + $0x100] sm:$0x3]
      %v2490 = vld [vmem:[#allocation2 + $0x108] sm:$0xff]
      %v2491 = vld [vmem:[#allocation2 + $0x110] sm:$0xff]
      %v2492 = vld [vmem:[#allocation2 + $0x118] sm:$0x3]
      %v2493 = vld [vmem:[#allocation2 + $0x120] sm:$0xff]
      %v2494 = vld [vmem:[#allocation2 + $0x128] sm:$0xff]
      %v2495 = vld [vmem:[#allocation2 + $0x130] sm:$0x3]
      %v2496 = vld [vmem:[#allocation2 + $0x138] sm:$0xff]
      %v2497 = vld [vmem:[#allocation2 + $0x140] sm:$0xff]
      %v2498 = vld [vmem:[#allocation2 + $0x148] sm:$0x3]
      %v2499 = vld [vmem:[#allocation2 + $0x150] sm:$0xff]
      %v2500 = vld [vmem:[#allocation2 + $0x158] sm:$0xff]
      %v2501 = vld [vmem:[#allocation2 + $0x160] sm:$0x3]
      %v2502 = vld [vmem:[#allocation2 + $0x168] sm:$0xff]
      %v2503 = vld [vmem:[#allocation2 + $0x170] sm:$0xff]
      %v2504 = vld [vmem:[#allocation2 + $0x178] sm:$0x3]
      %v2505 = vld [vmem:[#allocation2 + $0x180] sm:$0xff]
      %v2506 = vld [vmem:[#allocation2 + $0x188] sm:$0xff]
      %v2507 = vld [vmem:[#allocation2 + $0x190] sm:$0x3]
      %v2508 = vld [vmem:[#allocation2 + $0x198] sm:$0xff]
      %v2509 = vld [vmem:[#allocation2 + $0x1a0] sm:$0xff]
      %v2510 = vld [vmem:[#allocation2 + $0x1a8] sm:$0x3]
      %2511 = vst.msk [vmem:[#allocation3] sm:$0xff] %vm258, %v2457
      %2512 = vst.msk [vmem:[#allocation3 + $0x8] sm:$0xff] %vm258, %v2458
      %2513 = vst.msk [vmem:[#allocation3 + $0x10] sm:$0xff] %vm258, %v2460
      %2514 = vst.msk [vmem:[#allocation3 + $0x18] sm:$0xff] %vm258, %v2461
      %2515 = vst.msk [vmem:[#allocation3 + $0x20] sm:$0xff] %vm258, %v2463
      %2516 = vst.msk [vmem:[#allocation3 + $0x28] sm:$0xff] %vm258, %v2464
      %2517 = vst.msk [vmem:[#allocation3 + $0x30] sm:$0xff] %vm258, %v2466
      %2518 = vst.msk [vmem:[#allocation3 + $0x38] sm:$0xff] %vm258, %v2467
      %2519 = vst.msk [vmem:[#allocation3 + $0x40] sm:$0xff] %vm258, %v2469
      %2520 = vst.msk [vmem:[#allocation3 + $0x48] sm:$0xff] %vm258, %v2470
      %2521 = vst.msk [vmem:[#allocation3 + $0x50] sm:$0xff] %vm258, %v2472
      %2522 = vst.msk [vmem:[#allocation3 + $0x58] sm:$0xff] %vm258, %v2473
      %2523 = vst.msk [vmem:[#allocation3 + $0x60] sm:$0xff] %vm258, %v2475
      %2524 = vst.msk [vmem:[#allocation3 + $0x68] sm:$0xff] %vm258, %v2476
      %2525 = vst.msk [vmem:[#allocation3 + $0x70] sm:$0xff] %vm258, %v2478
      %2526 = vst.msk [vmem:[#allocation3 + $0x78] sm:$0xff] %vm258, %v2479
      %2527 = vst.msk [vmem:[#allocation3 + $0x80] sm:$0xff] %vm258, %v2481
      %2528 = vst.msk [vmem:[#allocation3 + $0x88] sm:$0xff] %vm258, %v2482
      %2529 = vst.msk [vmem:[#allocation3 + $0x90] sm:$0xff] %vm258, %v2484
      %2530 = vst.msk [vmem:[#allocation3 + $0x98] sm:$0xff] %vm258, %v2485
      %2531 = vst.msk [vmem:[#allocation3 + $0xa0] sm:$0xff] %vm258, %v2487
      %2532 = vst.msk [vmem:[#allocation3 + $0xa8] sm:$0xff] %vm258, %v2488
      %2533 = vst.msk [vmem:[#allocation3 + $0xb0] sm:$0xff] %vm258, %v2490
      %2534 = vst.msk [vmem:[#allocation3 + $0xb8] sm:$0xff] %vm258, %v2491
      %2535 = vst.msk [vmem:[#allocation3 + $0xc0] sm:$0xff] %vm258, %v2493
      %2536 = vst.msk [vmem:[#allocation3 + $0xc8] sm:$0xff] %vm258, %v2494
      %2537 = vst.msk [vmem:[#allocation3 + $0xd0] sm:$0xff] %vm258, %v2496
      %2538 = vst.msk [vmem:[#allocation3 + $0xd8] sm:$0xff] %vm258, %v2497
      %2539 = vst.msk [vmem:[#allocation3 + $0xe0] sm:$0xff] %vm258, %v2499
      %2540 = vst.msk [vmem:[#allocation3 + $0xe8] sm:$0xff] %vm258, %v2500
      %2541 = vst.msk [vmem:[#allocation3 + $0xf0] sm:$0xff] %vm258, %v2502
      %2542 = vst.msk [vmem:[#allocation3 + $0xf8] sm:$0xff] %vm258, %v2503
      %2591 = vrot.lane.b32.xlu0 %v2457, 8
      %v2592 = vpop.permute.xlu0 %2591
      %2593 = vrot.lane.b32.xlu0 %v2458, 8
      %v2594 = vpop.permute.xlu0 %2593
      %2595 = vrot.lane.b32.xlu0 %v2459, 8
      %v2596 = vpop.permute.xlu0 %2595
      %2597 = vrot.lane.b32.xlu0 %v2460, 8
      %v2598 = vpop.permute.xlu0 %2597
      %2599 = vrot.lane.b32.xlu0 %v2461, 8
      %v2600 = vpop.permute.xlu0 %2599
      %2601 = vrot.lane.b32.xlu0 %v2462, 8
      %v2602 = vpop.permute.xlu0 %2601
      %2603 = vrot.lane.b32.xlu0 %v2463, 8
      %v2604 = vpop.permute.xlu0 %2603
      %2605 = vrot.lane.b32.xlu0 %v2464, 8
      %v2606 = vpop.permute.xlu0 %2605
      %2607 = vrot.lane.b32.xlu0 %v2465, 8
      %v2608 = vpop.permute.xlu0 %2607
      %2609 = vrot.lane.b32.xlu0 %v2466, 8
      %v2610 = vpop.permute.xlu0 %2609
      %2611 = vrot.lane.b32.xlu0 %v2467, 8
      %v2612 = vpop.permute.xlu0 %2611
      %2613 = vrot.lane.b32.xlu0 %v2468, 8
      %v2614 = vpop.permute.xlu0 %2613
      %2615 = vrot.lane.b32.xlu0 %v2469, 8
      %v2616 = vpop.permute.xlu0 %2615
      %2617 = vrot.lane.b32.xlu0 %v2470, 8
      %v2618 = vpop.permute.xlu0 %2617
      %2619 = vrot.lane.b32.xlu0 %v2471, 8
      %v2620 = vpop.permute.xlu0 %2619
      %2621 = vrot.lane.b32.xlu0 %v2472, 8
      %v2622 = vpop.permute.xlu0 %2621
      %2623 = vrot.lane.b32.xlu0 %v2473, 8
      %v2624 = vpop.permute.xlu0 %2623
      %2625 = vrot.lane.b32.xlu0 %v2474, 8
      %v2626 = vpop.permute.xlu0 %2625
      %2627 = vrot.lane.b32.xlu0 %v2475, 8
      %v2628 = vpop.permute.xlu0 %2627
      %2629 = vrot.lane.b32.xlu0 %v2476, 8
      %v2630 = vpop.permute.xlu0 %2629
      %2631 = vrot.lane.b32.xlu0 %v2477, 8
      %v2632 = vpop.permute.xlu0 %2631
      %2633 = vrot.lane.b32.xlu0 %v2478, 8
      %v2634 = vpop.permute.xlu0 %2633
      %2635 = vrot.lane.b32.xlu0 %v2479, 8
      %v2636 = vpop.permute.xlu0 %2635
      %2637 = vrot.lane.b32.xlu0 %v2480, 8
      %v2638 = vpop.permute.xlu0 %2637
      %2639 = vrot.lane.b32.xlu0 %v2481, 8
      %v2640 = vpop.permute.xlu0 %2639
      %2641 = vrot.lane.b32.xlu0 %v2482, 8
      %v2642 = vpop.permute.xlu0 %2641
      %2643 = vrot.lane.b32.xlu0 %v2483, 8
      %v2644 = vpop.permute.xlu0 %2643
      %2645 = vrot.lane.b32.xlu0 %v2484, 8
      %v2646 = vpop.permute.xlu0 %2645
      %2647 = vrot.lane.b32.xlu0 %v2485, 8
      %v2648 = vpop.permute.xlu0 %2647
      %2649 = vrot.lane.b32.xlu0 %v2486, 8
      %v2650 = vpop.permute.xlu0 %2649
      %2651 = vrot.lane.b32.xlu0 %v2487, 8
      %v2652 = vpop.permute.xlu0 %2651
      %2653 = vrot.lane.b32.xlu0 %v2488, 8
      %v2654 = vpop.permute.xlu0 %2653
      %2655 = vrot.lane.b32.xlu0 %v2489, 8
      %v2656 = vpop.permute.xlu0 %2655
      %2657 = vrot.lane.b32.xlu0 %v2490, 8
      %v2658 = vpop.permute.xlu0 %2657
      %2659 = vrot.lane.b32.xlu0 %v2491, 8
      %v2660 = vpop.permute.xlu0 %2659
      %2661 = vrot.lane.b32.xlu0 %v2492, 8
      %v2662 = vpop.permute.xlu0 %2661
      %2663 = vrot.lane.b32.xlu0 %v2493, 8
      %v2664 = vpop.permute.xlu0 %2663
      %2665 = vrot.lane.b32.xlu0 %v2494, 8
      %v2666 = vpop.permute.xlu0 %2665
      %2667 = vrot.lane.b32.xlu0 %v2495, 8
      %v2668 = vpop.permute.xlu0 %2667
      %2669 = vrot.lane.b32.xlu0 %v2496, 8
      %v2670 = vpop.permute.xlu0 %2669
      %2671 = vrot.lane.b32.xlu0 %v2497, 8
      %v2672 = vpop.permute.xlu0 %2671
      %2673 = vrot.lane.b32.xlu0 %v2498, 8
      %v2674 = vpop.permute.xlu0 %2673
      %2675 = vrot.lane.b32.xlu0 %v2499, 8
      %v2676 = vpop.permute.xlu0 %2675
      %2677 = vrot.lane.b32.xlu0 %v2500, 8
      %v2678 = vpop.permute.xlu0 %2677
      %2679 = vrot.lane.b32.xlu0 %v2501, 8
      %v2680 = vpop.permute.xlu0 %2679
      %2681 = vrot.lane.b32.xlu0 %v2502, 8
      %v2682 = vpop.permute.xlu0 %2681
      %2683 = vrot.lane.b32.xlu0 %v2503, 8
      %v2684 = vpop.permute.xlu0 %2683
      %2685 = vrot.lane.b32.xlu0 %v2504, 8
      %v2686 = vpop.permute.xlu0 %2685
      %2735 = vst.msk [vmem:[#allocation3 - $0x1] sm:$0xfe] %vm657, %v2592
      %2736 = vst.msk [vmem:[#allocation3 + $0x7] sm:$0xff] %vm659, %v2594
      %2737 = vst.msk [vmem:[#allocation3 + $0xf] sm:$0x1] %vm661, %v2596
      %2738 = vst.msk [vmem:[#allocation3 + $0xf] sm:$0xfe] %vm657, %v2598
      %2739 = vst.msk [vmem:[#allocation3 + $0x17] sm:$0xff] %vm659, %v2600
      %2740 = vst.msk [vmem:[#allocation3 + $0x1f] sm:$0x1] %vm661, %v2602
      %2741 = vst.msk [vmem:[#allocation3 + $0x1f] sm:$0xfe] %vm657, %v2604
      %2742 = vst.msk [vmem:[#allocation3 + $0x27] sm:$0xff] %vm659, %v2606
      %2743 = vst.msk [vmem:[#allocation3 + $0x2f] sm:$0x1] %vm661, %v2608
      %2744 = vst.msk [vmem:[#allocation3 + $0x2f] sm:$0xfe] %vm657, %v2610
      %2745 = vst.msk [vmem:[#allocation3 + $0x37] sm:$0xff] %vm659, %v2612
      %2746 = vst.msk [vmem:[#allocation3 + $0x3f] sm:$0x1] %vm661, %v2614
      %2747 = vst.msk [vmem:[#allocation3 + $0x3f] sm:$0xfe] %vm657, %v2616
      %2748 = vst.msk [vmem:[#allocation3 + $0x47] sm:$0xff] %vm659, %v2618
      %2749 = vst.msk [vmem:[#allocation3 + $0x4f] sm:$0x1] %vm661, %v2620
      %2750 = vst.msk [vmem:[#allocation3 + $0x4f] sm:$0xfe] %vm657, %v2622
      %2751 = vst.msk [vmem:[#allocation3 + $0x57] sm:$0xff] %vm659, %v2624
      %2752 = vst.msk [vmem:[#allocation3 + $0x5f] sm:$0x1] %vm661, %v2626
      %2753 = vst.msk [vmem:[#allocation3 + $0x5f] sm:$0xfe] %vm657, %v2628
      %2754 = vst.msk [vmem:[#allocation3 + $0x67] sm:$0xff] %vm659, %v2630
      %2755 = vst.msk [vmem:[#allocation3 + $0x6f] sm:$0x1] %vm661, %v2632
      %2756 = vst.msk [vmem:[#allocation3 + $0x6f] sm:$0xfe] %vm657, %v2634
      %2757 = vst.msk [vmem:[#allocation3 + $0x77] sm:$0xff] %vm659, %v2636
      %2758 = vst.msk [vmem:[#allocation3 + $0x7f] sm:$0x1] %vm661, %v2638
      %2759 = vst.msk [vmem:[#allocation3 + $0x7f] sm:$0xfe] %vm657, %v2640
      %2760 = vst.msk [vmem:[#allocation3 + $0x87] sm:$0xff] %vm659, %v2642
      %2761 = vst.msk [vmem:[#allocation3 + $0x8f] sm:$0x1] %vm661, %v2644
      %2762 = vst.msk [vmem:[#allocation3 + $0x8f] sm:$0xfe] %vm657, %v2646
      %2763 = vst.msk [vmem:[#allocation3 + $0x97] sm:$0xff] %vm659, %v2648
      %2764 = vst.msk [vmem:[#allocation3 + $0x9f] sm:$0x1] %vm661, %v2650
      %2765 = vst.msk [vmem:[#allocation3 + $0x9f] sm:$0xfe] %vm657, %v2652
      %2766 = vst.msk [vmem:[#allocation3 + $0xa7] sm:$0xff] %vm659, %v2654
      %2767 = vst.msk [vmem:[#allocation3 + $0xaf] sm:$0x1] %vm661, %v2656
      %2768 = vst.msk [vmem:[#allocation3 + $0xaf] sm:$0xfe] %vm657, %v2658
      %2769 = vst.msk [vmem:[#allocation3 + $0xb7] sm:$0xff] %vm659, %v2660
      %2770 = vst.msk [vmem:[#allocation3 + $0xbf] sm:$0x1] %vm661, %v2662
      %2771 = vst.msk [vmem:[#allocation3 + $0xbf] sm:$0xfe] %vm657, %v2664
      %2772 = vst.msk [vmem:[#allocation3 + $0xc7] sm:$0xff] %vm659, %v2666
      %2773 = vst.msk [vmem:[#allocation3 + $0xcf] sm:$0x1] %vm661, %v2668
      %2774 = vst.msk [vmem:[#allocation3 + $0xcf] sm:$0xfe] %vm657, %v2670
      %2775 = vst.msk [vmem:[#allocation3 + $0xd7] sm:$0xff] %vm659, %v2672
      %2776 = vst.msk [vmem:[#allocation3 + $0xdf] sm:$0x1] %vm661, %v2674
      %2777 = vst.msk [vmem:[#allocation3 + $0xdf] sm:$0xfe] %vm657, %v2676
      %2778 = vst.msk [vmem:[#allocation3 + $0xe7] sm:$0xff] %vm659, %v2678
      %2779 = vst.msk [vmem:[#allocation3 + $0xef] sm:$0x1] %vm661, %v2680
      %2780 = vst.msk [vmem:[#allocation3 + $0xef] sm:$0xfe] %vm657, %v2682
      %2781 = vst.msk [vmem:[#allocation3 + $0xf7] sm:$0xff] %vm659, %v2684
      %2782 = vst.msk [vmem:[#allocation3 + $0xff] sm:$0x1] %vm661, %v2686
      %2783 = vrot.lane.b32.xlu0 %v2457, 16
      %v2784 = vpop.permute.xlu0 %2783
      %2785 = vrot.lane.b32.xlu0 %v2458, 16
      %v2786 = vpop.permute.xlu0 %2785
      %2787 = vrot.lane.b32.xlu0 %v2459, 16
      %v2788 = vpop.permute.xlu0 %2787
      %2789 = vrot.lane.b32.xlu0 %v2460, 16
      %v2790 = vpop.permute.xlu0 %2789
      %2791 = vrot.lane.b32.xlu0 %v2461, 16
      %v2792 = vpop.permute.xlu0 %2791
      %2793 = vrot.lane.b32.xlu0 %v2462, 16
      %v2794 = vpop.permute.xlu0 %2793
      %2795 = vrot.lane.b32.xlu0 %v2463, 16
      %v2796 = vpop.permute.xlu0 %2795
      %2797 = vrot.lane.b32.xlu0 %v2464, 16
      %v2798 = vpop.permute.xlu0 %2797
      %2799 = vrot.lane.b32.xlu0 %v2465, 16
      %v2800 = vpop.permute.xlu0 %2799
      %2801 = vrot.lane.b32.xlu0 %v2466, 16
      %v2802 = vpop.permute.xlu0 %2801
      %2803 = vrot.lane.b32.xlu0 %v2467, 16
      %v2804 = vpop.permute.xlu0 %2803
      %2805 = vrot.lane.b32.xlu0 %v2468, 16
      %v2806 = vpop.permute.xlu0 %2805
      %2807 = vrot.lane.b32.xlu0 %v2469, 16
      %v2808 = vpop.permute.xlu0 %2807
      %2809 = vrot.lane.b32.xlu0 %v2470, 16
      %v2810 = vpop.permute.xlu0 %2809
      %2811 = vrot.lane.b32.xlu0 %v2471, 16
      %v2812 = vpop.permute.xlu0 %2811
      %2813 = vrot.lane.b32.xlu0 %v2472, 16
      %v2814 = vpop.permute.xlu0 %2813
      %2815 = vrot.lane.b32.xlu0 %v2473, 16
      %v2816 = vpop.permute.xlu0 %2815
      %2817 = vrot.lane.b32.xlu0 %v2474, 16
      %v2818 = vpop.permute.xlu0 %2817
      %2819 = vrot.lane.b32.xlu0 %v2475, 16
      %v2820 = vpop.permute.xlu0 %2819
      %2821 = vrot.lane.b32.xlu0 %v2476, 16
      %v2822 = vpop.permute.xlu0 %2821
      %2823 = vrot.lane.b32.xlu0 %v2477, 16
      %v2824 = vpop.permute.xlu0 %2823
      %2825 = vrot.lane.b32.xlu0 %v2478, 16
      %v2826 = vpop.permute.xlu0 %2825
      %2827 = vrot.lane.b32.xlu0 %v2479, 16
      %v2828 = vpop.permute.xlu0 %2827
      %2829 = vrot.lane.b32.xlu0 %v2480, 16
      %v2830 = vpop.permute.xlu0 %2829
      %2831 = vrot.lane.b32.xlu0 %v2481, 16
      %v2832 = vpop.permute.xlu0 %2831
      %2833 = vrot.lane.b32.xlu0 %v2482, 16
      %v2834 = vpop.permute.xlu0 %2833
      %2835 = vrot.lane.b32.xlu0 %v2483, 16
      %v2836 = vpop.permute.xlu0 %2835
      %2837 = vrot.lane.b32.xlu0 %v2484, 16
      %v2838 = vpop.permute.xlu0 %2837
      %2839 = vrot.lane.b32.xlu0 %v2485, 16
      %v2840 = vpop.permute.xlu0 %2839
      %2841 = vrot.lane.b32.xlu0 %v2486, 16
      %v2842 = vpop.permute.xlu0 %2841
      %2843 = vrot.lane.b32.xlu0 %v2487, 16
      %v2844 = vpop.permute.xlu0 %2843
      %2845 = vrot.lane.b32.xlu0 %v2488, 16
      %v2846 = vpop.permute.xlu0 %2845
      %2847 = vrot.lane.b32.xlu0 %v2489, 16
      %v2848 = vpop.permute.xlu0 %2847
      %2849 = vrot.lane.b32.xlu0 %v2490, 16
      %v2850 = vpop.permute.xlu0 %2849
      %2851 = vrot.lane.b32.xlu0 %v2491, 16
      %v2852 = vpop.permute.xlu0 %2851
      %2853 = vrot.lane.b32.xlu0 %v2492, 16
      %v2854 = vpop.permute.xlu0 %2853
      %2855 = vrot.lane.b32.xlu0 %v2493, 16
      %v2856 = vpop.permute.xlu0 %2855
      %2857 = vrot.lane.b32.xlu0 %v2494, 16
      %v2858 = vpop.permute.xlu0 %2857
      %2859 = vrot.lane.b32.xlu0 %v2495, 16
      %v2860 = vpop.permute.xlu0 %2859
      %2861 = vrot.lane.b32.xlu0 %v2496, 16
      %v2862 = vpop.permute.xlu0 %2861
      %2863 = vrot.lane.b32.xlu0 %v2497, 16
      %v2864 = vpop.permute.xlu0 %2863
      %2865 = vrot.lane.b32.xlu0 %v2498, 16
      %v2866 = vpop.permute.xlu0 %2865
      %2867 = vrot.lane.b32.xlu0 %v2499, 16
      %v2868 = vpop.permute.xlu0 %2867
      %2869 = vrot.lane.b32.xlu0 %v2500, 16
      %v2870 = vpop.permute.xlu0 %2869
      %2871 = vrot.lane.b32.xlu0 %v2501, 16
      %v2872 = vpop.permute.xlu0 %2871
      %2873 = vrot.lane.b32.xlu0 %v2502, 16
      %v2874 = vpop.permute.xlu0 %2873
      %2875 = vrot.lane.b32.xlu0 %v2503, 16
      %v2876 = vpop.permute.xlu0 %2875
      %2877 = vrot.lane.b32.xlu0 %v2504, 16
      %v2878 = vpop.permute.xlu0 %2877
      %2927 = vst.msk [vmem:[#allocation3 - $0x2] sm:$0xfc] %vm852, %v2784
      %2928 = vst.msk [vmem:[#allocation3 + $0x6] sm:$0xff] %vm854, %v2786
      %2929 = vst.msk [vmem:[#allocation3 + $0xe] sm:$0x3] %vm856, %v2788
      %2930 = vst.msk [vmem:[#allocation3 + $0xe] sm:$0xfc] %vm852, %v2790
      %2931 = vst.msk [vmem:[#allocation3 + $0x16] sm:$0xff] %vm854, %v2792
      %2932 = vst.msk [vmem:[#allocation3 + $0x1e] sm:$0x3] %vm856, %v2794
      %2933 = vst.msk [vmem:[#allocation3 + $0x1e] sm:$0xfc] %vm852, %v2796
      %2934 = vst.msk [vmem:[#allocation3 + $0x26] sm:$0xff] %vm854, %v2798
      %2935 = vst.msk [vmem:[#allocation3 + $0x2e] sm:$0x3] %vm856, %v2800
      %2936 = vst.msk [vmem:[#allocation3 + $0x2e] sm:$0xfc] %vm852, %v2802
      %2937 = vst.msk [vmem:[#allocation3 + $0x36] sm:$0xff] %vm854, %v2804
      %2938 = vst.msk [vmem:[#allocation3 + $0x3e] sm:$0x3] %vm856, %v2806
      %2939 = vst.msk [vmem:[#allocation3 + $0x3e] sm:$0xfc] %vm852, %v2808
      %2940 = vst.msk [vmem:[#allocation3 + $0x46] sm:$0xff] %vm854, %v2810
      %2941 = vst.msk [vmem:[#allocation3 + $0x4e] sm:$0x3] %vm856, %v2812
      %2942 = vst.msk [vmem:[#allocation3 + $0x4e] sm:$0xfc] %vm852, %v2814
      %2943 = vst.msk [vmem:[#allocation3 + $0x56] sm:$0xff] %vm854, %v2816
      %2944 = vst.msk [vmem:[#allocation3 + $0x5e] sm:$0x3] %vm856, %v2818
      %2945 = vst.msk [vmem:[#allocation3 + $0x5e] sm:$0xfc] %vm852, %v2820
      %2946 = vst.msk [vmem:[#allocation3 + $0x66] sm:$0xff] %vm854, %v2822
      %2947 = vst.msk [vmem:[#allocation3 + $0x6e] sm:$0x3] %vm856, %v2824
      %2948 = vst.msk [vmem:[#allocation3 + $0x6e] sm:$0xfc] %vm852, %v2826
      %2949 = vst.msk [vmem:[#allocation3 + $0x76] sm:$0xff] %vm854, %v2828
      %2950 = vst.msk [vmem:[#allocation3 + $0x7e] sm:$0x3] %vm856, %v2830
      %2951 = vst.msk [vmem:[#allocation3 + $0x7e] sm:$0xfc] %vm852, %v2832
      %2952 = vst.msk [vmem:[#allocation3 + $0x86] sm:$0xff] %vm854, %v2834
      %2953 = vst.msk [vmem:[#allocation3 + $0x8e] sm:$0x3] %vm856, %v2836
      %2954 = vst.msk [vmem:[#allocation3 + $0x8e] sm:$0xfc] %vm852, %v2838
      %2955 = vst.msk [vmem:[#allocation3 + $0x96] sm:$0xff] %vm854, %v2840
      %2956 = vst.msk [vmem:[#allocation3 + $0x9e] sm:$0x3] %vm856, %v2842
      %2957 = vst.msk [vmem:[#allocation3 + $0x9e] sm:$0xfc] %vm852, %v2844
      %2958 = vst.msk [vmem:[#allocation3 + $0xa6] sm:$0xff] %vm854, %v2846
      %2959 = vst.msk [vmem:[#allocation3 + $0xae] sm:$0x3] %vm856, %v2848
      %2960 = vst.msk [vmem:[#allocation3 + $0xae] sm:$0xfc] %vm852, %v2850
      %2961 = vst.msk [vmem:[#allocation3 + $0xb6] sm:$0xff] %vm854, %v2852
      %2962 = vst.msk [vmem:[#allocation3 + $0xbe] sm:$0x3] %vm856, %v2854
      %2963 = vst.msk [vmem:[#allocation3 + $0xbe] sm:$0xfc] %vm852, %v2856
      %2964 = vst.msk [vmem:[#allocation3 + $0xc6] sm:$0xff] %vm854, %v2858
      %2965 = vst.msk [vmem:[#allocation3 + $0xce] sm:$0x3] %vm856, %v2860
      %2966 = vst.msk [vmem:[#allocation3 + $0xce] sm:$0xfc] %vm852, %v2862
      %2967 = vst.msk [vmem:[#allocation3 + $0xd6] sm:$0xff] %vm854, %v2864
      %2968 = vst.msk [vmem:[#allocation3 + $0xde] sm:$0x3] %vm856, %v2866
      %2969 = vst.msk [vmem:[#allocation3 + $0xde] sm:$0xfc] %vm852, %v2868
      %2970 = vst.msk [vmem:[#allocation3 + $0xe6] sm:$0xff] %vm854, %v2870
      %2971 = vst.msk [vmem:[#allocation3 + $0xee] sm:$0x3] %vm856, %v2872
      %2972 = vst.msk [vmem:[#allocation3 + $0xee] sm:$0xfc] %vm852, %v2874
      %2973 = vst.msk [vmem:[#allocation3 + $0xf6] sm:$0xff] %vm854, %v2876
      %2974 = vst.msk [vmem:[#allocation3 + $0xfe] sm:$0x3] %vm856, %v2878
      %2977 = vrot.lane.b32.xlu0 %v2460, 24
      %v2978 = vpop.permute.xlu0 %2977
      %2979 = vrot.lane.b32.xlu0 %v2461, 24
      %v2980 = vpop.permute.xlu0 %2979
      %2981 = vrot.lane.b32.xlu0 %v2463, 24
      %v2982 = vpop.permute.xlu0 %2981
      %2983 = vrot.lane.b32.xlu0 %v2464, 24
      %v2984 = vpop.permute.xlu0 %2983
      %2985 = vrot.lane.b32.xlu0 %v2466, 24
      %v2986 = vpop.permute.xlu0 %2985
      %2987 = vrot.lane.b32.xlu0 %v2467, 24
      %v2988 = vpop.permute.xlu0 %2987
      %2989 = vrot.lane.b32.xlu0 %v2469, 24
      %v2990 = vpop.permute.xlu0 %2989
      %2991 = vrot.lane.b32.xlu0 %v2470, 24
      %v2992 = vpop.permute.xlu0 %2991
      %2993 = vrot.lane.b32.xlu0 %v2472, 24
      %v2994 = vpop.permute.xlu0 %2993
      %2995 = vrot.lane.b32.xlu0 %v2473, 24
      %v2996 = vpop.permute.xlu0 %2995
      %2997 = vrot.lane.b32.xlu0 %v2475, 24
      %v2998 = vpop.permute.xlu0 %2997
      %2999 = vrot.lane.b32.xlu0 %v2476, 24
      %v3000 = vpop.permute.xlu0 %2999
      %3001 = vrot.lane.b32.xlu0 %v2478, 24
      %v3002 = vpop.permute.xlu0 %3001
      %3003 = vrot.lane.b32.xlu0 %v2479, 24
      %v3004 = vpop.permute.xlu0 %3003
      %3005 = vrot.lane.b32.xlu0 %v2481, 24
      %v3006 = vpop.permute.xlu0 %3005
      %3007 = vrot.lane.b32.xlu0 %v2482, 24
      %v3008 = vpop.permute.xlu0 %3007
      %3009 = vrot.lane.b32.xlu0 %v2484, 24
      %v3010 = vpop.permute.xlu0 %3009
      %3011 = vrot.lane.b32.xlu0 %v2485, 24
      %v3012 = vpop.permute.xlu0 %3011
      %3013 = vrot.lane.b32.xlu0 %v2487, 24
      %v3014 = vpop.permute.xlu0 %3013
      %3015 = vrot.lane.b32.xlu0 %v2488, 24
      %v3016 = vpop.permute.xlu0 %3015
      %3017 = vrot.lane.b32.xlu0 %v2490, 24
      %v3018 = vpop.permute.xlu0 %3017
      %3019 = vrot.lane.b32.xlu0 %v2491, 24
      %v3020 = vpop.permute.xlu0 %3019
      %3021 = vrot.lane.b32.xlu0 %v2493, 24
      %v3022 = vpop.permute.xlu0 %3021
      %3023 = vrot.lane.b32.xlu0 %v2494, 24
      %v3024 = vpop.permute.xlu0 %3023
      %3025 = vrot.lane.b32.xlu0 %v2496, 24
      %v3026 = vpop.permute.xlu0 %3025
      %3027 = vrot.lane.b32.xlu0 %v2497, 24
      %v3028 = vpop.permute.xlu0 %3027
      %3029 = vrot.lane.b32.xlu0 %v2499, 24
      %v3030 = vpop.permute.xlu0 %3029
      %3031 = vrot.lane.b32.xlu0 %v2500, 24
      %v3032 = vpop.permute.xlu0 %3031
      %3033 = vrot.lane.b32.xlu0 %v2502, 24
      %v3034 = vpop.permute.xlu0 %3033
      %3035 = vrot.lane.b32.xlu0 %v2503, 24
      %v3036 = vpop.permute.xlu0 %3035
      %3037 = vrot.lane.b32.xlu0 %v2505, 24
      %v3038 = vpop.permute.xlu0 %3037
      %3039 = vrot.lane.b32.xlu0 %v2506, 24
      %v3040 = vpop.permute.xlu0 %3039
      %3073 = vst.msk [vmem:[#allocation3] sm:$0xff] %vm1001, %v2978
      %3074 = vst.msk [vmem:[#allocation3 + $0x8] sm:$0xff] %vm1001, %v2980
      %3075 = vst.msk [vmem:[#allocation3 + $0x10] sm:$0xff] %vm1001, %v2982
      %3076 = vst.msk [vmem:[#allocation3 + $0x18] sm:$0xff] %vm1001, %v2984
      %3077 = vst.msk [vmem:[#allocation3 + $0x20] sm:$0xff] %vm1001, %v2986
      %3078 = vst.msk [vmem:[#allocation3 + $0x28] sm:$0xff] %vm1001, %v2988
      %3079 = vst.msk [vmem:[#allocation3 + $0x30] sm:$0xff] %vm1001, %v2990
      %3080 = vst.msk [vmem:[#allocation3 + $0x38] sm:$0xff] %vm1001, %v2992
      %3081 = vst.msk [vmem:[#allocation3 + $0x40] sm:$0xff] %vm1001, %v2994
      %3082 = vst.msk [vmem:[#allocation3 + $0x48] sm:$0xff] %vm1001, %v2996
      %3083 = vst.msk [vmem:[#allocation3 + $0x50] sm:$0xff] %vm1001, %v2998
      %3084 = vst.msk [vmem:[#allocation3 + $0x58] sm:$0xff] %vm1001, %v3000
      %3085 = vst.msk [vmem:[#allocation3 + $0x60] sm:$0xff] %vm1001, %v3002
      %3086 = vst.msk [vmem:[#allocation3 + $0x68] sm:$0xff] %vm1001, %v3004
      %3087 = vst.msk [vmem:[#allocation3 + $0x70] sm:$0xff] %vm1001, %v3006
      %3088 = vst.msk [vmem:[#allocation3 + $0x78] sm:$0xff] %vm1001, %v3008
      %3089 = vst.msk [vmem:[#allocation3 + $0x80] sm:$0xff] %vm1001, %v3010
      %3090 = vst.msk [vmem:[#allocation3 + $0x88] sm:$0xff] %vm1001, %v3012
      %3091 = vst.msk [vmem:[#allocation3 + $0x90] sm:$0xff] %vm1001, %v3014
      %3092 = vst.msk [vmem:[#allocation3 + $0x98] sm:$0xff] %vm1001, %v3016
      %3093 = vst.msk [vmem:[#allocation3 + $0xa0] sm:$0xff] %vm1001, %v3018
      %3094 = vst.msk [vmem:[#allocation3 + $0xa8] sm:$0xff] %vm1001, %v3020
      %3095 = vst.msk [vmem:[#allocation3 + $0xb0] sm:$0xff] %vm1001, %v3022
      %3096 = vst.msk [vmem:[#allocation3 + $0xb8] sm:$0xff] %vm1001, %v3024
      %3097 = vst.msk [vmem:[#allocation3 + $0xc0] sm:$0xff] %vm1001, %v3026
      %3098 = vst.msk [vmem:[#allocation3 + $0xc8] sm:$0xff] %vm1001, %v3028
      %3099 = vst.msk [vmem:[#allocation3 + $0xd0] sm:$0xff] %vm1001, %v3030
      %3100 = vst.msk [vmem:[#allocation3 + $0xd8] sm:$0xff] %vm1001, %v3032
      %3101 = vst.msk [vmem:[#allocation3 + $0xe0] sm:$0xff] %vm1001, %v3034
      %3102 = vst.msk [vmem:[#allocation3 + $0xe8] sm:$0xff] %vm1001, %v3036
      %3103 = vst.msk [vmem:[#allocation3 + $0xf0] sm:$0xff] %vm1001, %v3038
      %3104 = vst.msk [vmem:[#allocation3 + $0xf8] sm:$0xff] %vm1001, %v3040
      %3106 = vrot.lane.b32.xlu0 %v2460, 32
      %v3107 = vpop.permute.xlu0 %3106
      %3108 = vrot.lane.b32.xlu0 %v2461, 32
      %v3109 = vpop.permute.xlu0 %3108
      %3110 = vrot.lane.b32.xlu0 %v2462, 32
      %v3111 = vpop.permute.xlu0 %3110
      %3112 = vrot.lane.b32.xlu0 %v2463, 32
      %v3113 = vpop.permute.xlu0 %3112
      %3114 = vrot.lane.b32.xlu0 %v2464, 32
      %v3115 = vpop.permute.xlu0 %3114
      %3116 = vrot.lane.b32.xlu0 %v2465, 32
      %v3117 = vpop.permute.xlu0 %3116
      %3118 = vrot.lane.b32.xlu0 %v2466, 32
      %v3119 = vpop.permute.xlu0 %3118
      %3120 = vrot.lane.b32.xlu0 %v2467, 32
      %v3121 = vpop.permute.xlu0 %3120
      %3122 = vrot.lane.b32.xlu0 %v2468, 32
      %v3123 = vpop.permute.xlu0 %3122
      %3124 = vrot.lane.b32.xlu0 %v2469, 32
      %v3125 = vpop.permute.xlu0 %3124
      %3126 = vrot.lane.b32.xlu0 %v2470, 32
      %v3127 = vpop.permute.xlu0 %3126
      %3128 = vrot.lane.b32.xlu0 %v2471, 32
      %v3129 = vpop.permute.xlu0 %3128
      %3130 = vrot.lane.b32.xlu0 %v2472, 32
      %v3131 = vpop.permute.xlu0 %3130
      %3132 = vrot.lane.b32.xlu0 %v2473, 32
      %v3133 = vpop.permute.xlu0 %3132
      %3134 = vrot.lane.b32.xlu0 %v2474, 32
      %v3135 = vpop.permute.xlu0 %3134
      %3136 = vrot.lane.b32.xlu0 %v2475, 32
      %v3137 = vpop.permute.xlu0 %3136
      %3138 = vrot.lane.b32.xlu0 %v2476, 32
      %v3139 = vpop.permute.xlu0 %3138
      %3140 = vrot.lane.b32.xlu0 %v2477, 32
      %v3141 = vpop.permute.xlu0 %3140
      %3142 = vrot.lane.b32.xlu0 %v2478, 32
      %v3143 = vpop.permute.xlu0 %3142
      %3144 = vrot.lane.b32.xlu0 %v2479, 32
      %v3145 = vpop.permute.xlu0 %3144
      %3146 = vrot.lane.b32.xlu0 %v2480, 32
      %v3147 = vpop.permute.xlu0 %3146
      %3148 = vrot.lane.b32.xlu0 %v2481, 32
      %v3149 = vpop.permute.xlu0 %3148
      %3150 = vrot.lane.b32.xlu0 %v2482, 32
      %v3151 = vpop.permute.xlu0 %3150
      %3152 = vrot.lane.b32.xlu0 %v2483, 32
      %v3153 = vpop.permute.xlu0 %3152
      %3154 = vrot.lane.b32.xlu0 %v2484, 32
      %v3155 = vpop.permute.xlu0 %3154
      %3156 = vrot.lane.b32.xlu0 %v2485, 32
      %v3157 = vpop.permute.xlu0 %3156
      %3158 = vrot.lane.b32.xlu0 %v2486, 32
      %v3159 = vpop.permute.xlu0 %3158
      %3160 = vrot.lane.b32.xlu0 %v2487, 32
      %v3161 = vpop.permute.xlu0 %3160
      %3162 = vrot.lane.b32.xlu0 %v2488, 32
      %v3163 = vpop.permute.xlu0 %3162
      %3164 = vrot.lane.b32.xlu0 %v2489, 32
      %v3165 = vpop.permute.xlu0 %3164
      %3166 = vrot.lane.b32.xlu0 %v2490, 32
      %v3167 = vpop.permute.xlu0 %3166
      %3168 = vrot.lane.b32.xlu0 %v2491, 32
      %v3169 = vpop.permute.xlu0 %3168
      %3170 = vrot.lane.b32.xlu0 %v2492, 32
      %v3171 = vpop.permute.xlu0 %3170
      %3172 = vrot.lane.b32.xlu0 %v2493, 32
      %v3173 = vpop.permute.xlu0 %3172
      %3174 = vrot.lane.b32.xlu0 %v2494, 32
      %v3175 = vpop.permute.xlu0 %3174
      %3176 = vrot.lane.b32.xlu0 %v2495, 32
      %v3177 = vpop.permute.xlu0 %3176
      %3178 = vrot.lane.b32.xlu0 %v2496, 32
      %v3179 = vpop.permute.xlu0 %3178
      %3180 = vrot.lane.b32.xlu0 %v2497, 32
      %v3181 = vpop.permute.xlu0 %3180
      %3182 = vrot.lane.b32.xlu0 %v2498, 32
      %v3183 = vpop.permute.xlu0 %3182
      %3184 = vrot.lane.b32.xlu0 %v2499, 32
      %v3185 = vpop.permute.xlu0 %3184
      %3186 = vrot.lane.b32.xlu0 %v2500, 32
      %v3187 = vpop.permute.xlu0 %3186
      %3188 = vrot.lane.b32.xlu0 %v2501, 32
      %v3189 = vpop.permute.xlu0 %3188
      %3190 = vrot.lane.b32.xlu0 %v2502, 32
      %v3191 = vpop.permute.xlu0 %3190
      %3192 = vrot.lane.b32.xlu0 %v2503, 32
      %v3193 = vpop.permute.xlu0 %3192
      %3194 = vrot.lane.b32.xlu0 %v2504, 32
      %v3195 = vpop.permute.xlu0 %3194
      %3196 = vrot.lane.b32.xlu0 %v2505, 32
      %v3197 = vpop.permute.xlu0 %3196
      %3198 = vrot.lane.b32.xlu0 %v2506, 32
      %v3199 = vpop.permute.xlu0 %3198
      %3200 = vrot.lane.b32.xlu0 %v2507, 32
      %v3201 = vpop.permute.xlu0 %3200
      %3250 = vst.msk [vmem:[#allocation3 - $0x1] sm:$0xfe] %vm1179, %v3107
      %3251 = vst.msk [vmem:[#allocation3 + $0x7] sm:$0xff] %vm1181, %v3109
      %3252 = vst.msk [vmem:[#allocation3 + $0xf] sm:$0x1] %vm1183, %v3111
      %3253 = vst.msk [vmem:[#allocation3 + $0xf] sm:$0xfe] %vm1179, %v3113
      %3254 = vst.msk [vmem:[#allocation3 + $0x17] sm:$0xff] %vm1181, %v3115
      %3255 = vst.msk [vmem:[#allocation3 + $0x1f] sm:$0x1] %vm1183, %v3117
      %3256 = vst.msk [vmem:[#allocation3 + $0x1f] sm:$0xfe] %vm1179, %v3119
      %3257 = vst.msk [vmem:[#allocation3 + $0x27] sm:$0xff] %vm1181, %v3121
      %3258 = vst.msk [vmem:[#allocation3 + $0x2f] sm:$0x1] %vm1183, %v3123
      %3259 = vst.msk [vmem:[#allocation3 + $0x2f] sm:$0xfe] %vm1179, %v3125
      %3260 = vst.msk [vmem:[#allocation3 + $0x37] sm:$0xff] %vm1181, %v3127
      %3261 = vst.msk [vmem:[#allocation3 + $0x3f] sm:$0x1] %vm1183, %v3129
      %3262 = vst.msk [vmem:[#allocation3 + $0x3f] sm:$0xfe] %vm1179, %v3131
      %3263 = vst.msk [vmem:[#allocation3 + $0x47] sm:$0xff] %vm1181, %v3133
      %3264 = vst.msk [vmem:[#allocation3 + $0x4f] sm:$0x1] %vm1183, %v3135
      %3265 = vst.msk [vmem:[#allocation3 + $0x4f] sm:$0xfe] %vm1179, %v3137
      %3266 = vst.msk [vmem:[#allocation3 + $0x57] sm:$0xff] %vm1181, %v3139
      %3267 = vst.msk [vmem:[#allocation3 + $0x5f] sm:$0x1] %vm1183, %v3141
      %3268 = vst.msk [vmem:[#allocation3 + $0x5f] sm:$0xfe] %vm1179, %v3143
      %3269 = vst.msk [vmem:[#allocation3 + $0x67] sm:$0xff] %vm1181, %v3145
      %3270 = vst.msk [vmem:[#allocation3 + $0x6f] sm:$0x1] %vm1183, %v3147
      %3271 = vst.msk [vmem:[#allocation3 + $0x6f] sm:$0xfe] %vm1179, %v3149
      %3272 = vst.msk [vmem:[#allocation3 + $0x77] sm:$0xff] %vm1181, %v3151
      %3273 = vst.msk [vmem:[#allocation3 + $0x7f] sm:$0x1] %vm1183, %v3153
      %3274 = vst.msk [vmem:[#allocation3 + $0x7f] sm:$0xfe] %vm1179, %v3155
      %3275 = vst.msk [vmem:[#allocation3 + $0x87] sm:$0xff] %vm1181, %v3157
      %3276 = vst.msk [vmem:[#allocation3 + $0x8f] sm:$0x1] %vm1183, %v3159
      %3277 = vst.msk [vmem:[#allocation3 + $0x8f] sm:$0xfe] %vm1179, %v3161
      %3278 = vst.msk [vmem:[#allocation3 + $0x97] sm:$0xff] %vm1181, %v3163
      %3279 = vst.msk [vmem:[#allocation3 + $0x9f] sm:$0x1] %vm1183, %v3165
      %3280 = vst.msk [vmem:[#allocation3 + $0x9f] sm:$0xfe] %vm1179, %v3167
      %3281 = vst.msk [vmem:[#allocation3 + $0xa7] sm:$0xff] %vm1181, %v3169
      %3282 = vst.msk [vmem:[#allocation3 + $0xaf] sm:$0x1] %vm1183, %v3171
      %3283 = vst.msk [vmem:[#allocation3 + $0xaf] sm:$0xfe] %vm1179, %v3173
      %3284 = vst.msk [vmem:[#allocation3 + $0xb7] sm:$0xff] %vm1181, %v3175
      %3285 = vst.msk [vmem:[#allocation3 + $0xbf] sm:$0x1] %vm1183, %v3177
      %3286 = vst.msk [vmem:[#allocation3 + $0xbf] sm:$0xfe] %vm1179, %v3179
      %3287 = vst.msk [vmem:[#allocation3 + $0xc7] sm:$0xff] %vm1181, %v3181
      %3288 = vst.msk [vmem:[#allocation3 + $0xcf] sm:$0x1] %vm1183, %v3183
      %3289 = vst.msk [vmem:[#allocation3 + $0xcf] sm:$0xfe] %vm1179, %v3185
      %3290 = vst.msk [vmem:[#allocation3 + $0xd7] sm:$0xff] %vm1181, %v3187
      %3291 = vst.msk [vmem:[#allocation3 + $0xdf] sm:$0x1] %vm1183, %v3189
      %3292 = vst.msk [vmem:[#allocation3 + $0xdf] sm:$0xfe] %vm1179, %v3191
      %3293 = vst.msk [vmem:[#allocation3 + $0xe7] sm:$0xff] %vm1181, %v3193
      %3294 = vst.msk [vmem:[#allocation3 + $0xef] sm:$0x1] %vm1183, %v3195
      %3295 = vst.msk [vmem:[#allocation3 + $0xef] sm:$0xfe] %vm1179, %v3197
      %3296 = vst.msk [vmem:[#allocation3 + $0xf7] sm:$0xff] %vm1181, %v3199
      %3297 = vst.msk [vmem:[#allocation3 + $0xff] sm:$0x1] %vm1183, %v3201
      %3298 = vrot.lane.b32.xlu0 %v2460, 40
      %v3299 = vpop.permute.xlu0 %3298
      %3300 = vrot.lane.b32.xlu0 %v2461, 40
      %v3301 = vpop.permute.xlu0 %3300
      %3302 = vrot.lane.b32.xlu0 %v2462, 40
      %v3303 = vpop.permute.xlu0 %3302
      %3304 = vrot.lane.b32.xlu0 %v2463, 40
      %v3305 = vpop.permute.xlu0 %3304
      %3306 = vrot.lane.b32.xlu0 %v2464, 40
      %v3307 = vpop.permute.xlu0 %3306
      %3308 = vrot.lane.b32.xlu0 %v2465, 40
      %v3309 = vpop.permute.xlu0 %3308
      %3310 = vrot.lane.b32.xlu0 %v2466, 40
      %v3311 = vpop.permute.xlu0 %3310
      %3312 = vrot.lane.b32.xlu0 %v2467, 40
      %v3313 = vpop.permute.xlu0 %3312
      %3314 = vrot.lane.b32.xlu0 %v2468, 40
      %v3315 = vpop.permute.xlu0 %3314
      %3316 = vrot.lane.b32.xlu0 %v2469, 40
      %v3317 = vpop.permute.xlu0 %3316
      %3318 = vrot.lane.b32.xlu0 %v2470, 40
      %v3319 = vpop.permute.xlu0 %3318
      %3320 = vrot.lane.b32.xlu0 %v2471, 40
      %v3321 = vpop.permute.xlu0 %3320
      %3322 = vrot.lane.b32.xlu0 %v2472, 40
      %v3323 = vpop.permute.xlu0 %3322
      %3324 = vrot.lane.b32.xlu0 %v2473, 40
      %v3325 = vpop.permute.xlu0 %3324
      %3326 = vrot.lane.b32.xlu0 %v2474, 40
      %v3327 = vpop.permute.xlu0 %3326
      %3328 = vrot.lane.b32.xlu0 %v2475, 40
      %v3329 = vpop.permute.xlu0 %3328
      %3330 = vrot.lane.b32.xlu0 %v2476, 40
      %v3331 = vpop.permute.xlu0 %3330
      %3332 = vrot.lane.b32.xlu0 %v2477, 40
      %v3333 = vpop.permute.xlu0 %3332
      %3334 = vrot.lane.b32.xlu0 %v2478, 40
      %v3335 = vpop.permute.xlu0 %3334
      %3336 = vrot.lane.b32.xlu0 %v2479, 40
      %v3337 = vpop.permute.xlu0 %3336
      %3338 = vrot.lane.b32.xlu0 %v2480, 40
      %v3339 = vpop.permute.xlu0 %3338
      %3340 = vrot.lane.b32.xlu0 %v2481, 40
      %v3341 = vpop.permute.xlu0 %3340
      %3342 = vrot.lane.b32.xlu0 %v2482, 40
      %v3343 = vpop.permute.xlu0 %3342
      %3344 = vrot.lane.b32.xlu0 %v2483, 40
      %v3345 = vpop.permute.xlu0 %3344
      %3346 = vrot.lane.b32.xlu0 %v2484, 40
      %v3347 = vpop.permute.xlu0 %3346
      %3348 = vrot.lane.b32.xlu0 %v2485, 40
      %v3349 = vpop.permute.xlu0 %3348
      %3350 = vrot.lane.b32.xlu0 %v2486, 40
      %v3351 = vpop.permute.xlu0 %3350
      %3352 = vrot.lane.b32.xlu0 %v2487, 40
      %v3353 = vpop.permute.xlu0 %3352
      %3354 = vrot.lane.b32.xlu0 %v2488, 40
      %v3355 = vpop.permute.xlu0 %3354
      %3356 = vrot.lane.b32.xlu0 %v2489, 40
      %v3357 = vpop.permute.xlu0 %3356
      %3358 = vrot.lane.b32.xlu0 %v2490, 40
      %v3359 = vpop.permute.xlu0 %3358
      %3360 = vrot.lane.b32.xlu0 %v2491, 40
      %v3361 = vpop.permute.xlu0 %3360
      %3362 = vrot.lane.b32.xlu0 %v2492, 40
      %v3363 = vpop.permute.xlu0 %3362
      %3364 = vrot.lane.b32.xlu0 %v2493, 40
      %v3365 = vpop.permute.xlu0 %3364
      %3366 = vrot.lane.b32.xlu0 %v2494, 40
      %v3367 = vpop.permute.xlu0 %3366
      %3368 = vrot.lane.b32.xlu0 %v2495, 40
      %v3369 = vpop.permute.xlu0 %3368
      %3370 = vrot.lane.b32.xlu0 %v2496, 40
      %v3371 = vpop.permute.xlu0 %3370
      %3372 = vrot.lane.b32.xlu0 %v2497, 40
      %v3373 = vpop.permute.xlu0 %3372
      %3374 = vrot.lane.b32.xlu0 %v2498, 40
      %v3375 = vpop.permute.xlu0 %3374
      %3376 = vrot.lane.b32.xlu0 %v2499, 40
      %v3377 = vpop.permute.xlu0 %3376
      %3378 = vrot.lane.b32.xlu0 %v2500, 40
      %v3379 = vpop.permute.xlu0 %3378
      %3380 = vrot.lane.b32.xlu0 %v2501, 40
      %v3381 = vpop.permute.xlu0 %3380
      %3382 = vrot.lane.b32.xlu0 %v2502, 40
      %v3383 = vpop.permute.xlu0 %3382
      %3384 = vrot.lane.b32.xlu0 %v2503, 40
      %v3385 = vpop.permute.xlu0 %3384
      %3386 = vrot.lane.b32.xlu0 %v2504, 40
      %v3387 = vpop.permute.xlu0 %3386
      %3388 = vrot.lane.b32.xlu0 %v2505, 40
      %v3389 = vpop.permute.xlu0 %3388
      %3390 = vrot.lane.b32.xlu0 %v2506, 40
      %v3391 = vpop.permute.xlu0 %3390
      %3392 = vrot.lane.b32.xlu0 %v2507, 40
      %v3393 = vpop.permute.xlu0 %3392
      %3442 = vst.msk [vmem:[#allocation3 - $0x2] sm:$0xfc] %vm1374, %v3299
      %3443 = vst.msk [vmem:[#allocation3 + $0x6] sm:$0xff] %vm1376, %v3301
      %3444 = vst.msk [vmem:[#allocation3 + $0xe] sm:$0x3] %vm1378, %v3303
      %3445 = vst.msk [vmem:[#allocation3 + $0xe] sm:$0xfc] %vm1374, %v3305
      %3446 = vst.msk [vmem:[#allocation3 + $0x16] sm:$0xff] %vm1376, %v3307
      %3447 = vst.msk [vmem:[#allocation3 + $0x1e] sm:$0x3] %vm1378, %v3309
      %3448 = vst.msk [vmem:[#allocation3 + $0x1e] sm:$0xfc] %vm1374, %v3311
      %3449 = vst.msk [vmem:[#allocation3 + $0x26] sm:$0xff] %vm1376, %v3313
      %3450 = vst.msk [vmem:[#allocation3 + $0x2e] sm:$0x3] %vm1378, %v3315
      %3451 = vst.msk [vmem:[#allocation3 + $0x2e] sm:$0xfc] %vm1374, %v3317
      %3452 = vst.msk [vmem:[#allocation3 + $0x36] sm:$0xff] %vm1376, %v3319
      %3453 = vst.msk [vmem:[#allocation3 + $0x3e] sm:$0x3] %vm1378, %v3321
      %3454 = vst.msk [vmem:[#allocation3 + $0x3e] sm:$0xfc] %vm1374, %v3323
      %3455 = vst.msk [vmem:[#allocation3 + $0x46] sm:$0xff] %vm1376, %v3325
      %3456 = vst.msk [vmem:[#allocation3 + $0x4e] sm:$0x3] %vm1378, %v3327
      %3457 = vst.msk [vmem:[#allocation3 + $0x4e] sm:$0xfc] %vm1374, %v3329
      %3458 = vst.msk [vmem:[#allocation3 + $0x56] sm:$0xff] %vm1376, %v3331
      %3459 = vst.msk [vmem:[#allocation3 + $0x5e] sm:$0x3] %vm1378, %v3333
      %3460 = vst.msk [vmem:[#allocation3 + $0x5e] sm:$0xfc] %vm1374, %v3335
      %3461 = vst.msk [vmem:[#allocation3 + $0x66] sm:$0xff] %vm1376, %v3337
      %3462 = vst.msk [vmem:[#allocation3 + $0x6e] sm:$0x3] %vm1378, %v3339
      %3463 = vst.msk [vmem:[#allocation3 + $0x6e] sm:$0xfc] %vm1374, %v3341
      %3464 = vst.msk [vmem:[#allocation3 + $0x76] sm:$0xff] %vm1376, %v3343
      %3465 = vst.msk [vmem:[#allocation3 + $0x7e] sm:$0x3] %vm1378, %v3345
      %3466 = vst.msk [vmem:[#allocation3 + $0x7e] sm:$0xfc] %vm1374, %v3347
      %3467 = vst.msk [vmem:[#allocation3 + $0x86] sm:$0xff] %vm1376, %v3349
      %3468 = vst.msk [vmem:[#allocation3 + $0x8e] sm:$0x3] %vm1378, %v3351
      %3469 = vst.msk [vmem:[#allocation3 + $0x8e] sm:$0xfc] %vm1374, %v3353
      %3470 = vst.msk [vmem:[#allocation3 + $0x96] sm:$0xff] %vm1376, %v3355
      %3471 = vst.msk [vmem:[#allocation3 + $0x9e] sm:$0x3] %vm1378, %v3357
      %3472 = vst.msk [vmem:[#allocation3 + $0x9e] sm:$0xfc] %vm1374, %v3359
      %3473 = vst.msk [vmem:[#allocation3 + $0xa6] sm:$0xff] %vm1376, %v3361
      %3474 = vst.msk [vmem:[#allocation3 + $0xae] sm:$0x3] %vm1378, %v3363
      %3475 = vst.msk [vmem:[#allocation3 + $0xae] sm:$0xfc] %vm1374, %v3365
      %3476 = vst.msk [vmem:[#allocation3 + $0xb6] sm:$0xff] %vm1376, %v3367
      %3477 = vst.msk [vmem:[#allocation3 + $0xbe] sm:$0x3] %vm1378, %v3369
      %3478 = vst.msk [vmem:[#allocation3 + $0xbe] sm:$0xfc] %vm1374, %v3371
      %3479 = vst.msk [vmem:[#allocation3 + $0xc6] sm:$0xff] %vm1376, %v3373
      %3480 = vst.msk [vmem:[#allocation3 + $0xce] sm:$0x3] %vm1378, %v3375
      %3481 = vst.msk [vmem:[#allocation3 + $0xce] sm:$0xfc] %vm1374, %v3377
      %3482 = vst.msk [vmem:[#allocation3 + $0xd6] sm:$0xff] %vm1376, %v3379
      %3483 = vst.msk [vmem:[#allocation3 + $0xde] sm:$0x3] %vm1378, %v3381
      %3484 = vst.msk [vmem:[#allocation3 + $0xde] sm:$0xfc] %vm1374, %v3383
      %3485 = vst.msk [vmem:[#allocation3 + $0xe6] sm:$0xff] %vm1376, %v3385
      %3486 = vst.msk [vmem:[#allocation3 + $0xee] sm:$0x3] %vm1378, %v3387
      %3487 = vst.msk [vmem:[#allocation3 + $0xee] sm:$0xfc] %vm1374, %v3389
      %3488 = vst.msk [vmem:[#allocation3 + $0xf6] sm:$0xff] %vm1376, %v3391
      %3489 = vst.msk [vmem:[#allocation3 + $0xfe] sm:$0x3] %vm1378, %v3393
      %3492 = vrot.lane.b32.xlu0 %v2463, 48
      %v3493 = vpop.permute.xlu0 %3492
      %3494 = vrot.lane.b32.xlu0 %v2464, 48
      %v3495 = vpop.permute.xlu0 %3494
      %3496 = vrot.lane.b32.xlu0 %v2466, 48
      %v3497 = vpop.permute.xlu0 %3496
      %3498 = vrot.lane.b32.xlu0 %v2467, 48
      %v3499 = vpop.permute.xlu0 %3498
      %3500 = vrot.lane.b32.xlu0 %v2469, 48
      %v3501 = vpop.permute.xlu0 %3500
      %3502 = vrot.lane.b32.xlu0 %v2470, 48
      %v3503 = vpop.permute.xlu0 %3502
      %3504 = vrot.lane.b32.xlu0 %v2472, 48
      %v3505 = vpop.permute.xlu0 %3504
      %3506 = vrot.lane.b32.xlu0 %v2473, 48
      %v3507 = vpop.permute.xlu0 %3506
      %3508 = vrot.lane.b32.xlu0 %v2475, 48
      %v3509 = vpop.permute.xlu0 %3508
      %3510 = vrot.lane.b32.xlu0 %v2476, 48
      %v3511 = vpop.permute.xlu0 %3510
      %3512 = vrot.lane.b32.xlu0 %v2478, 48
      %v3513 = vpop.permute.xlu0 %3512
      %3514 = vrot.lane.b32.xlu0 %v2479, 48
      %v3515 = vpop.permute.xlu0 %3514
      %3516 = vrot.lane.b32.xlu0 %v2481, 48
      %v3517 = vpop.permute.xlu0 %3516
      %3518 = vrot.lane.b32.xlu0 %v2482, 48
      %v3519 = vpop.permute.xlu0 %3518
      %3520 = vrot.lane.b32.xlu0 %v2484, 48
      %v3521 = vpop.permute.xlu0 %3520
      %3522 = vrot.lane.b32.xlu0 %v2485, 48
      %v3523 = vpop.permute.xlu0 %3522
      %3524 = vrot.lane.b32.xlu0 %v2487, 48
      %v3525 = vpop.permute.xlu0 %3524
      %3526 = vrot.lane.b32.xlu0 %v2488, 48
      %v3527 = vpop.permute.xlu0 %3526
      %3528 = vrot.lane.b32.xlu0 %v2490, 48
      %v3529 = vpop.permute.xlu0 %3528
      %3530 = vrot.lane.b32.xlu0 %v2491, 48
      %v3531 = vpop.permute.xlu0 %3530
      %3532 = vrot.lane.b32.xlu0 %v2493, 48
      %v3533 = vpop.permute.xlu0 %3532
      %3534 = vrot.lane.b32.xlu0 %v2494, 48
      %v3535 = vpop.permute.xlu0 %3534
      %3536 = vrot.lane.b32.xlu0 %v2496, 48
      %v3537 = vpop.permute.xlu0 %3536
      %3538 = vrot.lane.b32.xlu0 %v2497, 48
      %v3539 = vpop.permute.xlu0 %3538
      %3540 = vrot.lane.b32.xlu0 %v2499, 48
      %v3541 = vpop.permute.xlu0 %3540
      %3542 = vrot.lane.b32.xlu0 %v2500, 48
      %v3543 = vpop.permute.xlu0 %3542
      %3544 = vrot.lane.b32.xlu0 %v2502, 48
      %v3545 = vpop.permute.xlu0 %3544
      %3546 = vrot.lane.b32.xlu0 %v2503, 48
      %v3547 = vpop.permute.xlu0 %3546
      %3548 = vrot.lane.b32.xlu0 %v2505, 48
      %v3549 = vpop.permute.xlu0 %3548
      %3550 = vrot.lane.b32.xlu0 %v2506, 48
      %v3551 = vpop.permute.xlu0 %3550
      %3552 = vrot.lane.b32.xlu0 %v2508, 48
      %v3553 = vpop.permute.xlu0 %3552
      %3554 = vrot.lane.b32.xlu0 %v2509, 48
      %v3555 = vpop.permute.xlu0 %3554
      %3588 = vst.msk [vmem:[#allocation3] sm:$0xff] %vm1523, %v3493
      %3589 = vst.msk [vmem:[#allocation3 + $0x8] sm:$0xff] %vm1523, %v3495
      %3590 = vst.msk [vmem:[#allocation3 + $0x10] sm:$0xff] %vm1523, %v3497
      %3591 = vst.msk [vmem:[#allocation3 + $0x18] sm:$0xff] %vm1523, %v3499
      %3592 = vst.msk [vmem:[#allocation3 + $0x20] sm:$0xff] %vm1523, %v3501
      %3593 = vst.msk [vmem:[#allocation3 + $0x28] sm:$0xff] %vm1523, %v3503
      %3594 = vst.msk [vmem:[#allocation3 + $0x30] sm:$0xff] %vm1523, %v3505
      %3595 = vst.msk [vmem:[#allocation3 + $0x38] sm:$0xff] %vm1523, %v3507
      %3596 = vst.msk [vmem:[#allocation3 + $0x40] sm:$0xff] %vm1523, %v3509
      %3597 = vst.msk [vmem:[#allocation3 + $0x48] sm:$0xff] %vm1523, %v3511
      %3598 = vst.msk [vmem:[#allocation3 + $0x50] sm:$0xff] %vm1523, %v3513
      %3599 = vst.msk [vmem:[#allocation3 + $0x58] sm:$0xff] %vm1523, %v3515
      %3600 = vst.msk [vmem:[#allocation3 + $0x60] sm:$0xff] %vm1523, %v3517
      %3601 = vst.msk [vmem:[#allocation3 + $0x68] sm:$0xff] %vm1523, %v3519
      %3602 = vst.msk [vmem:[#allocation3 + $0x70] sm:$0xff] %vm1523, %v3521
      %3603 = vst.msk [vmem:[#allocation3 + $0x78] sm:$0xff] %vm1523, %v3523
      %3604 = vst.msk [vmem:[#allocation3 + $0x80] sm:$0xff] %vm1523, %v3525
      %3605 = vst.msk [vmem:[#allocation3 + $0x88] sm:$0xff] %vm1523, %v3527
      %3606 = vst.msk [vmem:[#allocation3 + $0x90] sm:$0xff] %vm1523, %v3529
      %3607 = vst.msk [vmem:[#allocation3 + $0x98] sm:$0xff] %vm1523, %v3531
      %3608 = vst.msk [vmem:[#allocation3 + $0xa0] sm:$0xff] %vm1523, %v3533
      %3609 = vst.msk [vmem:[#allocation3 + $0xa8] sm:$0xff] %vm1523, %v3535
      %3610 = vst.msk [vmem:[#allocation3 + $0xb0] sm:$0xff] %vm1523, %v3537
      %3611 = vst.msk [vmem:[#allocation3 + $0xb8] sm:$0xff] %vm1523, %v3539
      %3612 = vst.msk [vmem:[#allocation3 + $0xc0] sm:$0xff] %vm1523, %v3541
      %3613 = vst.msk [vmem:[#allocation3 + $0xc8] sm:$0xff] %vm1523, %v3543
      %3614 = vst.msk [vmem:[#allocation3 + $0xd0] sm:$0xff] %vm1523, %v3545
      %3615 = vst.msk [vmem:[#allocation3 + $0xd8] sm:$0xff] %vm1523, %v3547
      %3616 = vst.msk [vmem:[#allocation3 + $0xe0] sm:$0xff] %vm1523, %v3549
      %3617 = vst.msk [vmem:[#allocation3 + $0xe8] sm:$0xff] %vm1523, %v3551
      %3618 = vst.msk [vmem:[#allocation3 + $0xf0] sm:$0xff] %vm1523, %v3553
      %3619 = vst.msk [vmem:[#allocation3 + $0xf8] sm:$0xff] %vm1523, %v3555
      %3621 = vrot.lane.b32.xlu0 %v2463, 56
      %v3622 = vpop.permute.xlu0 %3621
      %3623 = vrot.lane.b32.xlu0 %v2464, 56
      %v3624 = vpop.permute.xlu0 %3623
      %3625 = vrot.lane.b32.xlu0 %v2465, 56
      %v3626 = vpop.permute.xlu0 %3625
      %3627 = vrot.lane.b32.xlu0 %v2466, 56
      %v3628 = vpop.permute.xlu0 %3627
      %3629 = vrot.lane.b32.xlu0 %v2467, 56
      %v3630 = vpop.permute.xlu0 %3629
      %3631 = vrot.lane.b32.xlu0 %v2468, 56
      %v3632 = vpop.permute.xlu0 %3631
      %3633 = vrot.lane.b32.xlu0 %v2469, 56
      %v3634 = vpop.permute.xlu0 %3633
      %3635 = vrot.lane.b32.xlu0 %v2470, 56
      %v3636 = vpop.permute.xlu0 %3635
      %3637 = vrot.lane.b32.xlu0 %v2471, 56
      %v3638 = vpop.permute.xlu0 %3637
      %3639 = vrot.lane.b32.xlu0 %v2472, 56
      %v3640 = vpop.permute.xlu0 %3639
      %3641 = vrot.lane.b32.xlu0 %v2473, 56
      %v3642 = vpop.permute.xlu0 %3641
      %3643 = vrot.lane.b32.xlu0 %v2474, 56
      %v3644 = vpop.permute.xlu0 %3643
      %3645 = vrot.lane.b32.xlu0 %v2475, 56
      %v3646 = vpop.permute.xlu0 %3645
      %3647 = vrot.lane.b32.xlu0 %v2476, 56
      %v3648 = vpop.permute.xlu0 %3647
      %3649 = vrot.lane.b32.xlu0 %v2477, 56
      %v3650 = vpop.permute.xlu0 %3649
      %3651 = vrot.lane.b32.xlu0 %v2478, 56
      %v3652 = vpop.permute.xlu0 %3651
      %3653 = vrot.lane.b32.xlu0 %v2479, 56
      %v3654 = vpop.permute.xlu0 %3653
      %3655 = vrot.lane.b32.xlu0 %v2480, 56
      %v3656 = vpop.permute.xlu0 %3655
      %3657 = vrot.lane.b32.xlu0 %v2481, 56
      %v3658 = vpop.permute.xlu0 %3657
      %3659 = vrot.lane.b32.xlu0 %v2482, 56
      %v3660 = vpop.permute.xlu0 %3659
      %3661 = vrot.lane.b32.xlu0 %v2483, 56
      %v3662 = vpop.permute.xlu0 %3661
      %3663 = vrot.lane.b32.xlu0 %v2484, 56
      %v3664 = vpop.permute.xlu0 %3663
      %3665 = vrot.lane.b32.xlu0 %v2485, 56
      %v3666 = vpop.permute.xlu0 %3665
      %3667 = vrot.lane.b32.xlu0 %v2486, 56
      %v3668 = vpop.permute.xlu0 %3667
      %3669 = vrot.lane.b32.xlu0 %v2487, 56
      %v3670 = vpop.permute.xlu0 %3669
      %3671 = vrot.lane.b32.xlu0 %v2488, 56
      %v3672 = vpop.permute.xlu0 %3671
      %3673 = vrot.lane.b32.xlu0 %v2489, 56
      %v3674 = vpop.permute.xlu0 %3673
      %3675 = vrot.lane.b32.xlu0 %v2490, 56
      %v3676 = vpop.permute.xlu0 %3675
      %3677 = vrot.lane.b32.xlu0 %v2491, 56
      %v3678 = vpop.permute.xlu0 %3677
      %3679 = vrot.lane.b32.xlu0 %v2492, 56
      %v3680 = vpop.permute.xlu0 %3679
      %3681 = vrot.lane.b32.xlu0 %v2493, 56
      %v3682 = vpop.permute.xlu0 %3681
      %3683 = vrot.lane.b32.xlu0 %v2494, 56
      %v3684 = vpop.permute.xlu0 %3683
      %3685 = vrot.lane.b32.xlu0 %v2495, 56
      %v3686 = vpop.permute.xlu0 %3685
      %3687 = vrot.lane.b32.xlu0 %v2496, 56
      %v3688 = vpop.permute.xlu0 %3687
      %3689 = vrot.lane.b32.xlu0 %v2497, 56
      %v3690 = vpop.permute.xlu0 %3689
      %3691 = vrot.lane.b32.xlu0 %v2498, 56
      %v3692 = vpop.permute.xlu0 %3691
      %3693 = vrot.lane.b32.xlu0 %v2499, 56
      %v3694 = vpop.permute.xlu0 %3693
      %3695 = vrot.lane.b32.xlu0 %v2500, 56
      %v3696 = vpop.permute.xlu0 %3695
      %3697 = vrot.lane.b32.xlu0 %v2501, 56
      %v3698 = vpop.permute.xlu0 %3697
      %3699 = vrot.lane.b32.xlu0 %v2502, 56
      %v3700 = vpop.permute.xlu0 %3699
      %3701 = vrot.lane.b32.xlu0 %v2503, 56
      %v3702 = vpop.permute.xlu0 %3701
      %3703 = vrot.lane.b32.xlu0 %v2504, 56
      %v3704 = vpop.permute.xlu0 %3703
      %3705 = vrot.lane.b32.xlu0 %v2505, 56
      %v3706 = vpop.permute.xlu0 %3705
      %3707 = vrot.lane.b32.xlu0 %v2506, 56
      %v3708 = vpop.permute.xlu0 %3707
      %3709 = vrot.lane.b32.xlu0 %v2507, 56
      %v3710 = vpop.permute.xlu0 %3709
      %3711 = vrot.lane.b32.xlu0 %v2508, 56
      %v3712 = vpop.permute.xlu0 %3711
      %3713 = vrot.lane.b32.xlu0 %v2509, 56
      %v3714 = vpop.permute.xlu0 %3713
      %3715 = vrot.lane.b32.xlu0 %v2510, 56
      %v3716 = vpop.permute.xlu0 %3715
      %3765 = vst.msk [vmem:[#allocation3 - $0x1] sm:$0xfe] %vm1701, %v3622
      %3766 = vst.msk [vmem:[#allocation3 + $0x7] sm:$0xff] %vm1703, %v3624
      %3767 = vst.msk [vmem:[#allocation3 + $0xf] sm:$0x1] %vm1705, %v3626
      %3768 = vst.msk [vmem:[#allocation3 + $0xf] sm:$0xfe] %vm1701, %v3628
      %3769 = vst.msk [vmem:[#allocation3 + $0x17] sm:$0xff] %vm1703, %v3630
      %3770 = vst.msk [vmem:[#allocation3 + $0x1f] sm:$0x1] %vm1705, %v3632
      %3771 = vst.msk [vmem:[#allocation3 + $0x1f] sm:$0xfe] %vm1701, %v3634
      %3772 = vst.msk [vmem:[#allocation3 + $0x27] sm:$0xff] %vm1703, %v3636
      %3773 = vst.msk [vmem:[#allocation3 + $0x2f] sm:$0x1] %vm1705, %v3638
      %3774 = vst.msk [vmem:[#allocation3 + $0x2f] sm:$0xfe] %vm1701, %v3640
      %3775 = vst.msk [vmem:[#allocation3 + $0x37] sm:$0xff] %vm1703, %v3642
      %3776 = vst.msk [vmem:[#allocation3 + $0x3f] sm:$0x1] %vm1705, %v3644
      %3777 = vst.msk [vmem:[#allocation3 + $0x3f] sm:$0xfe] %vm1701, %v3646
      %3778 = vst.msk [vmem:[#allocation3 + $0x47] sm:$0xff] %vm1703, %v3648
      %3779 = vst.msk [vmem:[#allocation3 + $0x4f] sm:$0x1] %vm1705, %v3650
      %3780 = vst.msk [vmem:[#allocation3 + $0x4f] sm:$0xfe] %vm1701, %v3652
      %3781 = vst.msk [vmem:[#allocation3 + $0x57] sm:$0xff] %vm1703, %v3654
      %3782 = vst.msk [vmem:[#allocation3 + $0x5f] sm:$0x1] %vm1705, %v3656
      %3783 = vst.msk [vmem:[#allocation3 + $0x5f] sm:$0xfe] %vm1701, %v3658
      %3784 = vst.msk [vmem:[#allocation3 + $0x67] sm:$0xff] %vm1703, %v3660
      %3785 = vst.msk [vmem:[#allocation3 + $0x6f] sm:$0x1] %vm1705, %v3662
      %3786 = vst.msk [vmem:[#allocation3 + $0x6f] sm:$0xfe] %vm1701, %v3664
      %3787 = vst.msk [vmem:[#allocation3 + $0x77] sm:$0xff] %vm1703, %v3666
      %3788 = vst.msk [vmem:[#allocation3 + $0x7f] sm:$0x1] %vm1705, %v3668
      %3789 = vst.msk [vmem:[#allocation3 + $0x7f] sm:$0xfe] %vm1701, %v3670
      %3790 = vst.msk [vmem:[#allocation3 + $0x87] sm:$0xff] %vm1703, %v3672
      %3791 = vst.msk [vmem:[#allocation3 + $0x8f] sm:$0x1] %vm1705, %v3674
      %3792 = vst.msk [vmem:[#allocation3 + $0x8f] sm:$0xfe] %vm1701, %v3676
      %3793 = vst.msk [vmem:[#allocation3 + $0x97] sm:$0xff] %vm1703, %v3678
      %3794 = vst.msk [vmem:[#allocation3 + $0x9f] sm:$0x1] %vm1705, %v3680
      %3795 = vst.msk [vmem:[#allocation3 + $0x9f] sm:$0xfe] %vm1701, %v3682
      %3796 = vst.msk [vmem:[#allocation3 + $0xa7] sm:$0xff] %vm1703, %v3684
      %3797 = vst.msk [vmem:[#allocation3 + $0xaf] sm:$0x1] %vm1705, %v3686
      %3798 = vst.msk [vmem:[#allocation3 + $0xaf] sm:$0xfe] %vm1701, %v3688
      %3799 = vst.msk [vmem:[#allocation3 + $0xb7] sm:$0xff] %vm1703, %v3690
      %3800 = vst.msk [vmem:[#allocation3 + $0xbf] sm:$0x1] %vm1705, %v3692
      %3801 = vst.msk [vmem:[#allocation3 + $0xbf] sm:$0xfe] %vm1701, %v3694
      %3802 = vst.msk [vmem:[#allocation3 + $0xc7] sm:$0xff] %vm1703, %v3696
      %3803 = vst.msk [vmem:[#allocation3 + $0xcf] sm:$0x1] %vm1705, %v3698
      %3804 = vst.msk [vmem:[#allocation3 + $0xcf] sm:$0xfe] %vm1701, %v3700
      %3805 = vst.msk [vmem:[#allocation3 + $0xd7] sm:$0xff] %vm1703, %v3702
      %3806 = vst.msk [vmem:[#allocation3 + $0xdf] sm:$0x1] %vm1705, %v3704
      %3807 = vst.msk [vmem:[#allocation3 + $0xdf] sm:$0xfe] %vm1701, %v3706
      %3808 = vst.msk [vmem:[#allocation3 + $0xe7] sm:$0xff] %vm1703, %v3708
      %3809 = vst.msk [vmem:[#allocation3 + $0xef] sm:$0x1] %vm1705, %v3710
      %3810 = vst.msk [vmem:[#allocation3 + $0xef] sm:$0xfe] %vm1701, %v3712
      %3811 = vst.msk [vmem:[#allocation3 + $0xf7] sm:$0xff] %vm1703, %v3714
      %3812 = vst.msk [vmem:[#allocation3 + $0xff] sm:$0x1] %vm1705, %v3716
      %3813 = vrot.lane.b32.xlu0 %v2463, 64
      %v3814 = vpop.permute.xlu0 %3813
      %3815 = vrot.lane.b32.xlu0 %v2464, 64
      %v3816 = vpop.permute.xlu0 %3815
      %3817 = vrot.lane.b32.xlu0 %v2465, 64
      %v3818 = vpop.permute.xlu0 %3817
      %3819 = vrot.lane.b32.xlu0 %v2466, 64
      %v3820 = vpop.permute.xlu0 %3819
      %3821 = vrot.lane.b32.xlu0 %v2467, 64
      %v3822 = vpop.permute.xlu0 %3821
      %3823 = vrot.lane.b32.xlu0 %v2468, 64
      %v3824 = vpop.permute.xlu0 %3823
      %3825 = vrot.lane.b32.xlu0 %v2469, 64
      %v3826 = vpop.permute.xlu0 %3825
      %3827 = vrot.lane.b32.xlu0 %v2470, 64
      %v3828 = vpop.permute.xlu0 %3827
      %3829 = vrot.lane.b32.xlu0 %v2471, 64
      %v3830 = vpop.permute.xlu0 %3829
      %3831 = vrot.lane.b32.xlu0 %v2472, 64
      %v3832 = vpop.permute.xlu0 %3831
      %3833 = vrot.lane.b32.xlu0 %v2473, 64
      %v3834 = vpop.permute.xlu0 %3833
      %3835 = vrot.lane.b32.xlu0 %v2474, 64
      %v3836 = vpop.permute.xlu0 %3835
      %3837 = vrot.lane.b32.xlu0 %v2475, 64
      %v3838 = vpop.permute.xlu0 %3837
      %3839 = vrot.lane.b32.xlu0 %v2476, 64
      %v3840 = vpop.permute.xlu0 %3839
      %3841 = vrot.lane.b32.xlu0 %v2477, 64
      %v3842 = vpop.permute.xlu0 %3841
      %3843 = vrot.lane.b32.xlu0 %v2478, 64
      %v3844 = vpop.permute.xlu0 %3843
      %3845 = vrot.lane.b32.xlu0 %v2479, 64
      %v3846 = vpop.permute.xlu0 %3845
      %3847 = vrot.lane.b32.xlu0 %v2480, 64
      %v3848 = vpop.permute.xlu0 %3847
      %3849 = vrot.lane.b32.xlu0 %v2481, 64
      %v3850 = vpop.permute.xlu0 %3849
      %3851 = vrot.lane.b32.xlu0 %v2482, 64
      %v3852 = vpop.permute.xlu0 %3851
      %3853 = vrot.lane.b32.xlu0 %v2483, 64
      %v3854 = vpop.permute.xlu0 %3853
      %3855 = vrot.lane.b32.xlu0 %v2484, 64
      %v3856 = vpop.permute.xlu0 %3855
      %3857 = vrot.lane.b32.xlu0 %v2485, 64
      %v3858 = vpop.permute.xlu0 %3857
      %3859 = vrot.lane.b32.xlu0 %v2486, 64
      %v3860 = vpop.permute.xlu0 %3859
      %3861 = vrot.lane.b32.xlu0 %v2487, 64
      %v3862 = vpop.permute.xlu0 %3861
      %3863 = vrot.lane.b32.xlu0 %v2488, 64
      %v3864 = vpop.permute.xlu0 %3863
      %3865 = vrot.lane.b32.xlu0 %v2489, 64
      %v3866 = vpop.permute.xlu0 %3865
      %3867 = vrot.lane.b32.xlu0 %v2490, 64
      %v3868 = vpop.permute.xlu0 %3867
      %3869 = vrot.lane.b32.xlu0 %v2491, 64
      %v3870 = vpop.permute.xlu0 %3869
      %3871 = vrot.lane.b32.xlu0 %v2492, 64
      %v3872 = vpop.permute.xlu0 %3871
      %3873 = vrot.lane.b32.xlu0 %v2493, 64
      %v3874 = vpop.permute.xlu0 %3873
      %3875 = vrot.lane.b32.xlu0 %v2494, 64
      %v3876 = vpop.permute.xlu0 %3875
      %3877 = vrot.lane.b32.xlu0 %v2495, 64
      %v3878 = vpop.permute.xlu0 %3877
      %3879 = vrot.lane.b32.xlu0 %v2496, 64
      %v3880 = vpop.permute.xlu0 %3879
      %3881 = vrot.lane.b32.xlu0 %v2497, 64
      %v3882 = vpop.permute.xlu0 %3881
      %3883 = vrot.lane.b32.xlu0 %v2498, 64
      %v3884 = vpop.permute.xlu0 %3883
      %3885 = vrot.lane.b32.xlu0 %v2499, 64
      %v3886 = vpop.permute.xlu0 %3885
      %3887 = vrot.lane.b32.xlu0 %v2500, 64
      %v3888 = vpop.permute.xlu0 %3887
      %3889 = vrot.lane.b32.xlu0 %v2501, 64
      %v3890 = vpop.permute.xlu0 %3889
      %3891 = vrot.lane.b32.xlu0 %v2502, 64
      %v3892 = vpop.permute.xlu0 %3891
      %3893 = vrot.lane.b32.xlu0 %v2503, 64
      %v3894 = vpop.permute.xlu0 %3893
      %3895 = vrot.lane.b32.xlu0 %v2504, 64
      %v3896 = vpop.permute.xlu0 %3895
      %3897 = vrot.lane.b32.xlu0 %v2505, 64
      %v3898 = vpop.permute.xlu0 %3897
      %3899 = vrot.lane.b32.xlu0 %v2506, 64
      %v3900 = vpop.permute.xlu0 %3899
      %3901 = vrot.lane.b32.xlu0 %v2507, 64
      %v3902 = vpop.permute.xlu0 %3901
      %3903 = vrot.lane.b32.xlu0 %v2508, 64
      %v3904 = vpop.permute.xlu0 %3903
      %3905 = vrot.lane.b32.xlu0 %v2509, 64
      %v3906 = vpop.permute.xlu0 %3905
      %3907 = vrot.lane.b32.xlu0 %v2510, 64
      %v3908 = vpop.permute.xlu0 %3907
      %3957 = vst.msk [vmem:[#allocation3 - $0x2] sm:$0xfc] %vm1896, %v3814
      %3958 = vst.msk [vmem:[#allocation3 + $0x6] sm:$0xff] %vm1898, %v3816
      %3959 = vst.msk [vmem:[#allocation3 + $0xe] sm:$0x3] %vm1900, %v3818
      %3960 = vst.msk [vmem:[#allocation3 + $0xe] sm:$0xfc] %vm1896, %v3820
      %3961 = vst.msk [vmem:[#allocation3 + $0x16] sm:$0xff] %vm1898, %v3822
      %3962 = vst.msk [vmem:[#allocation3 + $0x1e] sm:$0x3] %vm1900, %v3824
      %3963 = vst.msk [vmem:[#allocation3 + $0x1e] sm:$0xfc] %vm1896, %v3826
      %3964 = vst.msk [vmem:[#allocation3 + $0x26] sm:$0xff] %vm1898, %v3828
      %3965 = vst.msk [vmem:[#allocation3 + $0x2e] sm:$0x3] %vm1900, %v3830
      %3966 = vst.msk [vmem:[#allocation3 + $0x2e] sm:$0xfc] %vm1896, %v3832
      %3967 = vst.msk [vmem:[#allocation3 + $0x36] sm:$0xff] %vm1898, %v3834
      %3968 = vst.msk [vmem:[#allocation3 + $0x3e] sm:$0x3] %vm1900, %v3836
      %3969 = vst.msk [vmem:[#allocation3 + $0x3e] sm:$0xfc] %vm1896, %v3838
      %3970 = vst.msk [vmem:[#allocation3 + $0x46] sm:$0xff] %vm1898, %v3840
      %3971 = vst.msk [vmem:[#allocation3 + $0x4e] sm:$0x3] %vm1900, %v3842
      %3972 = vst.msk [vmem:[#allocation3 + $0x4e] sm:$0xfc] %vm1896, %v3844
      %3973 = vst.msk [vmem:[#allocation3 + $0x56] sm:$0xff] %vm1898, %v3846
      %3974 = vst.msk [vmem:[#allocation3 + $0x5e] sm:$0x3] %vm1900, %v3848
      %3975 = vst.msk [vmem:[#allocation3 + $0x5e] sm:$0xfc] %vm1896, %v3850
      %3976 = vst.msk [vmem:[#allocation3 + $0x66] sm:$0xff] %vm1898, %v3852
      %3977 = vst.msk [vmem:[#allocation3 + $0x6e] sm:$0x3] %vm1900, %v3854
      %3978 = vst.msk [vmem:[#allocation3 + $0x6e] sm:$0xfc] %vm1896, %v3856
      %3979 = vst.msk [vmem:[#allocation3 + $0x76] sm:$0xff] %vm1898, %v3858
      %3980 = vst.msk [vmem:[#allocation3 + $0x7e] sm:$0x3] %vm1900, %v3860
      %3981 = vst.msk [vmem:[#allocation3 + $0x7e] sm:$0xfc] %vm1896, %v3862
      %3982 = vst.msk [vmem:[#allocation3 + $0x86] sm:$0xff] %vm1898, %v3864
      %3983 = vst.msk [vmem:[#allocation3 + $0x8e] sm:$0x3] %vm1900, %v3866
      %3984 = vst.msk [vmem:[#allocation3 + $0x8e] sm:$0xfc] %vm1896, %v3868
      %3985 = vst.msk [vmem:[#allocation3 + $0x96] sm:$0xff] %vm1898, %v3870
      %3986 = vst.msk [vmem:[#allocation3 + $0x9e] sm:$0x3] %vm1900, %v3872
      %3987 = vst.msk [vmem:[#allocation3 + $0x9e] sm:$0xfc] %vm1896, %v3874
      %3988 = vst.msk [vmem:[#allocation3 + $0xa6] sm:$0xff] %vm1898, %v3876
      %3989 = vst.msk [vmem:[#allocation3 + $0xae] sm:$0x3] %vm1900, %v3878
      %3990 = vst.msk [vmem:[#allocation3 + $0xae] sm:$0xfc] %vm1896, %v3880
      %3991 = vst.msk [vmem:[#allocation3 + $0xb6] sm:$0xff] %vm1898, %v3882
      %3992 = vst.msk [vmem:[#allocation3 + $0xbe] sm:$0x3] %vm1900, %v3884
      %3993 = vst.msk [vmem:[#allocation3 + $0xbe] sm:$0xfc] %vm1896, %v3886
      %3994 = vst.msk [vmem:[#allocation3 + $0xc6] sm:$0xff] %vm1898, %v3888
      %3995 = vst.msk [vmem:[#allocation3 + $0xce] sm:$0x3] %vm1900, %v3890
      %3996 = vst.msk [vmem:[#allocation3 + $0xce] sm:$0xfc] %vm1896, %v3892
      %3997 = vst.msk [vmem:[#allocation3 + $0xd6] sm:$0xff] %vm1898, %v3894
      %3998 = vst.msk [vmem:[#allocation3 + $0xde] sm:$0x3] %vm1900, %v3896
      %3999 = vst.msk [vmem:[#allocation3 + $0xde] sm:$0xfc] %vm1896, %v3898
      %4000 = vst.msk [vmem:[#allocation3 + $0xe6] sm:$0xff] %vm1898, %v3900
      %4001 = vst.msk [vmem:[#allocation3 + $0xee] sm:$0x3] %vm1900, %v3902
      %4002 = vst.msk [vmem:[#allocation3 + $0xee] sm:$0xfc] %vm1896, %v3904
      %4003 = vst.msk [vmem:[#allocation3 + $0xf6] sm:$0xff] %vm1898, %v3906
      %4004 = vst.msk [vmem:[#allocation3 + $0xfe] sm:$0x3] %vm1900, %v3908
      %v4005 = vld [vmem:[#allocation3] sm:$0xff]
      %v4006 = vld [vmem:[#allocation3 + $0x8] sm:$0xff]
      %v4007 = vld [vmem:[#allocation3 + $0x10] sm:$0xff]
      %v4008 = vld [vmem:[#allocation3 + $0x18] sm:$0xff]
      %v4009 = vld [vmem:[#allocation3 + $0x20] sm:$0xff]
      %v4010 = vld [vmem:[#allocation3 + $0x28] sm:$0xff]
      %v4011 = vld [vmem:[#allocation3 + $0x30] sm:$0xff]
      %v4012 = vld [vmem:[#allocation3 + $0x38] sm:$0xff]
      %v4013 = vld [vmem:[#allocation3 + $0x40] sm:$0xff]
      %v4014 = vld [vmem:[#allocation3 + $0x48] sm:$0xff]
      %v4015 = vld [vmem:[#allocation3 + $0x50] sm:$0xff]
      %v4016 = vld [vmem:[#allocation3 + $0x58] sm:$0xff]
      %v4017 = vld [vmem:[#allocation3 + $0x60] sm:$0xff]
      %v4018 = vld [vmem:[#allocation3 + $0x68] sm:$0xff]
      %v4019 = vld [vmem:[#allocation3 + $0x70] sm:$0xff]
      %v4020 = vld [vmem:[#allocation3 + $0x78] sm:$0xff]
      %v4021 = vld [vmem:[#allocation3 + $0x80] sm:$0xff]
      %v4022 = vld [vmem:[#allocation3 + $0x88] sm:$0xff]
      %v4023 = vld [vmem:[#allocation3 + $0x90] sm:$0xff]
      %v4024 = vld [vmem:[#allocation3 + $0x98] sm:$0xff]
      %v4025 = vld [vmem:[#allocation3 + $0xa0] sm:$0xff]
      %v4026 = vld [vmem:[#allocation3 + $0xa8] sm:$0xff]
      %v4027 = vld [vmem:[#allocation3 + $0xb0] sm:$0xff]
      %v4028 = vld [vmem:[#allocation3 + $0xb8] sm:$0xff]
      %v4029 = vld [vmem:[#allocation3 + $0xc0] sm:$0xff]
      %v4030 = vld [vmem:[#allocation3 + $0xc8] sm:$0xff]
      %v4031 = vld [vmem:[#allocation3 + $0xd0] sm:$0xff]
      %v4032 = vld [vmem:[#allocation3 + $0xd8] sm:$0xff]
      %v4033 = vld [vmem:[#allocation3 + $0xe0] sm:$0xff]
      %v4034 = vld [vmem:[#allocation3 + $0xe8] sm:$0xff]
      %v4035 = vld [vmem:[#allocation3 + $0xf0] sm:$0xff]
      %v4036 = vld [vmem:[#allocation3 + $0xf8] sm:$0xff]
      %v4038 = vlaneseq
      %v4039 = vshrl.u32 %v4038, 7
      %v4040 = vsub.s32 0, %v4039
      %v4041 = vrot.slane %v2456, %v4040
      %v4044 = vsel %vm1985, %v4005, 0
      %v4047 = vsel %vm1985, %v4006, 0
      %v4050 = vsel %vm1985, %v4007, 0
      %v4053 = vsel %vm1985, %v4008, 0
      %v4056 = vsel %vm1985, %v4009, 0
      %v4059 = vsel %vm1985, %v4010, 0
      %v4062 = vsel %vm1985, %v4011, 0
      %v4065 = vsel %vm1985, %v4012, 0
      %v4068 = vsel %vm1985, %v4013, 0
      %v4071 = vsel %vm1985, %v4014, 0
      %v4074 = vsel %vm1985, %v4015, 0
      %v4077 = vsel %vm1985, %v4016, 0
      %v4080 = vsel %vm1985, %v4017, 0
      %v4083 = vsel %vm1985, %v4018, 0
      %v4086 = vsel %vm1985, %v4019, 0
      %v4089 = vsel %vm1985, %v4020, 0
      %v4092 = vsel %vm1985, %v4021, 0
      %v4095 = vsel %vm1985, %v4022, 0
      %v4098 = vsel %vm1985, %v4023, 0
      %v4101 = vsel %vm1985, %v4024, 0
      %v4104 = vsel %vm1985, %v4025, 0
      %v4107 = vsel %vm1985, %v4026, 0
      %v4110 = vsel %vm1985, %v4027, 0
      %v4113 = vsel %vm1985, %v4028, 0
      %v4116 = vsel %vm1985, %v4029, 0
      %v4119 = vsel %vm1985, %v4030, 0
      %v4122 = vsel %vm1985, %v4031, 0
      %v4125 = vsel %vm1985, %v4032, 0
      %v4128 = vsel %vm1985, %v4033, 0
      %v4131 = vsel %vm1985, %v4034, 0
      %v4134 = vsel %vm1985, %v4035, 0
      %v4137 = vsel %vm1985, %v4036, 0
      %4139 = vmatprep.subr.mxu0 0.0
      %4140 = vmatpush1.msra.mxu0 %v2447
      %4141 = vmatprep.subr.mxu0 0.0
      %4142 = vmatpush1.msra.mxu0 %v2448
      %4143 = vmatprep.subr.mxu0 0.0
      %4144 = vmatpush1.msra.mxu0 %v2449
      %4145 = vmatprep.subr.mxu0 0.0
      %4146 = vmatpush1.msra.mxu0 %v2450
      %4147 = vmatprep.subr.mxu0 0.0
      %4148 = vmatpush1.msra.mxu0 %v2451
      %4149 = vmatprep.subr.mxu0 0.0
      %4150 = vmatpush1.msra.mxu0 %v2452
      %4151 = vmatprep.subr.mxu0 0.0
      %4152 = vmatpush1.msra.mxu0 %v2453
      %4153 = vmatprep.subr.mxu0 0.0
      %4154 = vmatpush1.msra.mxu0 %v2454
      %4155 = vmatprep.subr.mxu0 0.0
      %4156 = vmatpush1.msra.mxu0 %v2455
      %4157 = vmatprep.subr.mxu0 0.0
      %4158 = vmatpush1.msra.mxu0 0.0
      %4159 = vmatprep.subr.mxu0 0.0
      %4160 = vmatpush1.msra.mxu0 0.0
      %4161 = vmatprep.subr.mxu0 0.0
      %4162 = vmatpush1.msra.mxu0 0.0
      %4163 = vmatprep.subr.mxu0 0.0
      %4164 = vmatpush1.msra.mxu0 0.0
      %4165 = vmatprep.subr.mxu0 0.0
      %4166 = vmatpush1.msra.mxu0 0.0
      %4167 = vmatprep.subr.mxu0 0.0
      %4168 = vmatpush1.msra.mxu0 0.0
      %4169 = vmatprep.subr.mxu0 0.0
      %4170 = vmatpush1.msra.mxu0 0.0
      %4171 = vmatprep.subr.mxu0 0.0
      %4172 = vmatpush1.msra.mxu0 0.0
      %4173 = vmatprep.subr.mxu0 0.0
      %4174 = vmatpush1.msra.mxu0 0.0
      %4175 = vmatprep.subr.mxu0 0.0
      %4176 = vmatpush1.msra.mxu0 0.0
      %4177 = vmatprep.subr.mxu0 0.0
      %4178 = vmatpush1.msra.mxu0 0.0
      %4179 = vmatprep.subr.mxu0 0.0
      %4180 = vmatpush1.msra.mxu0 0.0
      %4181 = vmatprep.subr.mxu0 0.0
      %4182 = vmatpush1.msra.mxu0 0.0
      %4183 = vmatprep.subr.mxu0 0.0
      %4184 = vmatpush1.msra.mxu0 0.0
      %4185 = vmatprep.subr.mxu0 0.0
      %4186 = vmatpush1.msra.mxu0 0.0
      %4187 = vmatprep.subr.mxu0 0.0
      %4188 = vmatpush1.msra.mxu0 0.0
      %4189 = vmatprep.subr.mxu0 0.0
      %4190 = vmatpush1.msra.mxu0 0.0
      %4191 = vmatprep.subr.mxu0 0.0
      %4192 = vmatpush1.msra.mxu0 0.0
      %4193 = vmatprep.subr.mxu0 0.0
      %4194 = vmatpush1.msra.mxu0 0.0
      %4195 = vmatprep.subr.mxu0 0.0
      %4196 = vmatpush1.msra.mxu0 0.0
      %4197 = vmatprep.subr.mxu0 0.0
      %4198 = vmatpush1.msra.mxu0 0.0
      %4199 = vmatprep.subr.mxu0 0.0
      %4200 = vmatpush1.msra.mxu0 0.0
      %4201 = vmatprep.subr.mxu0 0.0
      %4202 = vmatpush1.msra.mxu0 0.0
      %4203 = vmatprep.mubr.f32.mxu0 0.0
      %4204 = vmatmul.mubr.f32.gmra.mrb[0].mxu0 %v4044
      %v4205 = vpop.f32.mrb[0].mxu0
      %v4206 = vadd.f32 %v4041, %v4205
      %v4207 = vpop.f32.mrb[0].mxu0
      %4208 = vmatprep.mubr.f32.mxu0 0.0
      %4209 = vmatmul.mubr.f32.gmra.mrb[0].mxu0 %v4047
      %v4210 = vpop.f32.mrb[0].mxu0
      %v4211 = vadd.f32 %v4041, %v4210
      %v4212 = vpop.f32.mrb[0].mxu0
      %4213 = vmatprep.mubr.f32.mxu0 0.0
      %4214 = vmatmul.mubr.f32.gmra.mrb[0].mxu0 %v4050
      %v4215 = vpop.f32.mrb[0].mxu0
      %v4216 = vadd.f32 %v4041, %v4215
      %v4217 = vpop.f32.mrb[0].mxu0
      %4218 = vmatprep.mubr.f32.mxu0 0.0
      %4219 = vmatmul.mubr.f32.gmra.mrb[0].mxu0 %v4053
      %v4220 = vpop.f32.mrb[0].mxu0
      %v4221 = vadd.f32 %v4041, %v4220
      %v4222 = vpop.f32.mrb[0].mxu0
      %4223 = vmatprep.mubr.f32.mxu0 0.0
      %4224 = vmatmul.mubr.f32.gmra.mrb[0].mxu0 %v4056
      %v4225 = vpop.f32.mrb[0].mxu0
      %v4226 = vadd.f32 %v4041, %v4225
      %v4227 = vpop.f32.mrb[0].mxu0
      %4228 = vmatprep.mubr.f32.mxu0 0.0
      %4229 = vmatmul.mubr.f32.gmra.mrb[0].mxu0 %v4059
      %v4230 = vpop.f32.mrb[0].mxu0
      %v4231 = vadd.f32 %v4041, %v4230
      %v4232 = vpop.f32.mrb[0].mxu0
      %4233 = vmatprep.mubr.f32.mxu0 0.0
      %4234 = vmatmul.mubr.f32.gmra.mrb[0].mxu0 %v4062
      %v4235 = vpop.f32.mrb[0].mxu0
      %v4236 = vadd.f32 %v4041, %v4235
      %v4237 = vpop.f32.mrb[0].mxu0
      %4238 = vmatprep.mubr.f32.mxu0 0.0
      %4239 = vmatmul.mubr.f32.gmra.mrb[0].mxu0 %v4065
      %v4240 = vpop.f32.mrb[0].mxu0
      %v4241 = vadd.f32 %v4041, %v4240
      %v4242 = vpop.f32.mrb[0].mxu0
      %4243 = vmatprep.mubr.f32.mxu0 0.0
      %4244 = vmatmul.mubr.f32.gmra.mrb[0].mxu0 %v4068
      %v4245 = vpop.f32.mrb[0].mxu0
      %v4246 = vadd.f32 %v4041, %v4245
      %v4247 = vpop.f32.mrb[0].mxu0
      %4248 = vmatprep.mubr.f32.mxu0 0.0
      %4249 = vmatmul.mubr.f32.gmra.mrb[0].mxu0 %v4071
      %v4250 = vpop.f32.mrb[0].mxu0
      %v4251 = vadd.f32 %v4041, %v4250
      %v4252 = vpop.f32.mrb[0].mxu0
      %4253 = vmatprep.mubr.f32.mxu0 0.0
      %4254 = vmatmul.mubr.f32.gmra.mrb[0].mxu0 %v4074
      %v4255 = vpop.f32.mrb[0].mxu0
      %v4256 = vadd.f32 %v4041, %v4255
      %v4257 = vpop.f32.mrb[0].mxu0
      %4258 = vmatprep.mubr.f32.mxu0 0.0
      %4259 = vmatmul.mubr.f32.gmra.mrb[0].mxu0 %v4077
      %v4260 = vpop.f32.mrb[0].mxu0
      %v4261 = vadd.f32 %v4041, %v4260
      %v4262 = vpop.f32.mrb[0].mxu0
      %4263 = vmatprep.mubr.f32.mxu0 0.0
      %4264 = vmatmul.mubr.f32.gmra.mrb[0].mxu0 %v4080
      %v4265 = vpop.f32.mrb[0].mxu0
      %v4266 = vadd.f32 %v4041, %v4265
      %v4267 = vpop.f32.mrb[0].mxu0
      %4268 = vmatprep.mubr.f32.mxu0 0.0
      %4269 = vmatmul.mubr.f32.gmra.mrb[0].mxu0 %v4083
      %v4270 = vpop.f32.mrb[0].mxu0
      %v4271 = vadd.f32 %v4041, %v4270
      %v4272 = vpop.f32.mrb[0].mxu0
      %4273 = vmatprep.mubr.f32.mxu0 0.0
      %4274 = vmatmul.mubr.f32.gmra.mrb[0].mxu0 %v4086
      %v4275 = vpop.f32.mrb[0].mxu0
      %v4276 = vadd.f32 %v4041, %v4275
      %v4277 = vpop.f32.mrb[0].mxu0
      %4278 = vmatprep.mubr.f32.mxu0 0.0
      %4279 = vmatmul.mubr.f32.gmra.mrb[0].mxu0 %v4089
      %v4280 = vpop.f32.mrb[0].mxu0
      %v4281 = vadd.f32 %v4041, %v4280
      %v4282 = vpop.f32.mrb[0].mxu0
      %4283 = vmatprep.mubr.f32.mxu0 0.0
      %4284 = vmatmul.mubr.f32.gmra.mrb[0].mxu0 %v4092
      %v4285 = vpop.f32.mrb[0].mxu0
      %v4286 = vadd.f32 %v4041, %v4285
      %v4287 = vpop.f32.mrb[0].mxu0
      %4288 = vmatprep.mubr.f32.mxu0 0.0
      %4289 = vmatmul.mubr.f32.gmra.mrb[0].mxu0 %v4095
      %v4290 = vpop.f32.mrb[0].mxu0
      %v4291 = vadd.f32 %v4041, %v4290
      %v4292 = vpop.f32.mrb[0].mxu0
      %4293 = vmatprep.mubr.f32.mxu0 0.0
      %4294 = vmatmul.mubr.f32.gmra.mrb[0].mxu0 %v4098
      %v4295 = vpop.f32.mrb[0].mxu0
      %v4296 = vadd.f32 %v4041, %v4295
      %v4297 = vpop.f32.mrb[0].mxu0
      %4298 = vmatprep.mubr.f32.mxu0 0.0
      %4299 = vmatmul.mubr.f32.gmra.mrb[0].mxu0 %v4101
      %v4300 = vpop.f32.mrb[0].mxu0
      %v4301 = vadd.f32 %v4041, %v4300
      %v4302 = vpop.f32.mrb[0].mxu0
      %4303 = vmatprep.mubr.f32.mxu0 0.0
      %4304 = vmatmul.mubr.f32.gmra.mrb[0].mxu0 %v4104
      %v4305 = vpop.f32.mrb[0].mxu0
      %v4306 = vadd.f32 %v4041, %v4305
      %v4307 = vpop.f32.mrb[0].mxu0
      %4308 = vmatprep.mubr.f32.mxu0 0.0
      %4309 = vmatmul.mubr.f32.gmra.mrb[0].mxu0 %v4107
      %v4310 = vpop.f32.mrb[0].mxu0
      %v4311 = vadd.f32 %v4041, %v4310
      %v4312 = vpop.f32.mrb[0].mxu0
      %4313 = vmatprep.mubr.f32.mxu0 0.0
      %4314 = vmatmul.mubr.f32.gmra.mrb[0].mxu0 %v4110
      %v4315 = vpop.f32.mrb[0].mxu0
      %v4316 = vadd.f32 %v4041, %v4315
      %v4317 = vpop.f32.mrb[0].mxu0
      %4318 = vmatprep.mubr.f32.mxu0 0.0
      %4319 = vmatmul.mubr.f32.gmra.mrb[0].mxu0 %v4113
      %v4320 = vpop.f32.mrb[0].mxu0
      %v4321 = vadd.f32 %v4041, %v4320
      %v4322 = vpop.f32.mrb[0].mxu0
      %4323 = vmatprep.mubr.f32.mxu0 0.0
      %4324 = vmatmul.mubr.f32.gmra.mrb[0].mxu0 %v4116
      %v4325 = vpop.f32.mrb[0].mxu0
      %v4326 = vadd.f32 %v4041, %v4325
      %v4327 = vpop.f32.mrb[0].mxu0
      %4328 = vmatprep.mubr.f32.mxu0 0.0
      %4329 = vmatmul.mubr.f32.gmra.mrb[0].mxu0 %v4119
      %v4330 = vpop.f32.mrb[0].mxu0
      %v4331 = vadd.f32 %v4041, %v4330
      %v4332 = vpop.f32.mrb[0].mxu0
      %4333 = vmatprep.mubr.f32.mxu0 0.0
      %4334 = vmatmul.mubr.f32.gmra.mrb[0].mxu0 %v4122
      %v4335 = vpop.f32.mrb[0].mxu0
      %v4336 = vadd.f32 %v4041, %v4335
      %v4337 = vpop.f32.mrb[0].mxu0
      %4338 = vmatprep.mubr.f32.mxu0 0.0
      %4339 = vmatmul.mubr.f32.gmra.mrb[0].mxu0 %v4125
      %v4340 = vpop.f32.mrb[0].mxu0
      %v4341 = vadd.f32 %v4041, %v4340
      %v4342 = vpop.f32.mrb[0].mxu0
      %4343 = vmatprep.mubr.f32.mxu0 0.0
      %4344 = vmatmul.mubr.f32.gmra.mrb[0].mxu0 %v4128
      %v4345 = vpop.f32.mrb[0].mxu0
      %v4346 = vadd.f32 %v4041, %v4345
      %v4347 = vpop.f32.mrb[0].mxu0
      %4348 = vmatprep.mubr.f32.mxu0 0.0
      %4349 = vmatmul.mubr.f32.gmra.mrb[0].mxu0 %v4131
      %v4350 = vpop.f32.mrb[0].mxu0
      %v4351 = vadd.f32 %v4041, %v4350
      %v4352 = vpop.f32.mrb[0].mxu0
      %4353 = vmatprep.mubr.f32.mxu0 0.0
      %4354 = vmatmul.mubr.f32.gmra.mrb[0].mxu0 %v4134
      %v4355 = vpop.f32.mrb[0].mxu0
      %v4356 = vadd.f32 %v4041, %v4355
      %v4357 = vpop.f32.mrb[0].mxu0
      %4358 = vmatprep.mubr.f32.mxu0 0.0
      %4359 = vmatmul.mubr.f32.gmra.mrb[0].mxu0 %v4137
      %v4360 = vpop.f32.mrb[0].mxu0
      %v4361 = vadd.f32 %v4041, %v4360
      %v4362 = vpop.f32.mrb[0].mxu0
      %4363 = vdwg.mxu0
      %v4364 = vmax.f32 %v4206, 0.0
      %v4365 = vmax.f32 %v4211, 0.0
      %v4366 = vmax.f32 %v4216, 0.0
      %v4367 = vmax.f32 %v4221, 0.0
      %v4368 = vmax.f32 %v4226, 0.0
      %v4369 = vmax.f32 %v4231, 0.0
      %v4370 = vmax.f32 %v4236, 0.0
      %v4371 = vmax.f32 %v4241, 0.0
      %v4372 = vmax.f32 %v4246, 0.0
      %v4373 = vmax.f32 %v4251, 0.0
      %v4374 = vmax.f32 %v4256, 0.0
      %v4375 = vmax.f32 %v4261, 0.0
      %v4376 = vmax.f32 %v4266, 0.0
      %v4377 = vmax.f32 %v4271, 0.0
      %v4378 = vmax.f32 %v4276, 0.0
      %v4379 = vmax.f32 %v4281, 0.0
      %v4380 = vmax.f32 %v4286, 0.0
      %v4381 = vmax.f32 %v4291, 0.0
      %v4382 = vmax.f32 %v4296, 0.0
      %v4383 = vmax.f32 %v4301, 0.0
      %v4384 = vmax.f32 %v4306, 0.0
      %v4385 = vmax.f32 %v4311, 0.0
      %v4386 = vmax.f32 %v4316, 0.0
      %v4387 = vmax.f32 %v4321, 0.0
      %v4388 = vmax.f32 %v4326, 0.0
      %v4389 = vmax.f32 %v4331, 0.0
      %v4390 = vmax.f32 %v4336, 0.0
      %v4391 = vmax.f32 %v4341, 0.0
      %v4392 = vmax.f32 %v4346, 0.0
      %v4393 = vmax.f32 %v4351, 0.0
      %v4394 = vmax.f32 %v4356, 0.0
      %v4395 = vmax.f32 %v4361, 0.0
      %v4396 = vadd.f32 %v4364, %v225
      %v4397 = vadd.f32 %v4365, %v226
      %v4398 = vadd.f32 %v4366, %v227
      %v4399 = vadd.f32 %v4367, %v228
      %v4400 = vadd.f32 %v4368, %v229
      %v4401 = vadd.f32 %v4369, %v230
      %v4402 = vadd.f32 %v4370, %v231
      %v4403 = vadd.f32 %v4371, %v232
      %v4404 = vadd.f32 %v4372, %v233
      %v4405 = vadd.f32 %v4373, %v234
      %v4406 = vadd.f32 %v4374, %v235
      %v4407 = vadd.f32 %v4375, %v236
      %v4408 = vadd.f32 %v4376, %v237
      %v4409 = vadd.f32 %v4377, %v238
      %v4410 = vadd.f32 %v4378, %v239
      %v4411 = vadd.f32 %v4379, %v240
      %v4412 = vadd.f32 %v4380, %v241
      %v4413 = vadd.f32 %v4381, %v242
      %v4414 = vadd.f32 %v4382, %v243
      %v4415 = vadd.f32 %v4383, %v244
      %v4416 = vadd.f32 %v4384, %v245
      %v4417 = vadd.f32 %v4385, %v246
      %v4418 = vadd.f32 %v4386, %v247
      %v4419 = vadd.f32 %v4387, %v248
      %v4420 = vadd.f32 %v4388, %v249
      %v4421 = vadd.f32 %v4389, %v250
      %v4422 = vadd.f32 %v4390, %v251
      %v4423 = vadd.f32 %v4391, %v252
      %v4424 = vadd.f32 %v4392, %v253
      %v4425 = vadd.f32 %v4393, %v254
      %v4426 = vadd.f32 %v4394, %v255
      %v4427 = vadd.f32 %v4395, %v256
      %4428 = vst.msk [vmem:[%s224] sm:$0xff] %vm258, %v4396
      %4429 = vst.msk [vmem:[%s224 + $0x8] sm:$0xff] %vm258, %v4397
      %4430 = vst.msk [vmem:[%s224 + $0x10] sm:$0xff] %vm258, %v4398
      %4431 = vst.msk [vmem:[%s224 + $0x18] sm:$0xff] %vm258, %v4399
      %4432 = vst.msk [vmem:[%s224 + $0x20] sm:$0xff] %vm258, %v4400
      %4433 = vst.msk [vmem:[%s224 + $0x28] sm:$0xff] %vm258, %v4401
      %4434 = vst.msk [vmem:[%s224 + $0x30] sm:$0xff] %vm258, %v4402
      %4435 = vst.msk [vmem:[%s224 + $0x38] sm:$0xff] %vm258, %v4403
      %4436 = vst.msk [vmem:[%s224 + $0x40] sm:$0xff] %vm258, %v4404
      %4437 = vst.msk [vmem:[%s224 + $0x48] sm:$0xff] %vm258, %v4405
      %4438 = vst.msk [vmem:[%s224 + $0x50] sm:$0xff] %vm258, %v4406
      %4439 = vst.msk [vmem:[%s224 + $0x58] sm:$0xff] %vm258, %v4407
      %4440 = vst.msk [vmem:[%s224 + $0x60] sm:$0xff] %vm258, %v4408
      %4441 = vst.msk [vmem:[%s224 + $0x68] sm:$0xff] %vm258, %v4409
      %4442 = vst.msk [vmem:[%s224 + $0x70] sm:$0xff] %vm258, %v4410
      %4443 = vst.msk [vmem:[%s224 + $0x78] sm:$0xff] %vm258, %v4411
      %4444 = vst.msk [vmem:[%s224 + $0x80] sm:$0xff] %vm258, %v4412
      %4445 = vst.msk [vmem:[%s224 + $0x88] sm:$0xff] %vm258, %v4413
      %4446 = vst.msk [vmem:[%s224 + $0x90] sm:$0xff] %vm258, %v4414
      %4447 = vst.msk [vmem:[%s224 + $0x98] sm:$0xff] %vm258, %v4415
      %4448 = vst.msk [vmem:[%s224 + $0xa0] sm:$0xff] %vm258, %v4416
      %4449 = vst.msk [vmem:[%s224 + $0xa8] sm:$0xff] %vm258, %v4417
      %4450 = vst.msk [vmem:[%s224 + $0xb0] sm:$0xff] %vm258, %v4418
      %4451 = vst.msk [vmem:[%s224 + $0xb8] sm:$0xff] %vm258, %v4419
      %4452 = vst.msk [vmem:[%s224 + $0xc0] sm:$0xff] %vm258, %v4420
      %4453 = vst.msk [vmem:[%s224 + $0xc8] sm:$0xff] %vm258, %v4421
      %4454 = vst.msk [vmem:[%s224 + $0xd0] sm:$0xff] %vm258, %v4422
      %4455 = vst.msk [vmem:[%s224 + $0xd8] sm:$0xff] %vm258, %v4423
      %4456 = vst.msk [vmem:[%s224 + $0xe0] sm:$0xff] %vm258, %v4424
      %4457 = vst.msk [vmem:[%s224 + $0xe8] sm:$0xff] %vm258, %v4425
      %4458 = vst.msk [vmem:[%s224 + $0xf0] sm:$0xff] %vm258, %v4426
      %4459 = vst.msk [vmem:[%s224 + $0xf8] sm:$0xff] %vm258, %v4427
      %p4460 = scmp.lt.s32.totalorder %s16, 1
      %s4461 = scalar_select %p4460, %s16, 1
      %s4462 = smul.addr %s4461, 32
      %s4463 = smul.addr %s4462, 8
      %s4464 = scalar_lea.vmem %s5, %s4463
      // Predicated region
      $region41: #{tpu_custom_call.1} parent=39 // pred_check
        %p4465 = pneg %p144
      $region42: #{tpu_custom_call.1} parent=39 // pred_check_branch
        %4467 = sbr.rel (%p4465) target = $region44
      $region43: #{tpu_custom_call.1} parent=39 // pred_region
        _
      $region44: #{tpu_custom_call.1} parent=39 // pred_fallthru
        _
    $region40: #{tpu_custom_call.1} parent=5 // pred_fallthru
      _
    %p4468 = scmp.le.s32.totalorder 2, %s11
    // Predicated region
    $region45: #{tpu_custom_call.1} parent=5 // pred_check
      %p4469 = pneg %p4468
    $region46: #{tpu_custom_call.1} parent=5 // pred_check_branch
      %4471 = sbr.rel (%p4469) target = $region48
    $region47: #{tpu_custom_call.1} parent=5 // pred_region
      %s4472 = ssub.s32 %s11, 2
      // Predicated region
      $region49: #{tpu_custom_call.1} parent=47 // pred_check
        %p4473 = pneg %p150
      $region50: #{tpu_custom_call.1} parent=47 // pred_check_branch
        %4475 = sbr.rel (%p4473) target = $region52
      $region51: #{tpu_custom_call.1} parent=47 // pred_region
        %p4476 = scmp.lt.s32.totalorder %s17, 1
        %s4477 = scalar_select %p4476, %s17, 1
        %s4478 = smul.addr %s4477, 32
        %s4479 = smul.addr %s4478, 8
        %s4480 = scalar_lea.vmem %s5, %s4479
      $region52: #{tpu_custom_call.1} parent=47 // pred_fallthru
        _
    $region48: #{tpu_custom_call.1} parent=5 // pred_fallthru
      _
  $region6: #{tpu_custom_call.1} parent=0 // loop_footer
    %s15 = sadd.s32 1, %s11
  $region7: #{tpu_custom_call.1} parent=0 // loop_footer_branch
    %10 = sbr.rel target = $region3
  $region8: #{tpu_custom_call.1} parent=0 // loop_exit
    _

</llo_original>
